<compile_context>
chip_gen: v7x
topology: tpu7x:2x2x1
jax: 0.10.0
libtpu: 0.0.40
codegen_flags: <defaults>
</compile_context>

<pallas_src>
import functools

import numpy as np

import jax
import jax.numpy as jnp
from jax import lax
from jax.experimental import pallas as pl
from jax.experimental.pallas import tpu as pltpu


_CIN0_PAD = 8  # pad the 3-channel network input to one full sublane group
_TAPS = tuple((dy, dx) for dy in (-1, 0, 1) for dx in (-1, 0, 1))


def _round_up(x, m):
    return ((x + m - 1) // m) * m


# ----------------------------------------------------------------------------
# pltpu.roll support probe (run once, eagerly, outside jit)
# ----------------------------------------------------------------------------
_ROLL_CFG = None  # (use_roll: bool, roll_matches_jnp: bool)


def probe_roll_support():
    """Check on-device that pltpu.roll lowers for our shapes and learn its index
    convention; fall back to slice+concat rotation if anything is off."""
    global _ROLL_CFG
    if _ROLL_CFG is not None:
        return _ROLL_CFG
    try:
        def k(x_ref, o_ref):
            o_ref[...] = pltpu.roll(x_ref[...], shift=5, axis=1)

        x = jnp.tile(jnp.arange(256, dtype=jnp.float32)[None, :], (8, 1))
        y = pl.pallas_call(
            k, out_shape=jax.ShapeDtypeStruct((8, 256), jnp.float32))(x)
        v = float(y[0, 0])
        if v == 251.0:          # jnp.roll convention: out[i] = x[(i - shift) % n]
            _ROLL_CFG = (True, True)
        elif v == 5.0:          # opposite convention: out[i] = x[(i + shift) % n]
            _ROLL_CFG = (True, False)
        else:                   # unexpected -> don't trust it
            _ROLL_CFG = (False, True)
    except Exception:
        _ROLL_CFG = (False, True)
    return _ROLL_CFG


# ----------------------------------------------------------------------------
# host-side constant builders (masks / pool / upsample selection matrices)
# ----------------------------------------------------------------------------
def _host_masks(H, W):
    """(9, H*W) 0/1 validity masks, one row per 3x3 tap in (dy, dx) order."""
    n = H * W
    idx = np.arange(n)
    col, row = idx % W, idx // W
    rows = []
    for dy, dx in _TAPS:
        m = np.ones(n, bool)
        if dx == -1:
            m &= col >= 1
        elif dx == 1:
            m &= col <= W - 2
        if dy == -1:
            m &= row >= 1
        elif dy == 1:
            m &= row <= H - 2
        rows.append(m)
    return np.stack(rows).astype(np.float32)


def _host_pool(H, W):
    """(H*W, (H/2)*(W/2)) 0/1 matrix selecting the top-left anchor of each 2x2
    output window (applied after the 4-way shifted max)."""
    Ho, Wo = H // 2, W // 2
    P = np.zeros((H * W, Ho * Wo), np.float32)
    q = np.arange(Ho * Wo)
    yo, xo = q // Wo, q % Wo
    P[(2 * yo) * W + 2 * xo, q] = 1.0
    return P


def _host_up(h, w):
    """(h*w, 4*h*w) 0/1 nearest-neighbour 2x replication matrix."""
    U = np.zeros((h * w, 4 * h * w), np.float32)
    p = np.arange(4 * h * w)
    y, x = p // (2 * w), p % (2 * w)
    U[(y // 2) * w + (x // 2), p] = 1.0
    return U


# ----------------------------------------------------------------------------
# in-kernel building blocks
# ----------------------------------------------------------------------------
def _shift_cols(x, s, n, *, use_roll, like_jnp):
    """out[:, p] = x[:, (p + s) % n].  Wrapped columns are always zeroed by the
    caller (boundary masks / pool-anchor selection), so a pure rotation is safe."""
    if s == 0:
        return x
    if use_roll and n % 128 == 0:
        k = (-s) % n if like_jnp else s % n
        return pltpu.roll(x, shift=k, axis=1)
    k = (-s) % n
    return jnp.concatenate([x[:, n - k:], x[:, :n - k]], axis=1)


# ----------------------------------------------------------------------------
# the fused kernel: one image per grid step (grid=(B,), "parallel")
# ----------------------------------------------------------------------------
def _unetc_kernel(x_ref, w_ref, b_ref, m1_ref, m2_ref, m3_ref,
                  pool1_ref, pool2_ref, up3_ref, up2_ref,
                  out_ref, emb_ref, *, H, W, meta, mm, use_roll, roll_like_jnp):
    shift = functools.partial(_shift_cols, use_roll=use_roll,
                              like_jnp=roll_like_jnp)
    sub = 32 // jnp.dtype(mm).itemsize  # rows per 32-bit sublane pack (8 f32, 16 bf16)

    def get_w(i):
        r, c, K = meta[i]
        return w_ref[r:r + c, 0:K], b_ref[r:r + c, 0:1]

    def conv3x3_relu(x, i, masks, Wd, nd):
        w, b = get_w(i)
        cin = x.shape[0]
        # Build patches in mm (bf16) only when Cin is pack-aligned; otherwise
        # build f32 and cast the whole slab once (v5e-safe, alignment-safe).
        bd = mm if cin % sub == 0 else jnp.float32
        taps = []
        for t, (dy, dx) in enumerate(_TAPS):
            p = shift(x, dy * Wd + dx, nd).astype(bd)
            if (dy, dx) != (0, 0):
                p = p * masks[t:t + 1, :]        # 0/1 mask, exact in any dtype
            taps.append(p)
        pmat = jnp.concatenate(taps, axis=0).astype(mm)        # (9*Cin, nd)
        acc = jnp.dot(w, pmat, preferred_element_type=jnp.float32) + b
        return jnp.maximum(acc, 0.0)

    def dconv(t, i, masks, Wd, nd):
        t = conv3x3_relu(t, i, masks, Wd, nd)
        return conv3x3_relu(t, i + 1, masks, Wd, nd)

    def maxpool(x, Wd, nd, pmat):
        m = jnp.maximum(jnp.maximum(x, shift(x, 1, nd)),
                        jnp.maximum(shift(x, Wd, nd), shift(x, Wd + 1, nd)))
        return jnp.dot(m.astype(mm), pmat, preferred_element_type=jnp.float32)

    def up(x, umat):
        return jnp.dot(x.astype(mm), umat, preferred_element_type=jnp.float32)

    H2, W2, H4, W4 = H // 2, W // 2, H // 4, W // 4
    n1, n2, n3 = H * W, H2 * W2, H4 * W4

    x = x_ref[0]                                              # (8, n1) f32
    m1, m2, m3 = m1_ref[...], m2_ref[...], m3_ref[...]

    e1 = dconv(x, 0, m1, W, n1)                               # (C , n1)
    e2 = dconv(maxpool(e1, W, n1, pool1_ref[...]), 2, m2, W2, n2)   # (2C, n2)
    e3 = dconv(maxpool(e2, W2, n2, pool2_ref[...]), 4, m3, W4, n3)  # (4C, n3)
    d2 = dconv(jnp.concatenate([up(e3, up3_ref[...]), e2], axis=0), 6, m2, W2, n2)
    d1 = dconv(jnp.concatenate([up(d2, up2_ref[...]), e1], axis=0), 8, m1, W, n1)

    wh, bh = get_w(10)                                        # 1x1 head
    out_ref[0] = jnp.dot(wh, d1.astype(mm),
                         preferred_element_type=jnp.float32) + bh
    emb_ref[0] = e3


# ----------------------------------------------------------------------------
# wrapper: parameter packing + pallas_call
# ----------------------------------------------------------------------------
def _pack_params(params, mm_dtype):
    """Pack all 11 conv weights into one (rows, 512) slab (mm_dtype) and all
    biases into one (rows, 1) f32 slab.  Returns (wslab, bslab, meta) where
    meta[i] = (row_offset, cout, K) with K = kh*kw*cin."""
    layers = (params["enc1"] + params["enc2"] + params["enc3"]
              + params["dec2"] + params["dec1"] + [params["outc"]])
    mats, bcols = [], []
    for li, lp in enumerate(layers):
        w, b = lp["w"], lp["b"]
        kh, kw, cin, cout = w.shape
        if li == 0 and cin < _CIN0_PAD:
            w = jnp.pad(w, ((0, 0), (0, 0), (0, _CIN0_PAD - cin), (0, 0)))
            cin = _CIN0_PAD
        mats.append(jnp.transpose(w, (3, 0, 1, 2)).reshape(cout, kh * kw * cin))
        bcols.append(b.reshape(cout, 1))
    width = _round_up(max(m.shape[1] for m in mats), 128)
    wblocks, bblocks, meta, row = [], [], [], 0
    for wm, bc in zip(mats, bcols):
        cout, K = wm.shape
        rpad = _round_up(cout, 8)
        wblocks.append(jnp.pad(wm, ((0, rpad - cout), (0, width - K))))
        bblocks.append(jnp.pad(bc, ((0, rpad - cout), (0, 0))))
        meta.append((row, cout, K))
        row += rpad
    wslab = jnp.concatenate(wblocks, axis=0).astype(mm_dtype)
    bslab = jnp.concatenate(bblocks, axis=0).astype(jnp.float32)
    return wslab, bslab, tuple(meta)


def unetc_forward_pallas(params, x1, x2, x3, *, matmul_dtype=jnp.bfloat16):
    """UNetC forward: (out, encoder_output), both NCHW, from one fused Pallas
    kernel.  matmul_dtype selects the MXU / selection-matmul operand dtype
    (bf16 = v6e/v7x fast path; pass float32 for exact math / v5e)."""
    B, c1, H, W = x1.shape
    assert c1 == 1 and x2.shape == x1.shape and x3.shape == x1.shape
    assert H % 4 == 0 and W % 4 == 0 and H >= 4 and W >= 4
    mm = matmul_dtype
    n1, n2, n3 = H * W, (H // 2) * (W // 2), (H // 4) * (W // 4)

    # (B, 8, H*W) channel-major slab; tiny XLA concat/pad (a few KB).
    x = jnp.concatenate([x1, x2, x3], axis=1).astype(jnp.float32)
    x0 = jnp.pad(x, ((0, 0), (0, _CIN0_PAD - 3), (0, 0), (0, 0))).reshape(
        B, _CIN0_PAD, n1)

    wslab, bslab, meta = _pack_params(params, mm)
    n_classes = params["outc"]["w"].shape[-1]
    emb_c = params["enc3"][1]["w"].shape[-1]

    # Host-built constants (become jit-time constants); passed in matmul_dtype.
    m1 = jnp.asarray(_host_masks(H, W), mm)
    m2 = jnp.asarray(_host_masks(H // 2, W // 2), mm)
    m3 = jnp.asarray(_host_masks(H // 4, W // 4), mm)
    pool1 = jnp.asarray(_host_pool(H, W), mm)
    pool2 = jnp.asarray(_host_pool(H // 2, W // 2), mm)
    up3 = jnp.asarray(_host_up(H // 4, W // 4), mm)   # (n3, n2)
    up2 = jnp.asarray(_host_up(H // 2, W // 2), mm)   # (n2, n1)

    use_roll, like_jnp = _ROLL_CFG if _ROLL_CFG is not None else (False, True)
    kern = functools.partial(_unetc_kernel, H=H, W=W, meta=meta, mm=mm,
                             use_roll=use_roll, roll_like_jnp=like_jnp)

    def full(a):  # whole-array block, identical for every grid step
        return pl.BlockSpec(a.shape, lambda b: (0, 0))

    out_flat, emb_flat = pl.pallas_call(
        kern,
        out_shape=(jax.ShapeDtypeStruct((B, n_classes, n1), jnp.float32),
                   jax.ShapeDtypeStruct((B, emb_c, n3), jnp.float32)),
        grid=(B,),
        in_specs=[pl.BlockSpec((1, _CIN0_PAD, n1), lambda b: (b, 0, 0)),
                  full(wslab), full(bslab), full(m1), full(m2), full(m3),
                  full(pool1), full(pool2), full(up3), full(up2)],
        out_specs=(pl.BlockSpec((1, n_classes, n1), lambda b: (b, 0, 0)),
                   pl.BlockSpec((1, emb_c, n3), lambda b: (b, 0, 0))),
        compiler_params=pltpu.CompilerParams(
            dimension_semantics=("parallel",)),
    )(x0, wslab, bslab, m1, m2, m3, pool1, pool2, up3, up2)

    # Per-image channel-major flat output is already NCHW element order.
    out = out_flat.reshape(B, n_classes, H, W)
    emb = emb_flat.reshape(B, emb_c, H // 4, W // 4)
    return out, emb


# ----------------------------------------------------------------------------
# pure-JAX (XLA) reference for correctness
# ----------------------------------------------------------------------------
def _conv_ref(x, p, relu=True):
    y = lax.conv_general_dilated(
        x, p["w"], window_strides=(1, 1), padding="SAME",
        dimension_numbers=("NHWC", "HWIO", "NHWC"),
        precision=lax.Precision.HIGHEST) + p["b"]
    return jnp.maximum(y, 0.0) if relu else y


def unetc_forward_ref(params, x1, x2, x3):
    x = jnp.transpose(jnp.concatenate([x1, x2, x3], axis=1), (0, 2, 3, 1))  # NHWC

    def dconv(t, ps):
        return _conv_ref(_conv_ref(t, ps[0]), ps[1])

    def pool(t):
        b, h, w, c = t.shape
        return jnp.max(t.reshape(b, h // 2, 2, w // 2, 2, c), axis=(2, 4))

    def up(t):
        return jnp.repeat(jnp.repeat(t, 2, axis=1), 2, axis=2)

    e1 = dconv(x, params["enc1"])
    e2 = dconv(pool(e1), params["enc2"])
    e3 = dconv(pool(e2), params["enc3"])
    d2 = dconv(jnp.concatenate([up(e3), e2], axis=-1), params["dec2"])
    d1 = dconv(jnp.concatenate([up(d2), e1], axis=-1), params["dec1"])
    out = _conv_ref(d1, params["outc"], relu=False)
    nchw = lambda t: jnp.transpose(t, (0, 3, 1, 2))
    return nchw(out), nchw(e3)


# ----------------------------------------------------------------------------
# deterministic parameter init
# ----------------------------------------------------------------------------
def _init_conv(key, kh, kw, cin, cout):
    kw_key, kb_key = jax.random.split(key)
    fan_in = kh * kw * cin
    w = jax.random.normal(kw_key, (kh, kw, cin, cout), jnp.float32) * (2.0 / fan_in) ** 0.5
    b = jax.random.uniform(kb_key, (cout,), jnp.float32, -1.0, 1.0) * (1.0 / fan_in) ** 0.5
    return {"w": w, "b": b}


def init_params(key, in_ch=3, base=8, n_classes=1):
    ks = jax.random.split(key, 11)
    C = base
    return {
        "enc1": [_init_conv(ks[0], 3, 3, in_ch, C),     _init_conv(ks[1], 3, 3, C, C)],
        "enc2": [_init_conv(ks[2], 3, 3, C, 2 * C),     _init_conv(ks[3], 3, 3, 2 * C, 2 * C)],
        "enc3": [_init_conv(ks[4], 3, 3, 2 * C, 4 * C), _init_conv(ks[5], 3, 3, 4 * C, 4 * C)],
        "dec2": [_init_conv(ks[6], 3, 3, 6 * C, 2 * C), _init_conv(ks[7], 3, 3, 2 * C, 2 * C)],
        "dec1": [_init_conv(ks[8], 3, 3, 3 * C, C),     _init_conv(ks[9], 3, 3, C, C)],
        "outc": _init_conv(ks[10], 1, 1, C, n_classes),
    }


# ----------------------------------------------------------------------------
if __name__ == "__main__":
    probe_roll_support()   # decide pltpu.roll usage / convention once, on-device

    key = jax.random.PRNGKey(0)
    k1, k2, k3, kp = jax.random.split(key, 4)

    B, H, W = 2, 16, 16
    BASE, N_CLASSES = 8, 1
    x1 = jax.random.normal(k1, (B, 1, H, W), jnp.float32)
    x2 = jax.random.normal(k2, (B, 1, H, W), jnp.float32)
    x3 = jax.random.normal(k3, (B, 1, H, W), jnp.float32)
    params = init_params(kp, in_ch=3, base=BASE, n_classes=N_CLASSES)

    ref_out, ref_emb = unetc_forward_ref(params, x1, x2, x3)

    # Exact-math path (f32 MXU operands): strict check vs the XLA reference.
    fwd_f32 = jax.jit(functools.partial(unetc_forward_pallas,
                                        matmul_dtype=jnp.float32))
    out, emb = fwd_f32(params, x1, x2, x3)
    jax.block_until_ready((out, emb))
    assert out.shape == (B, N_CLASSES, H, W), out.shape
    assert emb.shape == (B, 4 * BASE, H // 4, W // 4), emb.shape
    assert jnp.allclose(out, ref_out, atol=2e-3, rtol=2e-3), \
        float(jnp.max(jnp.abs(out - ref_out)))
    assert jnp.allclose(emb, ref_emb, atol=2e-3, rtol=2e-3), \
        float(jnp.max(jnp.abs(emb - ref_emb)))

    # Fast path (bf16 MXU / selection operands, f32 accumulation): loose check.
    fwd_bf16 = jax.jit(unetc_forward_pallas)   # default matmul_dtype = bf16
    out16, emb16 = fwd_bf16(params, x1, x2, x3)
    jax.block_until_ready((out16, emb16))
    assert jnp.allclose(out16, ref_out, atol=1e-1, rtol=1e-1), \
        float(jnp.max(jnp.abs(out16 - ref_out)))
    assert jnp.allclose(emb16, ref_emb, atol=1e-1, rtol=1e-1), \
        float(jnp.max(jnp.abs(emb16 - ref_emb)))

    print("KERNEL_OK")
</pallas_src>

<mosaic_0001>
module attributes {stable_mosaic.version = 11 : i64} {
  func.func @k(%arg0: memref<8x256xf32, #tpu.memory_space<vmem>>, %arg1: memref<8x256xf32, #tpu.memory_space<vmem>>) attributes {dimension_semantics = [], scalar_prefetch = 0 : i64, scratch_operands = 0 : i64, tpu.core_type = #tpu.core_type<tc>} {
    %c0 = arith.constant 0 : index
    %c0_0 = arith.constant 0 : index
    %0 = vector.load %arg0[%c0, %c0_0] : memref<8x256xf32, #tpu.memory_space<vmem>>, vector<8x256xf32>
    %c5_i32 = arith.constant 5 : i32
    %1 = tpu.dynamic_rotate %0 by %c5_i32 dim 1 : vector<8x256xf32>, i32 -> vector<8x256xf32>
    %c0_1 = arith.constant 0 : index
    %c0_2 = arith.constant 0 : index
    %2 = vector.load %arg1[%c0_1, %c0_2] : memref<8x256xf32, #tpu.memory_space<vmem>>, vector<8x256xf32>
    tpu.vector_store %arg1[%c0_1, %c0_2], %1 {strides = array<i32>} : memref<8x256xf32, #tpu.memory_space<vmem>>, vector<8x256xf32>,
    return
  }
}

module attributes {stable_mosaic.version = 11 : i64} {
  func.func @_unetc_kernel(%arg0: i32, %arg1: memref<1x8x256xf32, #tpu.memory_space<vmem>>, %arg2: memref<168x512xf32, #tpu.memory_space<vmem>>, %arg3: memref<168x1xf32, #tpu.memory_space<vmem>>, %arg4: memref<9x256xf32, #tpu.memory_space<vmem>>, %arg5: memref<9x64xf32, #tpu.memory_space<vmem>>, %arg6: memref<9x16xf32, #tpu.memory_space<vmem>>, %arg7: memref<256x64xf32, #tpu.memory_space<vmem>>, %arg8: memref<64x16xf32, #tpu.memory_space<vmem>>, %arg9: memref<16x64xf32, #tpu.memory_space<vmem>>, %arg10: memref<64x256xf32, #tpu.memory_space<vmem>>, %arg11: memref<1x1x256xf32, #tpu.memory_space<vmem>>, %arg12: memref<1x32x16xf32, #tpu.memory_space<vmem>>) attributes {dimension_semantics = [#tpu.dimension_semantics<parallel>], iteration_bounds = array<i64: 2>, scalar_prefetch = 0 : i64, scratch_operands = 0 : i64, tpu.core_type = #tpu.core_type<tc>, window_params = [{transform_indices = @transform_0, window_bounds = array<i64: 1, 8, 256>}, {pipeline_mode = #tpu.pipeline_mode<synchronous>, transform_indices = @transform_1, window_bounds = array<i64: 168, 512>}, {pipeline_mode = #tpu.pipeline_mode<synchronous>, transform_indices = @transform_2, window_bounds = array<i64: 168, 1>}, {pipeline_mode = #tpu.pipeline_mode<synchronous>, transform_indices = @transform_3, window_bounds = array<i64: 9, 256>}, {pipeline_mode = #tpu.pipeline_mode<synchronous>, transform_indices = @transform_4, window_bounds = array<i64: 9, 64>}, {pipeline_mode = #tpu.pipeline_mode<synchronous>, transform_indices = @transform_5, window_bounds = array<i64: 9, 16>}, {pipeline_mode = #tpu.pipeline_mode<synchronous>, transform_indices = @transform_6, window_bounds = array<i64: 256, 64>}, {pipeline_mode = #tpu.pipeline_mode<synchronous>, transform_indices = @transform_7, window_bounds = array<i64: 64, 16>}, {pipeline_mode = #tpu.pipeline_mode<synchronous>, transform_indices = @transform_8, window_bounds = array<i64: 16, 64>}, {pipeline_mode = #tpu.pipeline_mode<synchronous>, transform_indices = @transform_9, window_bounds = array<i64: 64, 256>}, {transform_indices = @transform_10, window_bounds = array<i64: 1, 1, 256>}, {transform_indices = @transform_11, window_bounds = array<i64: 1, 32, 16>}]} {
    %c0 = arith.constant 0 : index
    %c0_0 = arith.constant 0 : index
    %c0_1 = arith.constant 0 : index
    %0 = vector.load %arg1[%c0, %c0_0, %c0_1] : memref<1x8x256xf32, #tpu.memory_space<vmem>>, vector<1x8x256xf32>
    %1 = vector.shape_cast %0 : vector<1x8x256xf32> to vector<8x256xf32>
    %c0_2 = arith.constant 0 : index
    %c0_3 = arith.constant 0 : index
    %2 = vector.load %arg4[%c0_2, %c0_3] : memref<9x256xf32, #tpu.memory_space<vmem>>, vector<9x256xf32>
    %c0_4 = arith.constant 0 : index
    %c0_5 = arith.constant 0 : index
    %3 = vector.load %arg5[%c0_4, %c0_5] : memref<9x64xf32, #tpu.memory_space<vmem>>, vector<9x64xf32>
    %c0_6 = arith.constant 0 : index
    %c0_7 = arith.constant 0 : index
    %4 = vector.load %arg6[%c0_6, %c0_7] : memref<9x16xf32, #tpu.memory_space<vmem>>, vector<9x16xf32>
    %c0_8 = arith.constant 0 : index
    %c0_9 = arith.constant 0 : index
    %5 = vector.load %arg2[%c0_8, %c0_9] : memref<168x512xf32, #tpu.memory_space<vmem>>, vector<8x72xf32>
    %c0_10 = arith.constant 0 : index
    %c0_11 = arith.constant 0 : index
    %6 = vector.load %arg3[%c0_10, %c0_11] : memref<168x1xf32, #tpu.memory_space<vmem>>, vector<8x1xf32>
    %7 = vector.extract_strided_slice %1 {offsets = [0, 239], sizes = [8, 17], strides = [1, 1]} : vector<8x256xf32> to vector<8x17xf32>
    %8 = vector.extract_strided_slice %1 {offsets = [0, 0], sizes = [8, 239], strides = [1, 1]} : vector<8x256xf32> to vector<8x239xf32>
    %9 = tpu.concatenate %7, %8 in 1 : vector<8x17xf32>, vector<8x239xf32> -> vector<8x256xf32>
    %10 = vector.extract_strided_slice %2 {offsets = [0, 0], sizes = [1, 256], strides = [1, 1]} : vector<9x256xf32> to vector<1x256xf32>
    %11 = vector.broadcast %10 : vector<1x256xf32> to vector<8x256xf32>
    %12 = arith.mulf %9, %11 : vector<8x256xf32>
    %13 = vector.extract_strided_slice %1 {offsets = [0, 240], sizes = [8, 16], strides = [1, 1]} : vector<8x256xf32> to vector<8x16xf32>
    %14 = vector.extract_strided_slice %1 {offsets = [0, 0], sizes = [8, 240], strides = [1, 1]} : vector<8x256xf32> to vector<8x240xf32>
    %15 = tpu.concatenate %13, %14 in 1 : vector<8x16xf32>, vector<8x240xf32> -> vector<8x256xf32>
    %16 = vector.extract_strided_slice %2 {offsets = [1, 0], sizes = [1, 256], strides = [1, 1]} : vector<9x256xf32> to vector<1x256xf32>
    %17 = vector.broadcast %16 : vector<1x256xf32> to vector<8x256xf32>
    %18 = arith.mulf %15, %17 : vector<8x256xf32>
    %19 = vector.extract_strided_slice %1 {offsets = [0, 241], sizes = [8, 15], strides = [1, 1]} : vector<8x256xf32> to vector<8x15xf32>
    %20 = vector.extract_strided_slice %1 {offsets = [0, 0], sizes = [8, 241], strides = [1, 1]} : vector<8x256xf32> to vector<8x241xf32>
    %21 = tpu.concatenate %19, %20 in 1 : vector<8x15xf32>, vector<8x241xf32> -> vector<8x256xf32>
    %22 = vector.extract_strided_slice %2 {offsets = [2, 0], sizes = [1, 256], strides = [1, 1]} : vector<9x256xf32> to vector<1x256xf32>
    %23 = vector.broadcast %22 : vector<1x256xf32> to vector<8x256xf32>
    %24 = arith.mulf %21, %23 : vector<8x256xf32>
    %25 = vector.extract_strided_slice %1 {offsets = [0, 255], sizes = [8, 1], strides = [1, 1]} : vector<8x256xf32> to vector<8x1xf32>
    %26 = vector.extract_strided_slice %1 {offsets = [0, 0], sizes = [8, 255], strides = [1, 1]} : vector<8x256xf32> to vector<8x255xf32>
    %27 = tpu.concatenate %25, %26 in 1 : vector<8x1xf32>, vector<8x255xf32> -> vector<8x256xf32>
    %28 = vector.extract_strided_slice %2 {offsets = [3, 0], sizes = [1, 256], strides = [1, 1]} : vector<9x256xf32> to vector<1x256xf32>
    %29 = vector.broadcast %28 : vector<1x256xf32> to vector<8x256xf32>
    %30 = arith.mulf %27, %29 : vector<8x256xf32>
    %31 = vector.extract_strided_slice %1 {offsets = [0, 1], sizes = [8, 255], strides = [1, 1]} : vector<8x256xf32> to vector<8x255xf32>
    %32 = vector.extract_strided_slice %1 {offsets = [0, 0], sizes = [8, 1], strides = [1, 1]} : vector<8x256xf32> to vector<8x1xf32>
    %33 = tpu.concatenate %31, %32 in 1 : vector<8x255xf32>, vector<8x1xf32> -> vector<8x256xf32>
    %34 = vector.extract_strided_slice %2 {offsets = [5, 0], sizes = [1, 256], strides = [1, 1]} : vector<9x256xf32> to vector<1x256xf32>
    %35 = vector.broadcast %34 : vector<1x256xf32> to vector<8x256xf32>
    %36 = arith.mulf %33, %35 : vector<8x256xf32>
    %37 = vector.extract_strided_slice %1 {offsets = [0, 15], sizes = [8, 241], strides = [1, 1]} : vector<8x256xf32> to vector<8x241xf32>
    %38 = vector.extract_strided_slice %1 {offsets = [0, 0], sizes = [8, 15], strides = [1, 1]} : vector<8x256xf32> to vector<8x15xf32>
    %39 = tpu.concatenate %37, %38 in 1 : vector<8x241xf32>, vector<8x15xf32> -> vector<8x256xf32>
    %40 = vector.extract_strided_slice %2 {offsets = [6, 0], sizes = [1, 256], strides = [1, 1]} : vector<9x256xf32> to vector<1x256xf32>
    %41 = vector.broadcast %40 : vector<1x256xf32> to vector<8x256xf32>
    %42 = arith.mulf %39, %41 : vector<8x256xf32>
    %43 = vector.extract_strided_slice %1 {offsets = [0, 16], sizes = [8, 240], strides = [1, 1]} : vector<8x256xf32> to vector<8x240xf32>
    %44 = vector.extract_strided_slice %1 {offsets = [0, 0], sizes = [8, 16], strides = [1, 1]} : vector<8x256xf32> to vector<8x16xf32>
    %45 = tpu.concatenate %43, %44 in 1 : vector<8x240xf32>, vector<8x16xf32> -> vector<8x256xf32>
    %46 = vector.extract_strided_slice %2 {offsets = [7, 0], sizes = [1, 256], strides = [1, 1]} : vector<9x256xf32> to vector<1x256xf32>
    %47 = vector.broadcast %46 : vector<1x256xf32> to vector<8x256xf32>
    %48 = arith.mulf %45, %47 : vector<8x256xf32>
    %49 = vector.extract_strided_slice %1 {offsets = [0, 17], sizes = [8, 239], strides = [1, 1]} : vector<8x256xf32> to vector<8x239xf32>
    %50 = vector.extract_strided_slice %1 {offsets = [0, 0], sizes = [8, 17], strides = [1, 1]} : vector<8x256xf32> to vector<8x17xf32>
    %51 = tpu.concatenate %49, %50 in 1 : vector<8x239xf32>, vector<8x17xf32> -> vector<8x256xf32>
    %52 = vector.extract_strided_slice %2 {offsets = [8, 0], sizes = [1, 256], strides = [1, 1]} : vector<9x256xf32> to vector<1x256xf32>
    %53 = vector.broadcast %52 : vector<1x256xf32> to vector<8x256xf32>
    %54 = arith.mulf %51, %53 : vector<8x256xf32>
    %55 = tpu.concatenate %12, %18, %24, %30, %1, %36, %42, %48, %54 in 0 : vector<8x256xf32>, vector<8x256xf32>, vector<8x256xf32>, vector<8x256xf32>, vector<8x256xf32>, vector<8x256xf32>, vector<8x256xf32>, vector<8x256xf32>, vector<8x256xf32> -> vector<72x256xf32>
    %cst = arith.constant dense<0.000000e+00> : vector<8x256xf32>
    %56 = tpu.matmul %5, %55, %cst {dimension_numbers = #tpu.dot_dimension_numbers<[1], [0], [0], [1], [0, 0, 1, 1], [], []>} : vector<8x72xf32>, vector<72x256xf32>, vector<8x256xf32> -> vector<8x256xf32>
    %57 = vector.broadcast %6 : vector<8x1xf32> to vector<8x256xf32>
    %58 = arith.addf %56, %57 : vector<8x256xf32>
    %cst_12 = arith.constant 0.000000e+00 : f32
    %59 = vector.broadcast %cst_12 : f32 to vector<8x256xf32>
    %60 = arith.maximumf %58, %59 : vector<8x256xf32>
    %c8 = arith.constant 8 : index
    %c0_13 = arith.constant 0 : index
    %61 = vector.load %arg2[%c8, %c0_13] : memref<168x512xf32, #tpu.memory_space<vmem>>, vector<8x72xf32>
    %c8_14 = arith.constant 8 : index
    %c0_15 = arith.constant 0 : index
    %62 = vector.load %arg3[%c8_14, %c0_15] : memref<168x1xf32, #tpu.memory_space<vmem>>, vector<8x1xf32>
    %63 = vector.extract_strided_slice %60 {offsets = [0, 239], sizes = [8, 17], strides = [1, 1]} : vector<8x256xf32> to vector<8x17xf32>
    %64 = vector.extract_strided_slice %60 {offsets = [0, 0], sizes = [8, 239], strides = [1, 1]} : vector<8x256xf32> to vector<8x239xf32>
    %65 = tpu.concatenate %63, %64 in 1 : vector<8x17xf32>, vector<8x239xf32> -> vector<8x256xf32>
    %66 = vector.extract_strided_slice %2 {offsets = [0, 0], sizes = [1, 256], strides = [1, 1]} : vector<9x256xf32> to vector<1x256xf32>
    %67 = vector.broadcast %66 : vector<1x256xf32> to vector<8x256xf32>
    %68 = arith.mulf %65, %67 : vector<8x256xf32>
    %69 = vector.extract_strided_slice %60 {offsets = [0, 240], sizes = [8, 16], strides = [1, 1]} : vector<8x256xf32> to vector<8x16xf32>
    %70 = vector.extract_strided_slice %60 {offsets = [0, 0], sizes = [8, 240], strides = [1, 1]} : vector<8x256xf32> to vector<8x240xf32>
    %71 = tpu.concatenate %69, %70 in 1 : vector<8x16xf32>, vector<8x240xf32> -> vector<8x256xf32>
    %72 = vector.extract_strided_slice %2 {offsets = [1, 0], sizes = [1, 256], strides = [1, 1]} : vector<9x256xf32> to vector<1x256xf32>
    %73 = vector.broadcast %72 : vector<1x256xf32> to vector<8x256xf32>
    %74 = arith.mulf %71, %73 : vector<8x256xf32>
    %75 = vector.extract_strided_slice %60 {offsets = [0, 241], sizes = [8, 15], strides = [1, 1]} : vector<8x256xf32> to vector<8x15xf32>
    %76 = vector.extract_strided_slice %60 {offsets = [0, 0], sizes = [8, 241], strides = [1, 1]} : vector<8x256xf32> to vector<8x241xf32>
    %77 = tpu.concatenate %75, %76 in 1 : vector<8x15xf32>, vector<8x241xf32> -> vector<8x256xf32>
    %78 = vector.extract_strided_slice %2 {offsets = [2, 0], sizes = [1, 256], strides = [1, 1]} : vector<9x256xf32> to vector<1x256xf32>
    %79 = vector.broadcast %78 : vector<1x256xf32> to vector<8x256xf32>
    %80 = arith.mulf %77, %79 : vector<8x256xf32>
    %81 = vector.extract_strided_slice %60 {offsets = [0, 255], sizes = [8, 1], strides = [1, 1]} : vector<8x256xf32> to vector<8x1xf32>
    %82 = vector.extract_strided_slice %60 {offsets = [0, 0], sizes = [8, 255], strides = [1, 1]} : vector<8x256xf32> to vector<8x255xf32>
    %83 = tpu.concatenate %81, %82 in 1 : vector<8x1xf32>, vector<8x255xf32> -> vector<8x256xf32>
    %84 = vector.extract_strided_slice %2 {offsets = [3, 0], sizes = [1, 256], strides = [1, 1]} : vector<9x256xf32> to vector<1x256xf32>
    %85 = vector.broadcast %84 : vector<1x256xf32> to vector<8x256xf32>
    %86 = arith.mulf %83, %85 : vector<8x256xf32>
    %87 = vector.extract_strided_slice %60 {offsets = [0, 1], sizes = [8, 255], strides = [1, 1]} : vector<8x256xf32> to vector<8x255xf32>
    %88 = vector.extract_strided_slice %60 {offsets = [0, 0], sizes = [8, 1], strides = [1, 1]} : vector<8x256xf32> to vector<8x1xf32>
    %89 = tpu.concatenate %87, %88 in 1 : vector<8x255xf32>, vector<8x1xf32> -> vector<8x256xf32>
    %90 = vector.extract_strided_slice %2 {offsets = [5, 0], sizes = [1, 256], strides = [1, 1]} : vector<9x256xf32> to vector<1x256xf32>
    %91 = vector.broadcast %90 : vector<1x256xf32> to vector<8x256xf32>
    %92 = arith.mulf %89, %91 : vector<8x256xf32>
    %93 = vector.extract_strided_slice %60 {offsets = [0, 15], sizes = [8, 241], strides = [1, 1]} : vector<8x256xf32> to vector<8x241xf32>
    %94 = vector.extract_strided_slice %60 {offsets = [0, 0], sizes = [8, 15], strides = [1, 1]} : vector<8x256xf32> to vector<8x15xf32>
    %95 = tpu.concatenate %93, %94 in 1 : vector<8x241xf32>, vector<8x15xf32> -> vector<8x256xf32>
    %96 = vector.extract_strided_slice %2 {offsets = [6, 0], sizes = [1, 256], strides = [1, 1]} : vector<9x256xf32> to vector<1x256xf32>
    %97 = vector.broadcast %96 : vector<1x256xf32> to vector<8x256xf32>
    %98 = arith.mulf %95, %97 : vector<8x256xf32>
    %99 = vector.extract_strided_slice %60 {offsets = [0, 16], sizes = [8, 240], strides = [1, 1]} : vector<8x256xf32> to vector<8x240xf32>
    %100 = vector.extract_strided_slice %60 {offsets = [0, 0], sizes = [8, 16], strides = [1, 1]} : vector<8x256xf32> to vector<8x16xf32>
    %101 = tpu.concatenate %99, %100 in 1 : vector<8x240xf32>, vector<8x16xf32> -> vector<8x256xf32>
    %102 = vector.extract_strided_slice %2 {offsets = [7, 0], sizes = [1, 256], strides = [1, 1]} : vector<9x256xf32> to vector<1x256xf32>
    %103 = vector.broadcast %102 : vector<1x256xf32> to vector<8x256xf32>
    %104 = arith.mulf %101, %103 : vector<8x256xf32>
    %105 = vector.extract_strided_slice %60 {offsets = [0, 17], sizes = [8, 239], strides = [1, 1]} : vector<8x256xf32> to vector<8x239xf32>
    %106 = vector.extract_strided_slice %60 {offsets = [0, 0], sizes = [8, 17], strides = [1, 1]} : vector<8x256xf32> to vector<8x17xf32>
    %107 = tpu.concatenate %105, %106 in 1 : vector<8x239xf32>, vector<8x17xf32> -> vector<8x256xf32>
    %108 = vector.extract_strided_slice %2 {offsets = [8, 0], sizes = [1, 256], strides = [1, 1]} : vector<9x256xf32> to vector<1x256xf32>
    %109 = vector.broadcast %108 : vector<1x256xf32> to vector<8x256xf32>
    %110 = arith.mulf %107, %109 : vector<8x256xf32>
    %111 = tpu.concatenate %68, %74, %80, %86, %60, %92, %98, %104, %110 in 0 : vector<8x256xf32>, vector<8x256xf32>, vector<8x256xf32>, vector<8x256xf32>, vector<8x256xf32>, vector<8x256xf32>, vector<8x256xf32>, vector<8x256xf32>, vector<8x256xf32> -> vector<72x256xf32>
    %cst_16 = arith.constant dense<0.000000e+00> : vector<8x256xf32>
    %112 = tpu.matmul %61, %111, %cst_16 {dimension_numbers = #tpu.dot_dimension_numbers<[1], [0], [0], [1], [0, 0, 1, 1], [], []>} : vector<8x72xf32>, vector<72x256xf32>, vector<8x256xf32> -> vector<8x256xf32>
    %113 = vector.broadcast %62 : vector<8x1xf32> to vector<8x256xf32>
    %114 = arith.addf %112, %113 : vector<8x256xf32>
    %cst_17 = arith.constant 0.000000e+00 : f32
    %115 = vector.broadcast %cst_17 : f32 to vector<8x256xf32>
    %116 = arith.maximumf %114, %115 : vector<8x256xf32>
    %c0_18 = arith.constant 0 : index
    %c0_19 = arith.constant 0 : index
    %117 = vector.load %arg7[%c0_18, %c0_19] : memref<256x64xf32, #tpu.memory_space<vmem>>, vector<256x64xf32>
    %118 = vector.extract_strided_slice %116 {offsets = [0, 1], sizes = [8, 255], strides = [1, 1]} : vector<8x256xf32> to vector<8x255xf32>
    %119 = vector.extract_strided_slice %116 {offsets = [0, 0], sizes = [8, 1], strides = [1, 1]} : vector<8x256xf32> to vector<8x1xf32>
    %120 = tpu.concatenate %118, %119 in 1 : vector<8x255xf32>, vector<8x1xf32> -> vector<8x256xf32>
    %121 = arith.maximumf %116, %120 : vector<8x256xf32>
    %122 = vector.extract_strided_slice %116 {offsets = [0, 16], sizes = [8, 240], strides = [1, 1]} : vector<8x256xf32> to vector<8x240xf32>
    %123 = vector.extract_strided_slice %116 {offsets = [0, 0], sizes = [8, 16], strides = [1, 1]} : vector<8x256xf32> to vector<8x16xf32>
    %124 = tpu.concatenate %122, %123 in 1 : vector<8x240xf32>, vector<8x16xf32> -> vector<8x256xf32>
    %125 = vector.extract_strided_slice %116 {offsets = [0, 17], sizes = [8, 239], strides = [1, 1]} : vector<8x256xf32> to vector<8x239xf32>
    %126 = vector.extract_strided_slice %116 {offsets = [0, 0], sizes = [8, 17], strides = [1, 1]} : vector<8x256xf32> to vector<8x17xf32>
    %127 = tpu.concatenate %125, %126 in 1 : vector<8x239xf32>, vector<8x17xf32> -> vector<8x256xf32>
    %128 = arith.maximumf %124, %127 : vector<8x256xf32>
    %129 = arith.maximumf %121, %128 : vector<8x256xf32>
    %cst_20 = arith.constant dense<0.000000e+00> : vector<8x64xf32>
    %130 = tpu.matmul %129, %117, %cst_20 {dimension_numbers = #tpu.dot_dimension_numbers<[1], [0], [0], [1], [0, 0, 1, 1], [], []>} : vector<8x256xf32>, vector<256x64xf32>, vector<8x64xf32> -> vector<8x64xf32>
    %c16 = arith.constant 16 : index
    %c0_21 = arith.constant 0 : index
    %131 = vector.load %arg2[%c16, %c0_21] : memref<168x512xf32, #tpu.memory_space<vmem>>, vector<16x72xf32>
    %c16_22 = arith.constant 16 : index
    %c0_23 = arith.constant 0 : index
    %132 = vector.load %arg3[%c16_22, %c0_23] : memref<168x1xf32, #tpu.memory_space<vmem>>, vector<16x1xf32>
    %133 = vector.extract_strided_slice %130 {offsets = [0, 55], sizes = [8, 9], strides = [1, 1]} : vector<8x64xf32> to vector<8x9xf32>
    %134 = vector.extract_strided_slice %130 {offsets = [0, 0], sizes = [8, 55], strides = [1, 1]} : vector<8x64xf32> to vector<8x55xf32>
    %135 = tpu.concatenate %133, %134 in 1 : vector<8x9xf32>, vector<8x55xf32> -> vector<8x64xf32>
    %136 = vector.extract_strided_slice %3 {offsets = [0, 0], sizes = [1, 64], strides = [1, 1]} : vector<9x64xf32> to vector<1x64xf32>
    %137 = vector.broadcast %136 : vector<1x64xf32> to vector<8x64xf32>
    %138 = arith.mulf %135, %137 : vector<8x64xf32>
    %139 = vector.extract_strided_slice %130 {offsets = [0, 56], sizes = [8, 8], strides = [1, 1]} : vector<8x64xf32> to vector<8x8xf32>
    %140 = vector.extract_strided_slice %130 {offsets = [0, 0], sizes = [8, 56], strides = [1, 1]} : vector<8x64xf32> to vector<8x56xf32>
    %141 = tpu.concatenate %139, %140 in 1 : vector<8x8xf32>, vector<8x56xf32> -> vector<8x64xf32>
    %142 = vector.extract_strided_slice %3 {offsets = [1, 0], sizes = [1, 64], strides = [1, 1]} : vector<9x64xf32> to vector<1x64xf32>
    %143 = vector.broadcast %142 : vector<1x64xf32> to vector<8x64xf32>
    %144 = arith.mulf %141, %143 : vector<8x64xf32>
    %145 = vector.extract_strided_slice %130 {offsets = [0, 57], sizes = [8, 7], strides = [1, 1]} : vector<8x64xf32> to vector<8x7xf32>
    %146 = vector.extract_strided_slice %130 {offsets = [0, 0], sizes = [8, 57], strides = [1, 1]} : vector<8x64xf32> to vector<8x57xf32>
    %147 = tpu.concatenate %145, %146 in 1 : vector<8x7xf32>, vector<8x57xf32> -> vector<8x64xf32>
    %148 = vector.extract_strided_slice %3 {offsets = [2, 0], sizes = [1, 64], strides = [1, 1]} : vector<9x64xf32> to vector<1x64xf32>
    %149 = vector.broadcast %148 : vector<1x64xf32> to vector<8x64xf32>
    %150 = arith.mulf %147, %149 : vector<8x64xf32>
    %151 = vector.extract_strided_slice %130 {offsets = [0, 63], sizes = [8, 1], strides = [1, 1]} : vector<8x64xf32> to vector<8x1xf32>
    %152 = vector.extract_strided_slice %130 {offsets = [0, 0], sizes = [8, 63], strides = [1, 1]} : vector<8x64xf32> to vector<8x63xf32>
    %153 = tpu.concatenate %151, %152 in 1 : vector<8x1xf32>, vector<8x63xf32> -> vector<8x64xf32>
    %154 = vector.extract_strided_slice %3 {offsets = [3, 0], sizes = [1, 64], strides = [1, 1]} : vector<9x64xf32> to vector<1x64xf32>
    %155 = vector.broadcast %154 : vector<1x64xf32> to vector<8x64xf32>
    %156 = arith.mulf %153, %155 : vector<8x64xf32>
    %157 = vector.extract_strided_slice %130 {offsets = [0, 1], sizes = [8, 63], strides = [1, 1]} : vector<8x64xf32> to vector<8x63xf32>
    %158 = vector.extract_strided_slice %130 {offsets = [0, 0], sizes = [8, 1], strides = [1, 1]} : vector<8x64xf32> to vector<8x1xf32>
    %159 = tpu.concatenate %157, %158 in 1 : vector<8x63xf32>, vector<8x1xf32> -> vector<8x64xf32>
    %160 = vector.extract_strided_slice %3 {offsets = [5, 0], sizes = [1, 64], strides = [1, 1]} : vector<9x64xf32> to vector<1x64xf32>
    %161 = vector.broadcast %160 : vector<1x64xf32> to vector<8x64xf32>
    %162 = arith.mulf %159, %161 : vector<8x64xf32>
    %163 = vector.extract_strided_slice %130 {offsets = [0, 7], sizes = [8, 57], strides = [1, 1]} : vector<8x64xf32> to vector<8x57xf32>
    %164 = vector.extract_strided_slice %130 {offsets = [0, 0], sizes = [8, 7], strides = [1, 1]} : vector<8x64xf32> to vector<8x7xf32>
    %165 = tpu.concatenate %163, %164 in 1 : vector<8x57xf32>, vector<8x7xf32> -> vector<8x64xf32>
    %166 = vector.extract_strided_slice %3 {offsets = [6, 0], sizes = [1, 64], strides = [1, 1]} : vector<9x64xf32> to vector<1x64xf32>
    %167 = vector.broadcast %166 : vector<1x64xf32> to vector<8x64xf32>
    %168 = arith.mulf %165, %167 : vector<8x64xf32>
    %169 = vector.extract_strided_slice %130 {offsets = [0, 8], sizes = [8, 56], strides = [1, 1]} : vector<8x64xf32> to vector<8x56xf32>
    %170 = vector.extract_strided_slice %130 {offsets = [0, 0], sizes = [8, 8], strides = [1, 1]} : vector<8x64xf32> to vector<8x8xf32>
    %171 = tpu.concatenate %169, %170 in 1 : vector<8x56xf32>, vector<8x8xf32> -> vector<8x64xf32>
    %172 = vector.extract_strided_slice %3 {offsets = [7, 0], sizes = [1, 64], strides = [1, 1]} : vector<9x64xf32> to vector<1x64xf32>
    %173 = vector.broadcast %172 : vector<1x64xf32> to vector<8x64xf32>
    %174 = arith.mulf %171, %173 : vector<8x64xf32>
    %175 = vector.extract_strided_slice %130 {offsets = [0, 9], sizes = [8, 55], strides = [1, 1]} : vector<8x64xf32> to vector<8x55xf32>
    %176 = vector.extract_strided_slice %130 {offsets = [0, 0], sizes = [8, 9], strides = [1, 1]} : vector<8x64xf32> to vector<8x9xf32>
    %177 = tpu.concatenate %175, %176 in 1 : vector<8x55xf32>, vector<8x9xf32> -> vector<8x64xf32>
    %178 = vector.extract_strided_slice %3 {offsets = [8, 0], sizes = [1, 64], strides = [1, 1]} : vector<9x64xf32> to vector<1x64xf32>
    %179 = vector.broadcast %178 : vector<1x64xf32> to vector<8x64xf32>
    %180 = arith.mulf %177, %179 : vector<8x64xf32>
    %181 = tpu.concatenate %138, %144, %150, %156, %130, %162, %168, %174, %180 in 0 : vector<8x64xf32>, vector<8x64xf32>, vector<8x64xf32>, vector<8x64xf32>, vector<8x64xf32>, vector<8x64xf32>, vector<8x64xf32>, vector<8x64xf32>, vector<8x64xf32> -> vector<72x64xf32>
    %cst_24 = arith.constant dense<0.000000e+00> : vector<16x64xf32>
    %182 = tpu.matmul %131, %181, %cst_24 {dimension_numbers = #tpu.dot_dimension_numbers<[1], [0], [0], [1], [0, 0, 1, 1], [], []>} : vector<16x72xf32>, vector<72x64xf32>, vector<16x64xf32> -> vector<16x64xf32>
    %183 = vector.broadcast %132 : vector<16x1xf32> to vector<16x64xf32>
    %184 = arith.addf %182, %183 : vector<16x64xf32>
    %cst_25 = arith.constant 0.000000e+00 : f32
    %185 = vector.broadcast %cst_25 : f32 to vector<16x64xf32>
    %186 = arith.maximumf %184, %185 : vector<16x64xf32>
    %c32 = arith.constant 32 : index
    %c0_26 = arith.constant 0 : index
    %187 = vector.load %arg2[%c32, %c0_26] : memref<168x512xf32, #tpu.memory_space<vmem>>, vector<16x144xf32>
    %c32_27 = arith.constant 32 : index
    %c0_28 = arith.constant 0 : index
    %188 = vector.load %arg3[%c32_27, %c0_28] : memref<168x1xf32, #tpu.memory_space<vmem>>, vector<16x1xf32>
    %189 = vector.extract_strided_slice %186 {offsets = [0, 55], sizes = [16, 9], strides = [1, 1]} : vector<16x64xf32> to vector<16x9xf32>
    %190 = vector.extract_strided_slice %186 {offsets = [0, 0], sizes = [16, 55], strides = [1, 1]} : vector<16x64xf32> to vector<16x55xf32>
    %191 = tpu.concatenate %189, %190 in 1 : vector<16x9xf32>, vector<16x55xf32> -> vector<16x64xf32>
    %192 = vector.extract_strided_slice %3 {offsets = [0, 0], sizes = [1, 64], strides = [1, 1]} : vector<9x64xf32> to vector<1x64xf32>
    %193 = vector.broadcast %192 : vector<1x64xf32> to vector<16x64xf32>
    %194 = arith.mulf %191, %193 : vector<16x64xf32>
    %195 = vector.extract_strided_slice %186 {offsets = [0, 56], sizes = [16, 8], strides = [1, 1]} : vector<16x64xf32> to vector<16x8xf32>
    %196 = vector.extract_strided_slice %186 {offsets = [0, 0], sizes = [16, 56], strides = [1, 1]} : vector<16x64xf32> to vector<16x56xf32>
    %197 = tpu.concatenate %195, %196 in 1 : vector<16x8xf32>, vector<16x56xf32> -> vector<16x64xf32>
    %198 = vector.extract_strided_slice %3 {offsets = [1, 0], sizes = [1, 64], strides = [1, 1]} : vector<9x64xf32> to vector<1x64xf32>
    %199 = vector.broadcast %198 : vector<1x64xf32> to vector<16x64xf32>
    %200 = arith.mulf %197, %199 : vector<16x64xf32>
    %201 = vector.extract_strided_slice %186 {offsets = [0, 57], sizes = [16, 7], strides = [1, 1]} : vector<16x64xf32> to vector<16x7xf32>
    %202 = vector.extract_strided_slice %186 {offsets = [0, 0], sizes = [16, 57], strides = [1, 1]} : vector<16x64xf32> to vector<16x57xf32>
    %203 = tpu.concatenate %201, %202 in 1 : vector<16x7xf32>, vector<16x57xf32> -> vector<16x64xf32>
    %204 = vector.extract_strided_slice %3 {offsets = [2, 0], sizes = [1, 64], strides = [1, 1]} : vector<9x64xf32> to vector<1x64xf32>
    %205 = vector.broadcast %204 : vector<1x64xf32> to vector<16x64xf32>
    %206 = arith.mulf %203, %205 : vector<16x64xf32>
    %207 = vector.extract_strided_slice %186 {offsets = [0, 63], sizes = [16, 1], strides = [1, 1]} : vector<16x64xf32> to vector<16x1xf32>
    %208 = vector.extract_strided_slice %186 {offsets = [0, 0], sizes = [16, 63], strides = [1, 1]} : vector<16x64xf32> to vector<16x63xf32>
    %209 = tpu.concatenate %207, %208 in 1 : vector<16x1xf32>, vector<16x63xf32> -> vector<16x64xf32>
    %210 = vector.extract_strided_slice %3 {offsets = [3, 0], sizes = [1, 64], strides = [1, 1]} : vector<9x64xf32> to vector<1x64xf32>
    %211 = vector.broadcast %210 : vector<1x64xf32> to vector<16x64xf32>
    %212 = arith.mulf %209, %211 : vector<16x64xf32>
    %213 = vector.extract_strided_slice %186 {offsets = [0, 1], sizes = [16, 63], strides = [1, 1]} : vector<16x64xf32> to vector<16x63xf32>
    %214 = vector.extract_strided_slice %186 {offsets = [0, 0], sizes = [16, 1], strides = [1, 1]} : vector<16x64xf32> to vector<16x1xf32>
    %215 = tpu.concatenate %213, %214 in 1 : vector<16x63xf32>, vector<16x1xf32> -> vector<16x64xf32>
    %216 = vector.extract_strided_slice %3 {offsets = [5, 0], sizes = [1, 64], strides = [1, 1]} : vector<9x64xf32> to vector<1x64xf32>
    %217 = vector.broadcast %216 : vector<1x64xf32> to vector<16x64xf32>
    %218 = arith.mulf %215, %217 : vector<16x64xf32>
    %219 = vector.extract_strided_slice %186 {offsets = [0, 7], sizes = [16, 57], strides = [1, 1]} : vector<16x64xf32> to vector<16x57xf32>
    %220 = vector.extract_strided_slice %186 {offsets = [0, 0], sizes = [16, 7], strides = [1, 1]} : vector<16x64xf32> to vector<16x7xf32>
    %221 = tpu.concatenate %219, %220 in 1 : vector<16x57xf32>, vector<16x7xf32> -> vector<16x64xf32>
    %222 = vector.extract_strided_slice %3 {offsets = [6, 0], sizes = [1, 64], strides = [1, 1]} : vector<9x64xf32> to vector<1x64xf32>
    %223 = vector.broadcast %222 : vector<1x64xf32> to vector<16x64xf32>
    %224 = arith.mulf %221, %223 : vector<16x64xf32>
    %225 = vector.extract_strided_slice %186 {offsets = [0, 8], sizes = [16, 56], strides = [1, 1]} : vector<16x64xf32> to vector<16x56xf32>
    %226 = vector.extract_strided_slice %186 {offsets = [0, 0], sizes = [16, 8], strides = [1, 1]} : vector<16x64xf32> to vector<16x8xf32>
    %227 = tpu.concatenate %225, %226 in 1 : vector<16x56xf32>, vector<16x8xf32> -> vector<16x64xf32>
    %228 = vector.extract_strided_slice %3 {offsets = [7, 0], sizes = [1, 64], strides = [1, 1]} : vector<9x64xf32> to vector<1x64xf32>
    %229 = vector.broadcast %228 : vector<1x64xf32> to vector<16x64xf32>
    %230 = arith.mulf %227, %229 : vector<16x64xf32>
    %231 = vector.extract_strided_slice %186 {offsets = [0, 9], sizes = [16, 55], strides = [1, 1]} : vector<16x64xf32> to vector<16x55xf32>
    %232 = vector.extract_strided_slice %186 {offsets = [0, 0], sizes = [16, 9], strides = [1, 1]} : vector<16x64xf32> to vector<16x9xf32>
    %233 = tpu.concatenate %231, %232 in 1 : vector<16x55xf32>, vector<16x9xf32> -> vector<16x64xf32>
    %234 = vector.extract_strided_slice %3 {offsets = [8, 0], sizes = [1, 64], strides = [1, 1]} : vector<9x64xf32> to vector<1x64xf32>
    %235 = vector.broadcast %234 : vector<1x64xf32> to vector<16x64xf32>
    %236 = arith.mulf %233, %235 : vector<16x64xf32>
    %237 = tpu.concatenate %194, %200, %206, %212, %186, %218, %224, %230, %236 in 0 : vector<16x64xf32>, vector<16x64xf32>, vector<16x64xf32>, vector<16x64xf32>, vector<16x64xf32>, vector<16x64xf32>, vector<16x64xf32>, vector<16x64xf32>, vector<16x64xf32> -> vector<144x64xf32>
    %cst_29 = arith.constant dense<0.000000e+00> : vector<16x64xf32>
    %238 = tpu.matmul %187, %237, %cst_29 {dimension_numbers = #tpu.dot_dimension_numbers<[1], [0], [0], [1], [0, 0, 1, 1], [], []>} : vector<16x144xf32>, vector<144x64xf32>, vector<16x64xf32> -> vector<16x64xf32>
    %239 = vector.broadcast %188 : vector<16x1xf32> to vector<16x64xf32>
    %240 = arith.addf %238, %239 : vector<16x64xf32>
    %cst_30 = arith.constant 0.000000e+00 : f32
    %241 = vector.broadcast %cst_30 : f32 to vector<16x64xf32>
    %242 = arith.maximumf %240, %241 : vector<16x64xf32>
    %c0_31 = arith.constant 0 : index
    %c0_32 = arith.constant 0 : index
    %243 = vector.load %arg8[%c0_31, %c0_32] : memref<64x16xf32, #tpu.memory_space<vmem>>, vector<64x16xf32>
    %244 = vector.extract_strided_slice %242 {offsets = [0, 1], sizes = [16, 63], strides = [1, 1]} : vector<16x64xf32> to vector<16x63xf32>
    %245 = vector.extract_strided_slice %242 {offsets = [0, 0], sizes = [16, 1], strides = [1, 1]} : vector<16x64xf32> to vector<16x1xf32>
    %246 = tpu.concatenate %244, %245 in 1 : vector<16x63xf32>, vector<16x1xf32> -> vector<16x64xf32>
    %247 = arith.maximumf %242, %246 : vector<16x64xf32>
    %248 = vector.extract_strided_slice %242 {offsets = [0, 8], sizes = [16, 56], strides = [1, 1]} : vector<16x64xf32> to vector<16x56xf32>
    %249 = vector.extract_strided_slice %242 {offsets = [0, 0], sizes = [16, 8], strides = [1, 1]} : vector<16x64xf32> to vector<16x8xf32>
    %250 = tpu.concatenate %248, %249 in 1 : vector<16x56xf32>, vector<16x8xf32> -> vector<16x64xf32>
    %251 = vector.extract_strided_slice %242 {offsets = [0, 9], sizes = [16, 55], strides = [1, 1]} : vector<16x64xf32> to vector<16x55xf32>
    %252 = vector.extract_strided_slice %242 {offsets = [0, 0], sizes = [16, 9], strides = [1, 1]} : vector<16x64xf32> to vector<16x9xf32>
    %253 = tpu.concatenate %251, %252 in 1 : vector<16x55xf32>, vector<16x9xf32> -> vector<16x64xf32>
    %254 = arith.maximumf %250, %253 : vector<16x64xf32>
    %255 = arith.maximumf %247, %254 : vector<16x64xf32>
    %cst_33 = arith.constant dense<0.000000e+00> : vector<16x16xf32>
    %256 = tpu.matmul %255, %243, %cst_33 {dimension_numbers = #tpu.dot_dimension_numbers<[1], [0], [0], [1], [0, 0, 1, 1], [], []>} : vector<16x64xf32>, vector<64x16xf32>, vector<16x16xf32> -> vector<16x16xf32>
    %c48 = arith.constant 48 : index
    %c0_34 = arith.constant 0 : index
    %257 = vector.load %arg2[%c48, %c0_34] : memref<168x512xf32, #tpu.memory_space<vmem>>, vector<32x144xf32>
    %c48_35 = arith.constant 48 : index
    %c0_36 = arith.constant 0 : index
    %258 = vector.load %arg3[%c48_35, %c0_36] : memref<168x1xf32, #tpu.memory_space<vmem>>, vector<32x1xf32>
    %259 = vector.extract_strided_slice %256 {offsets = [0, 11], sizes = [16, 5], strides = [1, 1]} : vector<16x16xf32> to vector<16x5xf32>
    %260 = vector.extract_strided_slice %256 {offsets = [0, 0], sizes = [16, 11], strides = [1, 1]} : vector<16x16xf32> to vector<16x11xf32>
    %261 = tpu.concatenate %259, %260 in 1 : vector<16x5xf32>, vector<16x11xf32> -> vector<16x16xf32>
    %262 = vector.extract_strided_slice %4 {offsets = [0, 0], sizes = [1, 16], strides = [1, 1]} : vector<9x16xf32> to vector<1x16xf32>
    %263 = vector.broadcast %262 : vector<1x16xf32> to vector<16x16xf32>
    %264 = arith.mulf %261, %263 : vector<16x16xf32>
    %265 = vector.extract_strided_slice %256 {offsets = [0, 12], sizes = [16, 4], strides = [1, 1]} : vector<16x16xf32> to vector<16x4xf32>
    %266 = vector.extract_strided_slice %256 {offsets = [0, 0], sizes = [16, 12], strides = [1, 1]} : vector<16x16xf32> to vector<16x12xf32>
    %267 = tpu.concatenate %265, %266 in 1 : vector<16x4xf32>, vector<16x12xf32> -> vector<16x16xf32>
    %268 = vector.extract_strided_slice %4 {offsets = [1, 0], sizes = [1, 16], strides = [1, 1]} : vector<9x16xf32> to vector<1x16xf32>
    %269 = vector.broadcast %268 : vector<1x16xf32> to vector<16x16xf32>
    %270 = arith.mulf %267, %269 : vector<16x16xf32>
    %271 = vector.extract_strided_slice %256 {offsets = [0, 13], sizes = [16, 3], strides = [1, 1]} : vector<16x16xf32> to vector<16x3xf32>
    %272 = vector.extract_strided_slice %256 {offsets = [0, 0], sizes = [16, 13], strides = [1, 1]} : vector<16x16xf32> to vector<16x13xf32>
    %273 = tpu.concatenate %271, %272 in 1 : vector<16x3xf32>, vector<16x13xf32> -> vector<16x16xf32>
    %274 = vector.extract_strided_slice %4 {offsets = [2, 0], sizes = [1, 16], strides = [1, 1]} : vector<9x16xf32> to vector<1x16xf32>
    %275 = vector.broadcast %274 : vector<1x16xf32> to vector<16x16xf32>
    %276 = arith.mulf %273, %275 : vector<16x16xf32>
    %277 = vector.extract_strided_slice %256 {offsets = [0, 15], sizes = [16, 1], strides = [1, 1]} : vector<16x16xf32> to vector<16x1xf32>
    %278 = vector.extract_strided_slice %256 {offsets = [0, 0], sizes = [16, 15], strides = [1, 1]} : vector<16x16xf32> to vector<16x15xf32>
    %279 = tpu.concatenate %277, %278 in 1 : vector<16x1xf32>, vector<16x15xf32> -> vector<16x16xf32>
    %280 = vector.extract_strided_slice %4 {offsets = [3, 0], sizes = [1, 16], strides = [1, 1]} : vector<9x16xf32> to vector<1x16xf32>
    %281 = vector.broadcast %280 : vector<1x16xf32> to vector<16x16xf32>
    %282 = arith.mulf %279, %281 : vector<16x16xf32>
    %283 = vector.extract_strided_slice %256 {offsets = [0, 1], sizes = [16, 15], strides = [1, 1]} : vector<16x16xf32> to vector<16x15xf32>
    %284 = vector.extract_strided_slice %256 {offsets = [0, 0], sizes = [16, 1], strides = [1, 1]} : vector<16x16xf32> to vector<16x1xf32>
    %285 = tpu.concatenate %283, %284 in 1 : vector<16x15xf32>, vector<16x1xf32> -> vector<16x16xf32>
    %286 = vector.extract_strided_slice %4 {offsets = [5, 0], sizes = [1, 16], strides = [1, 1]} : vector<9x16xf32> to vector<1x16xf32>
    %287 = vector.broadcast %286 : vector<1x16xf32> to vector<16x16xf32>
    %288 = arith.mulf %285, %287 : vector<16x16xf32>
    %289 = vector.extract_strided_slice %256 {offsets = [0, 3], sizes = [16, 13], strides = [1, 1]} : vector<16x16xf32> to vector<16x13xf32>
    %290 = vector.extract_strided_slice %256 {offsets = [0, 0], sizes = [16, 3], strides = [1, 1]} : vector<16x16xf32> to vector<16x3xf32>
    %291 = tpu.concatenate %289, %290 in 1 : vector<16x13xf32>, vector<16x3xf32> -> vector<16x16xf32>
    %292 = vector.extract_strided_slice %4 {offsets = [6, 0], sizes = [1, 16], strides = [1, 1]} : vector<9x16xf32> to vector<1x16xf32>
    %293 = vector.broadcast %292 : vector<1x16xf32> to vector<16x16xf32>
    %294 = arith.mulf %291, %293 : vector<16x16xf32>
    %295 = vector.extract_strided_slice %256 {offsets = [0, 4], sizes = [16, 12], strides = [1, 1]} : vector<16x16xf32> to vector<16x12xf32>
    %296 = vector.extract_strided_slice %256 {offsets = [0, 0], sizes = [16, 4], strides = [1, 1]} : vector<16x16xf32> to vector<16x4xf32>
    %297 = tpu.concatenate %295, %296 in 1 : vector<16x12xf32>, vector<16x4xf32> -> vector<16x16xf32>
    %298 = vector.extract_strided_slice %4 {offsets = [7, 0], sizes = [1, 16], strides = [1, 1]} : vector<9x16xf32> to vector<1x16xf32>
    %299 = vector.broadcast %298 : vector<1x16xf32> to vector<16x16xf32>
    %300 = arith.mulf %297, %299 : vector<16x16xf32>
    %301 = vector.extract_strided_slice %256 {offsets = [0, 5], sizes = [16, 11], strides = [1, 1]} : vector<16x16xf32> to vector<16x11xf32>
    %302 = vector.extract_strided_slice %256 {offsets = [0, 0], sizes = [16, 5], strides = [1, 1]} : vector<16x16xf32> to vector<16x5xf32>
    %303 = tpu.concatenate %301, %302 in 1 : vector<16x11xf32>, vector<16x5xf32> -> vector<16x16xf32>
    %304 = vector.extract_strided_slice %4 {offsets = [8, 0], sizes = [1, 16], strides = [1, 1]} : vector<9x16xf32> to vector<1x16xf32>
    %305 = vector.broadcast %304 : vector<1x16xf32> to vector<16x16xf32>
    %306 = arith.mulf %303, %305 : vector<16x16xf32>
    %307 = tpu.concatenate %264, %270, %276, %282, %256, %288, %294, %300, %306 in 0 : vector<16x16xf32>, vector<16x16xf32>, vector<16x16xf32>, vector<16x16xf32>, vector<16x16xf32>, vector<16x16xf32>, vector<16x16xf32>, vector<16x16xf32>, vector<16x16xf32> -> vector<144x16xf32>
    %cst_37 = arith.constant dense<0.000000e+00> : vector<32x16xf32>
    %308 = tpu.matmul %257, %307, %cst_37 {dimension_numbers = #tpu.dot_dimension_numbers<[1], [0], [0], [1], [0, 0, 1, 1], [], []>} : vector<32x144xf32>, vector<144x16xf32>, vector<32x16xf32> -> vector<32x16xf32>
    %309 = vector.broadcast %258 : vector<32x1xf32> to vector<32x16xf32>
    %310 = arith.addf %308, %309 : vector<32x16xf32>
    %cst_38 = arith.constant 0.000000e+00 : f32
    %311 = vector.broadcast %cst_38 : f32 to vector<32x16xf32>
    %312 = arith.maximumf %310, %311 : vector<32x16xf32>
    %c80 = arith.constant 80 : index
    %c0_39 = arith.constant 0 : index
    %313 = vector.load %arg2[%c80, %c0_39] : memref<168x512xf32, #tpu.memory_space<vmem>>, vector<32x288xf32>
    %c80_40 = arith.constant 80 : index
    %c0_41 = arith.constant 0 : index
    %314 = vector.load %arg3[%c80_40, %c0_41] : memref<168x1xf32, #tpu.memory_space<vmem>>, vector<32x1xf32>
    %315 = vector.extract_strided_slice %312 {offsets = [0, 11], sizes = [32, 5], strides = [1, 1]} : vector<32x16xf32> to vector<32x5xf32>
    %316 = vector.extract_strided_slice %312 {offsets = [0, 0], sizes = [32, 11], strides = [1, 1]} : vector<32x16xf32> to vector<32x11xf32>
    %317 = tpu.concatenate %315, %316 in 1 : vector<32x5xf32>, vector<32x11xf32> -> vector<32x16xf32>
    %318 = vector.extract_strided_slice %4 {offsets = [0, 0], sizes = [1, 16], strides = [1, 1]} : vector<9x16xf32> to vector<1x16xf32>
    %319 = vector.broadcast %318 : vector<1x16xf32> to vector<32x16xf32>
    %320 = arith.mulf %317, %319 : vector<32x16xf32>
    %321 = vector.extract_strided_slice %312 {offsets = [0, 12], sizes = [32, 4], strides = [1, 1]} : vector<32x16xf32> to vector<32x4xf32>
    %322 = vector.extract_strided_slice %312 {offsets = [0, 0], sizes = [32, 12], strides = [1, 1]} : vector<32x16xf32> to vector<32x12xf32>
    %323 = tpu.concatenate %321, %322 in 1 : vector<32x4xf32>, vector<32x12xf32> -> vector<32x16xf32>
    %324 = vector.extract_strided_slice %4 {offsets = [1, 0], sizes = [1, 16], strides = [1, 1]} : vector<9x16xf32> to vector<1x16xf32>
    %325 = vector.broadcast %324 : vector<1x16xf32> to vector<32x16xf32>
    %326 = arith.mulf %323, %325 : vector<32x16xf32>
    %327 = vector.extract_strided_slice %312 {offsets = [0, 13], sizes = [32, 3], strides = [1, 1]} : vector<32x16xf32> to vector<32x3xf32>
    %328 = vector.extract_strided_slice %312 {offsets = [0, 0], sizes = [32, 13], strides = [1, 1]} : vector<32x16xf32> to vector<32x13xf32>
    %329 = tpu.concatenate %327, %328 in 1 : vector<32x3xf32>, vector<32x13xf32> -> vector<32x16xf32>
    %330 = vector.extract_strided_slice %4 {offsets = [2, 0], sizes = [1, 16], strides = [1, 1]} : vector<9x16xf32> to vector<1x16xf32>
    %331 = vector.broadcast %330 : vector<1x16xf32> to vector<32x16xf32>
    %332 = arith.mulf %329, %331 : vector<32x16xf32>
    %333 = vector.extract_strided_slice %312 {offsets = [0, 15], sizes = [32, 1], strides = [1, 1]} : vector<32x16xf32> to vector<32x1xf32>
    %334 = vector.extract_strided_slice %312 {offsets = [0, 0], sizes = [32, 15], strides = [1, 1]} : vector<32x16xf32> to vector<32x15xf32>
    %335 = tpu.concatenate %333, %334 in 1 : vector<32x1xf32>, vector<32x15xf32> -> vector<32x16xf32>
    %336 = vector.extract_strided_slice %4 {offsets = [3, 0], sizes = [1, 16], strides = [1, 1]} : vector<9x16xf32> to vector<1x16xf32>
    %337 = vector.broadcast %336 : vector<1x16xf32> to vector<32x16xf32>
    %338 = arith.mulf %335, %337 : vector<32x16xf32>
    %339 = vector.extract_strided_slice %312 {offsets = [0, 1], sizes = [32, 15], strides = [1, 1]} : vector<32x16xf32> to vector<32x15xf32>
    %340 = vector.extract_strided_slice %312 {offsets = [0, 0], sizes = [32, 1], strides = [1, 1]} : vector<32x16xf32> to vector<32x1xf32>
    %341 = tpu.concatenate %339, %340 in 1 : vector<32x15xf32>, vector<32x1xf32> -> vector<32x16xf32>
    %342 = vector.extract_strided_slice %4 {offsets = [5, 0], sizes = [1, 16], strides = [1, 1]} : vector<9x16xf32> to vector<1x16xf32>
    %343 = vector.broadcast %342 : vector<1x16xf32> to vector<32x16xf32>
    %344 = arith.mulf %341, %343 : vector<32x16xf32>
    %345 = vector.extract_strided_slice %312 {offsets = [0, 3], sizes = [32, 13], strides = [1, 1]} : vector<32x16xf32> to vector<32x13xf32>
    %346 = vector.extract_strided_slice %312 {offsets = [0, 0], sizes = [32, 3], strides = [1, 1]} : vector<32x16xf32> to vector<32x3xf32>
    %347 = tpu.concatenate %345, %346 in 1 : vector<32x13xf32>, vector<32x3xf32> -> vector<32x16xf32>
    %348 = vector.extract_strided_slice %4 {offsets = [6, 0], sizes = [1, 16], strides = [1, 1]} : vector<9x16xf32> to vector<1x16xf32>
    %349 = vector.broadcast %348 : vector<1x16xf32> to vector<32x16xf32>
    %350 = arith.mulf %347, %349 : vector<32x16xf32>
    %351 = vector.extract_strided_slice %312 {offsets = [0, 4], sizes = [32, 12], strides = [1, 1]} : vector<32x16xf32> to vector<32x12xf32>
    %352 = vector.extract_strided_slice %312 {offsets = [0, 0], sizes = [32, 4], strides = [1, 1]} : vector<32x16xf32> to vector<32x4xf32>
    %353 = tpu.concatenate %351, %352 in 1 : vector<32x12xf32>, vector<32x4xf32> -> vector<32x16xf32>
    %354 = vector.extract_strided_slice %4 {offsets = [7, 0], sizes = [1, 16], strides = [1, 1]} : vector<9x16xf32> to vector<1x16xf32>
    %355 = vector.broadcast %354 : vector<1x16xf32> to vector<32x16xf32>
    %356 = arith.mulf %353, %355 : vector<32x16xf32>
    %357 = vector.extract_strided_slice %312 {offsets = [0, 5], sizes = [32, 11], strides = [1, 1]} : vector<32x16xf32> to vector<32x11xf32>
    %358 = vector.extract_strided_slice %312 {offsets = [0, 0], sizes = [32, 5], strides = [1, 1]} : vector<32x16xf32> to vector<32x5xf32>
    %359 = tpu.concatenate %357, %358 in 1 : vector<32x11xf32>, vector<32x5xf32> -> vector<32x16xf32>
    %360 = vector.extract_strided_slice %4 {offsets = [8, 0], sizes = [1, 16], strides = [1, 1]} : vector<9x16xf32> to vector<1x16xf32>
    %361 = vector.broadcast %360 : vector<1x16xf32> to vector<32x16xf32>
    %362 = arith.mulf %359, %361 : vector<32x16xf32>
    %363 = tpu.concatenate %320, %326, %332, %338, %312, %344, %350, %356, %362 in 0 : vector<32x16xf32>, vector<32x16xf32>, vector<32x16xf32>, vector<32x16xf32>, vector<32x16xf32>, vector<32x16xf32>, vector<32x16xf32>, vector<32x16xf32>, vector<32x16xf32> -> vector<288x16xf32>
    %cst_42 = arith.constant dense<0.000000e+00> : vector<32x16xf32>
    %364 = tpu.matmul %313, %363, %cst_42 {dimension_numbers = #tpu.dot_dimension_numbers<[1], [0], [0], [1], [0, 0, 1, 1], [], []>} : vector<32x288xf32>, vector<288x16xf32>, vector<32x16xf32> -> vector<32x16xf32>
    %365 = vector.broadcast %314 : vector<32x1xf32> to vector<32x16xf32>
    %366 = arith.addf %364, %365 : vector<32x16xf32>
    %cst_43 = arith.constant 0.000000e+00 : f32
    %367 = vector.broadcast %cst_43 : f32 to vector<32x16xf32>
    %368 = arith.maximumf %366, %367 : vector<32x16xf32>
    %c0_44 = arith.constant 0 : index
    %c0_45 = arith.constant 0 : index
    %369 = vector.load %arg9[%c0_44, %c0_45] : memref<16x64xf32, #tpu.memory_space<vmem>>, vector<16x64xf32>
    %cst_46 = arith.constant dense<0.000000e+00> : vector<32x64xf32>
    %370 = tpu.matmul %368, %369, %cst_46 {dimension_numbers = #tpu.dot_dimension_numbers<[1], [0], [0], [1], [0, 0, 1, 1], [], []>} : vector<32x16xf32>, vector<16x64xf32>, vector<32x64xf32> -> vector<32x64xf32>
    %371 = tpu.concatenate %370, %242 in 0 : vector<32x64xf32>, vector<16x64xf32> -> vector<48x64xf32>
    %c112 = arith.constant 112 : index
    %c0_47 = arith.constant 0 : index
    %372 = vector.load %arg2[%c112, %c0_47] : memref<168x512xf32, #tpu.memory_space<vmem>>, vector<16x432xf32>
    %c112_48 = arith.constant 112 : index
    %c0_49 = arith.constant 0 : index
    %373 = vector.load %arg3[%c112_48, %c0_49] : memref<168x1xf32, #tpu.memory_space<vmem>>, vector<16x1xf32>
    %374 = vector.extract_strided_slice %371 {offsets = [0, 55], sizes = [48, 9], strides = [1, 1]} : vector<48x64xf32> to vector<48x9xf32>
    %375 = vector.extract_strided_slice %371 {offsets = [0, 0], sizes = [48, 55], strides = [1, 1]} : vector<48x64xf32> to vector<48x55xf32>
    %376 = tpu.concatenate %374, %375 in 1 : vector<48x9xf32>, vector<48x55xf32> -> vector<48x64xf32>
    %377 = vector.extract_strided_slice %3 {offsets = [0, 0], sizes = [1, 64], strides = [1, 1]} : vector<9x64xf32> to vector<1x64xf32>
    %378 = vector.broadcast %377 : vector<1x64xf32> to vector<48x64xf32>
    %379 = arith.mulf %376, %378 : vector<48x64xf32>
    %380 = vector.extract_strided_slice %371 {offsets = [0, 56], sizes = [48, 8], strides = [1, 1]} : vector<48x64xf32> to vector<48x8xf32>
    %381 = vector.extract_strided_slice %371 {offsets = [0, 0], sizes = [48, 56], strides = [1, 1]} : vector<48x64xf32> to vector<48x56xf32>
    %382 = tpu.concatenate %380, %381 in 1 : vector<48x8xf32>, vector<48x56xf32> -> vector<48x64xf32>
    %383 = vector.extract_strided_slice %3 {offsets = [1, 0], sizes = [1, 64], strides = [1, 1]} : vector<9x64xf32> to vector<1x64xf32>
    %384 = vector.broadcast %383 : vector<1x64xf32> to vector<48x64xf32>
    %385 = arith.mulf %382, %384 : vector<48x64xf32>
    %386 = vector.extract_strided_slice %371 {offsets = [0, 57], sizes = [48, 7], strides = [1, 1]} : vector<48x64xf32> to vector<48x7xf32>
    %387 = vector.extract_strided_slice %371 {offsets = [0, 0], sizes = [48, 57], strides = [1, 1]} : vector<48x64xf32> to vector<48x57xf32>
    %388 = tpu.concatenate %386, %387 in 1 : vector<48x7xf32>, vector<48x57xf32> -> vector<48x64xf32>
    %389 = vector.extract_strided_slice %3 {offsets = [2, 0], sizes = [1, 64], strides = [1, 1]} : vector<9x64xf32> to vector<1x64xf32>
    %390 = vector.broadcast %389 : vector<1x64xf32> to vector<48x64xf32>
    %391 = arith.mulf %388, %390 : vector<48x64xf32>
    %392 = vector.extract_strided_slice %371 {offsets = [0, 63], sizes = [48, 1], strides = [1, 1]} : vector<48x64xf32> to vector<48x1xf32>
    %393 = vector.extract_strided_slice %371 {offsets = [0, 0], sizes = [48, 63], strides = [1, 1]} : vector<48x64xf32> to vector<48x63xf32>
    %394 = tpu.concatenate %392, %393 in 1 : vector<48x1xf32>, vector<48x63xf32> -> vector<48x64xf32>
    %395 = vector.extract_strided_slice %3 {offsets = [3, 0], sizes = [1, 64], strides = [1, 1]} : vector<9x64xf32> to vector<1x64xf32>
    %396 = vector.broadcast %395 : vector<1x64xf32> to vector<48x64xf32>
    %397 = arith.mulf %394, %396 : vector<48x64xf32>
    %398 = vector.extract_strided_slice %371 {offsets = [0, 1], sizes = [48, 63], strides = [1, 1]} : vector<48x64xf32> to vector<48x63xf32>
    %399 = vector.extract_strided_slice %371 {offsets = [0, 0], sizes = [48, 1], strides = [1, 1]} : vector<48x64xf32> to vector<48x1xf32>
    %400 = tpu.concatenate %398, %399 in 1 : vector<48x63xf32>, vector<48x1xf32> -> vector<48x64xf32>
    %401 = vector.extract_strided_slice %3 {offsets = [5, 0], sizes = [1, 64], strides = [1, 1]} : vector<9x64xf32> to vector<1x64xf32>
    %402 = vector.broadcast %401 : vector<1x64xf32> to vector<48x64xf32>
    %403 = arith.mulf %400, %402 : vector<48x64xf32>
    %404 = vector.extract_strided_slice %371 {offsets = [0, 7], sizes = [48, 57], strides = [1, 1]} : vector<48x64xf32> to vector<48x57xf32>
    %405 = vector.extract_strided_slice %371 {offsets = [0, 0], sizes = [48, 7], strides = [1, 1]} : vector<48x64xf32> to vector<48x7xf32>
    %406 = tpu.concatenate %404, %405 in 1 : vector<48x57xf32>, vector<48x7xf32> -> vector<48x64xf32>
    %407 = vector.extract_strided_slice %3 {offsets = [6, 0], sizes = [1, 64], strides = [1, 1]} : vector<9x64xf32> to vector<1x64xf32>
    %408 = vector.broadcast %407 : vector<1x64xf32> to vector<48x64xf32>
    %409 = arith.mulf %406, %408 : vector<48x64xf32>
    %410 = vector.extract_strided_slice %371 {offsets = [0, 8], sizes = [48, 56], strides = [1, 1]} : vector<48x64xf32> to vector<48x56xf32>
    %411 = vector.extract_strided_slice %371 {offsets = [0, 0], sizes = [48, 8], strides = [1, 1]} : vector<48x64xf32> to vector<48x8xf32>
    %412 = tpu.concatenate %410, %411 in 1 : vector<48x56xf32>, vector<48x8xf32> -> vector<48x64xf32>
    %413 = vector.extract_strided_slice %3 {offsets = [7, 0], sizes = [1, 64], strides = [1, 1]} : vector<9x64xf32> to vector<1x64xf32>
    %414 = vector.broadcast %413 : vector<1x64xf32> to vector<48x64xf32>
    %415 = arith.mulf %412, %414 : vector<48x64xf32>
    %416 = vector.extract_strided_slice %371 {offsets = [0, 9], sizes = [48, 55], strides = [1, 1]} : vector<48x64xf32> to vector<48x55xf32>
    %417 = vector.extract_strided_slice %371 {offsets = [0, 0], sizes = [48, 9], strides = [1, 1]} : vector<48x64xf32> to vector<48x9xf32>
    %418 = tpu.concatenate %416, %417 in 1 : vector<48x55xf32>, vector<48x9xf32> -> vector<48x64xf32>
    %419 = vector.extract_strided_slice %3 {offsets = [8, 0], sizes = [1, 64], strides = [1, 1]} : vector<9x64xf32> to vector<1x64xf32>
    %420 = vector.broadcast %419 : vector<1x64xf32> to vector<48x64xf32>
    %421 = arith.mulf %418, %420 : vector<48x64xf32>
    %422 = tpu.concatenate %379, %385, %391, %397, %371, %403, %409, %415, %421 in 0 : vector<48x64xf32>, vector<48x64xf32>, vector<48x64xf32>, vector<48x64xf32>, vector<48x64xf32>, vector<48x64xf32>, vector<48x64xf32>, vector<48x64xf32>, vector<48x64xf32> -> vector<432x64xf32>
    %cst_50 = arith.constant dense<0.000000e+00> : vector<16x64xf32>
    %423 = tpu.matmul %372, %422, %cst_50 {dimension_numbers = #tpu.dot_dimension_numbers<[1], [0], [0], [1], [0, 0, 1, 1], [], []>} : vector<16x432xf32>, vector<432x64xf32>, vector<16x64xf32> -> vector<16x64xf32>
    %424 = vector.broadcast %373 : vector<16x1xf32> to vector<16x64xf32>
    %425 = arith.addf %423, %424 : vector<16x64xf32>
    %cst_51 = arith.constant 0.000000e+00 : f32
    %426 = vector.broadcast %cst_51 : f32 to vector<16x64xf32>
    %427 = arith.maximumf %425, %426 : vector<16x64xf32>
    %c128 = arith.constant 128 : index
    %c0_52 = arith.constant 0 : index
    %428 = vector.load %arg2[%c128, %c0_52] : memref<168x512xf32, #tpu.memory_space<vmem>>, vector<16x144xf32>
    %c128_53 = arith.constant 128 : index
    %c0_54 = arith.constant 0 : index
    %429 = vector.load %arg3[%c128_53, %c0_54] : memref<168x1xf32, #tpu.memory_space<vmem>>, vector<16x1xf32>
    %430 = vector.extract_strided_slice %427 {offsets = [0, 55], sizes = [16, 9], strides = [1, 1]} : vector<16x64xf32> to vector<16x9xf32>
    %431 = vector.extract_strided_slice %427 {offsets = [0, 0], sizes = [16, 55], strides = [1, 1]} : vector<16x64xf32> to vector<16x55xf32>
    %432 = tpu.concatenate %430, %431 in 1 : vector<16x9xf32>, vector<16x55xf32> -> vector<16x64xf32>
    %433 = vector.extract_strided_slice %3 {offsets = [0, 0], sizes = [1, 64], strides = [1, 1]} : vector<9x64xf32> to vector<1x64xf32>
    %434 = vector.broadcast %433 : vector<1x64xf32> to vector<16x64xf32>
    %435 = arith.mulf %432, %434 : vector<16x64xf32>
    %436 = vector.extract_strided_slice %427 {offsets = [0, 56], sizes = [16, 8], strides = [1, 1]} : vector<16x64xf32> to vector<16x8xf32>
    %437 = vector.extract_strided_slice %427 {offsets = [0, 0], sizes = [16, 56], strides = [1, 1]} : vector<16x64xf32> to vector<16x56xf32>
    %438 = tpu.concatenate %436, %437 in 1 : vector<16x8xf32>, vector<16x56xf32> -> vector<16x64xf32>
    %439 = vector.extract_strided_slice %3 {offsets = [1, 0], sizes = [1, 64], strides = [1, 1]} : vector<9x64xf32> to vector<1x64xf32>
    %440 = vector.broadcast %439 : vector<1x64xf32> to vector<16x64xf32>
    %441 = arith.mulf %438, %440 : vector<16x64xf32>
    %442 = vector.extract_strided_slice %427 {offsets = [0, 57], sizes = [16, 7], strides = [1, 1]} : vector<16x64xf32> to vector<16x7xf32>
    %443 = vector.extract_strided_slice %427 {offsets = [0, 0], sizes = [16, 57], strides = [1, 1]} : vector<16x64xf32> to vector<16x57xf32>
    %444 = tpu.concatenate %442, %443 in 1 : vector<16x7xf32>, vector<16x57xf32> -> vector<16x64xf32>
    %445 = vector.extract_strided_slice %3 {offsets = [2, 0], sizes = [1, 64], strides = [1, 1]} : vector<9x64xf32> to vector<1x64xf32>
    %446 = vector.broadcast %445 : vector<1x64xf32> to vector<16x64xf32>
    %447 = arith.mulf %444, %446 : vector<16x64xf32>
    %448 = vector.extract_strided_slice %427 {offsets = [0, 63], sizes = [16, 1], strides = [1, 1]} : vector<16x64xf32> to vector<16x1xf32>
    %449 = vector.extract_strided_slice %427 {offsets = [0, 0], sizes = [16, 63], strides = [1, 1]} : vector<16x64xf32> to vector<16x63xf32>
    %450 = tpu.concatenate %448, %449 in 1 : vector<16x1xf32>, vector<16x63xf32> -> vector<16x64xf32>
    %451 = vector.extract_strided_slice %3 {offsets = [3, 0], sizes = [1, 64], strides = [1, 1]} : vector<9x64xf32> to vector<1x64xf32>
    %452 = vector.broadcast %451 : vector<1x64xf32> to vector<16x64xf32>
    %453 = arith.mulf %450, %452 : vector<16x64xf32>
    %454 = vector.extract_strided_slice %427 {offsets = [0, 1], sizes = [16, 63], strides = [1, 1]} : vector<16x64xf32> to vector<16x63xf32>
    %455 = vector.extract_strided_slice %427 {offsets = [0, 0], sizes = [16, 1], strides = [1, 1]} : vector<16x64xf32> to vector<16x1xf32>
    %456 = tpu.concatenate %454, %455 in 1 : vector<16x63xf32>, vector<16x1xf32> -> vector<16x64xf32>
    %457 = vector.extract_strided_slice %3 {offsets = [5, 0], sizes = [1, 64], strides = [1, 1]} : vector<9x64xf32> to vector<1x64xf32>
    %458 = vector.broadcast %457 : vector<1x64xf32> to vector<16x64xf32>
    %459 = arith.mulf %456, %458 : vector<16x64xf32>
    %460 = vector.extract_strided_slice %427 {offsets = [0, 7], sizes = [16, 57], strides = [1, 1]} : vector<16x64xf32> to vector<16x57xf32>
    %461 = vector.extract_strided_slice %427 {offsets = [0, 0], sizes = [16, 7], strides = [1, 1]} : vector<16x64xf32> to vector<16x7xf32>
    %462 = tpu.concatenate %460, %461 in 1 : vector<16x57xf32>, vector<16x7xf32> -> vector<16x64xf32>
    %463 = vector.extract_strided_slice %3 {offsets = [6, 0], sizes = [1, 64], strides = [1, 1]} : vector<9x64xf32> to vector<1x64xf32>
    %464 = vector.broadcast %463 : vector<1x64xf32> to vector<16x64xf32>
    %465 = arith.mulf %462, %464 : vector<16x64xf32>
    %466 = vector.extract_strided_slice %427 {offsets = [0, 8], sizes = [16, 56], strides = [1, 1]} : vector<16x64xf32> to vector<16x56xf32>
    %467 = vector.extract_strided_slice %427 {offsets = [0, 0], sizes = [16, 8], strides = [1, 1]} : vector<16x64xf32> to vector<16x8xf32>
    %468 = tpu.concatenate %466, %467 in 1 : vector<16x56xf32>, vector<16x8xf32> -> vector<16x64xf32>
    %469 = vector.extract_strided_slice %3 {offsets = [7, 0], sizes = [1, 64], strides = [1, 1]} : vector<9x64xf32> to vector<1x64xf32>
    %470 = vector.broadcast %469 : vector<1x64xf32> to vector<16x64xf32>
    %471 = arith.mulf %468, %470 : vector<16x64xf32>
    %472 = vector.extract_strided_slice %427 {offsets = [0, 9], sizes = [16, 55], strides = [1, 1]} : vector<16x64xf32> to vector<16x55xf32>
    %473 = vector.extract_strided_slice %427 {offsets = [0, 0], sizes = [16, 9], strides = [1, 1]} : vector<16x64xf32> to vector<16x9xf32>
    %474 = tpu.concatenate %472, %473 in 1 : vector<16x55xf32>, vector<16x9xf32> -> vector<16x64xf32>
    %475 = vector.extract_strided_slice %3 {offsets = [8, 0], sizes = [1, 64], strides = [1, 1]} : vector<9x64xf32> to vector<1x64xf32>
    %476 = vector.broadcast %475 : vector<1x64xf32> to vector<16x64xf32>
    %477 = arith.mulf %474, %476 : vector<16x64xf32>
    %478 = tpu.concatenate %435, %441, %447, %453, %427, %459, %465, %471, %477 in 0 : vector<16x64xf32>, vector<16x64xf32>, vector<16x64xf32>, vector<16x64xf32>, vector<16x64xf32>, vector<16x64xf32>, vector<16x64xf32>, vector<16x64xf32>, vector<16x64xf32> -> vector<144x64xf32>
    %cst_55 = arith.constant dense<0.000000e+00> : vector<16x64xf32>
    %479 = tpu.matmul %428, %478, %cst_55 {dimension_numbers = #tpu.dot_dimension_numbers<[1], [0], [0], [1], [0, 0, 1, 1], [], []>} : vector<16x144xf32>, vector<144x64xf32>, vector<16x64xf32> -> vector<16x64xf32>
    %480 = vector.broadcast %429 : vector<16x1xf32> to vector<16x64xf32>
    %481 = arith.addf %479, %480 : vector<16x64xf32>
    %cst_56 = arith.constant 0.000000e+00 : f32
    %482 = vector.broadcast %cst_56 : f32 to vector<16x64xf32>
    %483 = arith.maximumf %481, %482 : vector<16x64xf32>
    %c0_57 = arith.constant 0 : index
    %c0_58 = arith.constant 0 : index
    %484 = vector.load %arg10[%c0_57, %c0_58] : memref<64x256xf32, #tpu.memory_space<vmem>>, vector<64x256xf32>
    %cst_59 = arith.constant dense<0.000000e+00> : vector<16x256xf32>
    %485 = tpu.matmul %483, %484, %cst_59 {dimension_numbers = #tpu.dot_dimension_numbers<[1], [0], [0], [1], [0, 0, 1, 1], [], []>} : vector<16x64xf32>, vector<64x256xf32>, vector<16x256xf32> -> vector<16x256xf32>
    %486 = tpu.concatenate %485, %116 in 0 : vector<16x256xf32>, vector<8x256xf32> -> vector<24x256xf32>
    %c144 = arith.constant 144 : index
    %c0_60 = arith.constant 0 : index
    %487 = vector.load %arg2[%c144, %c0_60] : memref<168x512xf32, #tpu.memory_space<vmem>>, vector<8x216xf32>
    %c144_61 = arith.constant 144 : index
    %c0_62 = arith.constant 0 : index
    %488 = vector.load %arg3[%c144_61, %c0_62] : memref<168x1xf32, #tpu.memory_space<vmem>>, vector<8x1xf32>
    %489 = vector.extract_strided_slice %486 {offsets = [0, 239], sizes = [24, 17], strides = [1, 1]} : vector<24x256xf32> to vector<24x17xf32>
    %490 = vector.extract_strided_slice %486 {offsets = [0, 0], sizes = [24, 239], strides = [1, 1]} : vector<24x256xf32> to vector<24x239xf32>
    %491 = tpu.concatenate %489, %490 in 1 : vector<24x17xf32>, vector<24x239xf32> -> vector<24x256xf32>
    %492 = vector.extract_strided_slice %2 {offsets = [0, 0], sizes = [1, 256], strides = [1, 1]} : vector<9x256xf32> to vector<1x256xf32>
    %493 = vector.broadcast %492 : vector<1x256xf32> to vector<24x256xf32>
    %494 = arith.mulf %491, %493 : vector<24x256xf32>
    %495 = vector.extract_strided_slice %486 {offsets = [0, 240], sizes = [24, 16], strides = [1, 1]} : vector<24x256xf32> to vector<24x16xf32>
    %496 = vector.extract_strided_slice %486 {offsets = [0, 0], sizes = [24, 240], strides = [1, 1]} : vector<24x256xf32> to vector<24x240xf32>
    %497 = tpu.concatenate %495, %496 in 1 : vector<24x16xf32>, vector<24x240xf32> -> vector<24x256xf32>
    %498 = vector.extract_strided_slice %2 {offsets = [1, 0], sizes = [1, 256], strides = [1, 1]} : vector<9x256xf32> to vector<1x256xf32>
    %499 = vector.broadcast %498 : vector<1x256xf32> to vector<24x256xf32>
    %500 = arith.mulf %497, %499 : vector<24x256xf32>
    %501 = vector.extract_strided_slice %486 {offsets = [0, 241], sizes = [24, 15], strides = [1, 1]} : vector<24x256xf32> to vector<24x15xf32>
    %502 = vector.extract_strided_slice %486 {offsets = [0, 0], sizes = [24, 241], strides = [1, 1]} : vector<24x256xf32> to vector<24x241xf32>
    %503 = tpu.concatenate %501, %502 in 1 : vector<24x15xf32>, vector<24x241xf32> -> vector<24x256xf32>
    %504 = vector.extract_strided_slice %2 {offsets = [2, 0], sizes = [1, 256], strides = [1, 1]} : vector<9x256xf32> to vector<1x256xf32>
    %505 = vector.broadcast %504 : vector<1x256xf32> to vector<24x256xf32>
    %506 = arith.mulf %503, %505 : vector<24x256xf32>
    %507 = vector.extract_strided_slice %486 {offsets = [0, 255], sizes = [24, 1], strides = [1, 1]} : vector<24x256xf32> to vector<24x1xf32>
    %508 = vector.extract_strided_slice %486 {offsets = [0, 0], sizes = [24, 255], strides = [1, 1]} : vector<24x256xf32> to vector<24x255xf32>
    %509 = tpu.concatenate %507, %508 in 1 : vector<24x1xf32>, vector<24x255xf32> -> vector<24x256xf32>
    %510 = vector.extract_strided_slice %2 {offsets = [3, 0], sizes = [1, 256], strides = [1, 1]} : vector<9x256xf32> to vector<1x256xf32>
    %511 = vector.broadcast %510 : vector<1x256xf32> to vector<24x256xf32>
    %512 = arith.mulf %509, %511 : vector<24x256xf32>
    %513 = vector.extract_strided_slice %486 {offsets = [0, 1], sizes = [24, 255], strides = [1, 1]} : vector<24x256xf32> to vector<24x255xf32>
    %514 = vector.extract_strided_slice %486 {offsets = [0, 0], sizes = [24, 1], strides = [1, 1]} : vector<24x256xf32> to vector<24x1xf32>
    %515 = tpu.concatenate %513, %514 in 1 : vector<24x255xf32>, vector<24x1xf32> -> vector<24x256xf32>
    %516 = vector.extract_strided_slice %2 {offsets = [5, 0], sizes = [1, 256], strides = [1, 1]} : vector<9x256xf32> to vector<1x256xf32>
    %517 = vector.broadcast %516 : vector<1x256xf32> to vector<24x256xf32>
    %518 = arith.mulf %515, %517 : vector<24x256xf32>
    %519 = vector.extract_strided_slice %486 {offsets = [0, 15], sizes = [24, 241], strides = [1, 1]} : vector<24x256xf32> to vector<24x241xf32>
    %520 = vector.extract_strided_slice %486 {offsets = [0, 0], sizes = [24, 15], strides = [1, 1]} : vector<24x256xf32> to vector<24x15xf32>
    %521 = tpu.concatenate %519, %520 in 1 : vector<24x241xf32>, vector<24x15xf32> -> vector<24x256xf32>
    %522 = vector.extract_strided_slice %2 {offsets = [6, 0], sizes = [1, 256], strides = [1, 1]} : vector<9x256xf32> to vector<1x256xf32>
    %523 = vector.broadcast %522 : vector<1x256xf32> to vector<24x256xf32>
    %524 = arith.mulf %521, %523 : vector<24x256xf32>
    %525 = vector.extract_strided_slice %486 {offsets = [0, 16], sizes = [24, 240], strides = [1, 1]} : vector<24x256xf32> to vector<24x240xf32>
    %526 = vector.extract_strided_slice %486 {offsets = [0, 0], sizes = [24, 16], strides = [1, 1]} : vector<24x256xf32> to vector<24x16xf32>
    %527 = tpu.concatenate %525, %526 in 1 : vector<24x240xf32>, vector<24x16xf32> -> vector<24x256xf32>
    %528 = vector.extract_strided_slice %2 {offsets = [7, 0], sizes = [1, 256], strides = [1, 1]} : vector<9x256xf32> to vector<1x256xf32>
    %529 = vector.broadcast %528 : vector<1x256xf32> to vector<24x256xf32>
    %530 = arith.mulf %527, %529 : vector<24x256xf32>
    %531 = vector.extract_strided_slice %486 {offsets = [0, 17], sizes = [24, 239], strides = [1, 1]} : vector<24x256xf32> to vector<24x239xf32>
    %532 = vector.extract_strided_slice %486 {offsets = [0, 0], sizes = [24, 17], strides = [1, 1]} : vector<24x256xf32> to vector<24x17xf32>
    %533 = tpu.concatenate %531, %532 in 1 : vector<24x239xf32>, vector<24x17xf32> -> vector<24x256xf32>
    %534 = vector.extract_strided_slice %2 {offsets = [8, 0], sizes = [1, 256], strides = [1, 1]} : vector<9x256xf32> to vector<1x256xf32>
    %535 = vector.broadcast %534 : vector<1x256xf32> to vector<24x256xf32>
    %536 = arith.mulf %533, %535 : vector<24x256xf32>
    %537 = tpu.concatenate %494, %500, %506, %512, %486, %518, %524, %530, %536 in 0 : vector<24x256xf32>, vector<24x256xf32>, vector<24x256xf32>, vector<24x256xf32>, vector<24x256xf32>, vector<24x256xf32>, vector<24x256xf32>, vector<24x256xf32>, vector<24x256xf32> -> vector<216x256xf32>
    %cst_63 = arith.constant dense<0.000000e+00> : vector<8x256xf32>
    %538 = tpu.matmul %487, %537, %cst_63 {dimension_numbers = #tpu.dot_dimension_numbers<[1], [0], [0], [1], [0, 0, 1, 1], [], []>} : vector<8x216xf32>, vector<216x256xf32>, vector<8x256xf32> -> vector<8x256xf32>
    %539 = vector.broadcast %488 : vector<8x1xf32> to vector<8x256xf32>
    %540 = arith.addf %538, %539 : vector<8x256xf32>
    %cst_64 = arith.constant 0.000000e+00 : f32
    %541 = vector.broadcast %cst_64 : f32 to vector<8x256xf32>
    %542 = arith.maximumf %540, %541 : vector<8x256xf32>
    %c152 = arith.constant 152 : index
    %c0_65 = arith.constant 0 : index
    %543 = vector.load %arg2[%c152, %c0_65] : memref<168x512xf32, #tpu.memory_space<vmem>>, vector<8x72xf32>
    %c152_66 = arith.constant 152 : index
    %c0_67 = arith.constant 0 : index
    %544 = vector.load %arg3[%c152_66, %c0_67] : memref<168x1xf32, #tpu.memory_space<vmem>>, vector<8x1xf32>
    %545 = vector.extract_strided_slice %542 {offsets = [0, 239], sizes = [8, 17], strides = [1, 1]} : vector<8x256xf32> to vector<8x17xf32>
    %546 = vector.extract_strided_slice %542 {offsets = [0, 0], sizes = [8, 239], strides = [1, 1]} : vector<8x256xf32> to vector<8x239xf32>
    %547 = tpu.concatenate %545, %546 in 1 : vector<8x17xf32>, vector<8x239xf32> -> vector<8x256xf32>
    %548 = vector.extract_strided_slice %2 {offsets = [0, 0], sizes = [1, 256], strides = [1, 1]} : vector<9x256xf32> to vector<1x256xf32>
    %549 = vector.broadcast %548 : vector<1x256xf32> to vector<8x256xf32>
    %550 = arith.mulf %547, %549 : vector<8x256xf32>
    %551 = vector.extract_strided_slice %542 {offsets = [0, 240], sizes = [8, 16], strides = [1, 1]} : vector<8x256xf32> to vector<8x16xf32>
    %552 = vector.extract_strided_slice %542 {offsets = [0, 0], sizes = [8, 240], strides = [1, 1]} : vector<8x256xf32> to vector<8x240xf32>
    %553 = tpu.concatenate %551, %552 in 1 : vector<8x16xf32>, vector<8x240xf32> -> vector<8x256xf32>
    %554 = vector.extract_strided_slice %2 {offsets = [1, 0], sizes = [1, 256], strides = [1, 1]} : vector<9x256xf32> to vector<1x256xf32>
    %555 = vector.broadcast %554 : vector<1x256xf32> to vector<8x256xf32>
    %556 = arith.mulf %553, %555 : vector<8x256xf32>
    %557 = vector.extract_strided_slice %542 {offsets = [0, 241], sizes = [8, 15], strides = [1, 1]} : vector<8x256xf32> to vector<8x15xf32>
    %558 = vector.extract_strided_slice %542 {offsets = [0, 0], sizes = [8, 241], strides = [1, 1]} : vector<8x256xf32> to vector<8x241xf32>
    %559 = tpu.concatenate %557, %558 in 1 : vector<8x15xf32>, vector<8x241xf32> -> vector<8x256xf32>
    %560 = vector.extract_strided_slice %2 {offsets = [2, 0], sizes = [1, 256], strides = [1, 1]} : vector<9x256xf32> to vector<1x256xf32>
    %561 = vector.broadcast %560 : vector<1x256xf32> to vector<8x256xf32>
    %562 = arith.mulf %559, %561 : vector<8x256xf32>
    %563 = vector.extract_strided_slice %542 {offsets = [0, 255], sizes = [8, 1], strides = [1, 1]} : vector<8x256xf32> to vector<8x1xf32>
    %564 = vector.extract_strided_slice %542 {offsets = [0, 0], sizes = [8, 255], strides = [1, 1]} : vector<8x256xf32> to vector<8x255xf32>
    %565 = tpu.concatenate %563, %564 in 1 : vector<8x1xf32>, vector<8x255xf32> -> vector<8x256xf32>
    %566 = vector.extract_strided_slice %2 {offsets = [3, 0], sizes = [1, 256], strides = [1, 1]} : vector<9x256xf32> to vector<1x256xf32>
    %567 = vector.broadcast %566 : vector<1x256xf32> to vector<8x256xf32>
    %568 = arith.mulf %565, %567 : vector<8x256xf32>
    %569 = vector.extract_strided_slice %542 {offsets = [0, 1], sizes = [8, 255], strides = [1, 1]} : vector<8x256xf32> to vector<8x255xf32>
    %570 = vector.extract_strided_slice %542 {offsets = [0, 0], sizes = [8, 1], strides = [1, 1]} : vector<8x256xf32> to vector<8x1xf32>
    %571 = tpu.concatenate %569, %570 in 1 : vector<8x255xf32>, vector<8x1xf32> -> vector<8x256xf32>
    %572 = vector.extract_strided_slice %2 {offsets = [5, 0], sizes = [1, 256], strides = [1, 1]} : vector<9x256xf32> to vector<1x256xf32>
    %573 = vector.broadcast %572 : vector<1x256xf32> to vector<8x256xf32>
    %574 = arith.mulf %571, %573 : vector<8x256xf32>
    %575 = vector.extract_strided_slice %542 {offsets = [0, 15], sizes = [8, 241], strides = [1, 1]} : vector<8x256xf32> to vector<8x241xf32>
    %576 = vector.extract_strided_slice %542 {offsets = [0, 0], sizes = [8, 15], strides = [1, 1]} : vector<8x256xf32> to vector<8x15xf32>
    %577 = tpu.concatenate %575, %576 in 1 : vector<8x241xf32>, vector<8x15xf32> -> vector<8x256xf32>
    %578 = vector.extract_strided_slice %2 {offsets = [6, 0], sizes = [1, 256], strides = [1, 1]} : vector<9x256xf32> to vector<1x256xf32>
    %579 = vector.broadcast %578 : vector<1x256xf32> to vector<8x256xf32>
    %580 = arith.mulf %577, %579 : vector<8x256xf32>
    %581 = vector.extract_strided_slice %542 {offsets = [0, 16], sizes = [8, 240], strides = [1, 1]} : vector<8x256xf32> to vector<8x240xf32>
    %582 = vector.extract_strided_slice %542 {offsets = [0, 0], sizes = [8, 16], strides = [1, 1]} : vector<8x256xf32> to vector<8x16xf32>
    %583 = tpu.concatenate %581, %582 in 1 : vector<8x240xf32>, vector<8x16xf32> -> vector<8x256xf32>
    %584 = vector.extract_strided_slice %2 {offsets = [7, 0], sizes = [1, 256], strides = [1, 1]} : vector<9x256xf32> to vector<1x256xf32>
    %585 = vector.broadcast %584 : vector<1x256xf32> to vector<8x256xf32>
    %586 = arith.mulf %583, %585 : vector<8x256xf32>
    %587 = vector.extract_strided_slice %542 {offsets = [0, 17], sizes = [8, 239], strides = [1, 1]} : vector<8x256xf32> to vector<8x239xf32>
    %588 = vector.extract_strided_slice %542 {offsets = [0, 0], sizes = [8, 17], strides = [1, 1]} : vector<8x256xf32> to vector<8x17xf32>
    %589 = tpu.concatenate %587, %588 in 1 : vector<8x239xf32>, vector<8x17xf32> -> vector<8x256xf32>
    %590 = vector.extract_strided_slice %2 {offsets = [8, 0], sizes = [1, 256], strides = [1, 1]} : vector<9x256xf32> to vector<1x256xf32>
    %591 = vector.broadcast %590 : vector<1x256xf32> to vector<8x256xf32>
    %592 = arith.mulf %589, %591 : vector<8x256xf32>
    %593 = tpu.concatenate %550, %556, %562, %568, %542, %574, %580, %586, %592 in 0 : vector<8x256xf32>, vector<8x256xf32>, vector<8x256xf32>, vector<8x256xf32>, vector<8x256xf32>, vector<8x256xf32>, vector<8x256xf32>, vector<8x256xf32>, vector<8x256xf32> -> vector<72x256xf32>
    %cst_68 = arith.constant dense<0.000000e+00> : vector<8x256xf32>
    %594 = tpu.matmul %543, %593, %cst_68 {dimension_numbers = #tpu.dot_dimension_numbers<[1], [0], [0], [1], [0, 0, 1, 1], [], []>} : vector<8x72xf32>, vector<72x256xf32>, vector<8x256xf32> -> vector<8x256xf32>
    %595 = vector.broadcast %544 : vector<8x1xf32> to vector<8x256xf32>
    %596 = arith.addf %594, %595 : vector<8x256xf32>
    %cst_69 = arith.constant 0.000000e+00 : f32
    %597 = vector.broadcast %cst_69 : f32 to vector<8x256xf32>
    %598 = arith.maximumf %596, %597 : vector<8x256xf32>
    %c160 = arith.constant 160 : index
    %c0_70 = arith.constant 0 : index
    %599 = vector.load %arg2[%c160, %c0_70] : memref<168x512xf32, #tpu.memory_space<vmem>>, vector<1x8xf32>
    %c160_71 = arith.constant 160 : index
    %c0_72 = arith.constant 0 : index
    %600 = vector.load %arg3[%c160_71, %c0_72] : memref<168x1xf32, #tpu.memory_space<vmem>>, vector<1x1xf32>
    %cst_73 = arith.constant dense<0.000000e+00> : vector<1x256xf32>
    %601 = tpu.matmul %599, %598, %cst_73 {dimension_numbers = #tpu.dot_dimension_numbers<[1], [0], [0], [1], [0, 0, 1, 1], [], []>} : vector<1x8xf32>, vector<8x256xf32>, vector<1x256xf32> -> vector<1x256xf32>
    %602 = vector.broadcast %600 : vector<1x1xf32> to vector<1x256xf32>
    %603 = arith.addf %601, %602 : vector<1x256xf32>
    %c0_74 = arith.constant 0 : index
    %c0_75 = arith.constant 0 : index
    %c0_76 = arith.constant 0 : index
    %604 = vector.load %arg11[%c0_74, %c0_75, %c0_76] : memref<1x1x256xf32, #tpu.memory_space<vmem>>, vector<1x1x256xf32>
    %605 = vector.shape_cast %604 : vector<1x1x256xf32> to vector<1x256xf32>
    %606 = vector.shape_cast %603 : vector<1x256xf32> to vector<1x1x256xf32>
    tpu.vector_store %arg11[%c0_74, %c0_75, %c0_76], %606 {strides = array<i32>} : memref<1x1x256xf32, #tpu.memory_space<vmem>>, vector<1x1x256xf32>,
    %c0_77 = arith.constant 0 : index
    %c0_78 = arith.constant 0 : index
    %c0_79 = arith.constant 0 : index
    %607 = vector.load %arg12[%c0_77, %c0_78, %c0_79] : memref<1x32x16xf32, #tpu.memory_space<vmem>>, vector<1x32x16xf32>
    %608 = vector.shape_cast %607 : vector<1x32x16xf32> to vector<32x16xf32>
    %609 = vector.shape_cast %368 : vector<32x16xf32> to vector<1x32x16xf32>
    tpu.vector_store %arg12[%c0_77, %c0_78, %c0_79], %609 {strides = array<i32>} : memref<1x32x16xf32, #tpu.memory_space<vmem>>, vector<1x32x16xf32>,
    return
  }
  func.func @transform_0(%arg0: i32) -> (i32, i32, i32) {
    %c0_i32 = arith.constant 0 : i32
    %c0_i32_0 = arith.constant 0 : i32
    %c0_i32_1 = arith.constant 0 : i32
    return %arg0, %c0_i32, %c0_i32_0 : i32, i32, i32
  }
  func.func @transform_1(%arg0: i32) -> (i32, i32) {
    %c0_i32 = arith.constant 0 : i32
    %c0_i32_0 = arith.constant 0 : i32
    %c0_i32_1 = arith.constant 0 : i32
    return %c0_i32, %c0_i32_0 : i32, i32
  }
  func.func @transform_2(%arg0: i32) -> (i32, i32) {
    %c0_i32 = arith.constant 0 : i32
    %c0_i32_0 = arith.constant 0 : i32
    %c0_i32_1 = arith.constant 0 : i32
    return %c0_i32, %c0_i32_0 : i32, i32
  }
  func.func @transform_3(%arg0: i32) -> (i32, i32) {
    %c0_i32 = arith.constant 0 : i32
    %c0_i32_0 = arith.constant 0 : i32
    %c0_i32_1 = arith.constant 0 : i32
    return %c0_i32, %c0_i32_0 : i32, i32
  }
  func.func @transform_4(%arg0: i32) -> (i32, i32) {
    %c0_i32 = arith.constant 0 : i32
    %c0_i32_0 = arith.constant 0 : i32
    %c0_i32_1 = arith.constant 0 : i32
    return %c0_i32, %c0_i32_0 : i32, i32
  }
  func.func @transform_5(%arg0: i32) -> (i32, i32) {
    %c0_i32 = arith.constant 0 : i32
    %c0_i32_0 = arith.constant 0 : i32
    %c0_i32_1 = arith.constant 0 : i32
    return %c0_i32, %c0_i32_0 : i32, i32
  }
  func.func @transform_6(%arg0: i32) -> (i32, i32) {
    %c0_i32 = arith.constant 0 : i32
    %c0_i32_0 = arith.constant 0 : i32
    %c0_i32_1 = arith.constant 0 : i32
    return %c0_i32, %c0_i32_0 : i32, i32
  }
  func.func @transform_7(%arg0: i32) -> (i32, i32) {
    %c0_i32 = arith.constant 0 : i32
    %c0_i32_0 = arith.constant 0 : i32
    %c0_i32_1 = arith.constant 0 : i32
    return %c0_i32, %c0_i32_0 : i32, i32
  }
  func.func @transform_8(%arg0: i32) -> (i32, i32) {
    %c0_i32 = arith.constant 0 : i32
    %c0_i32_0 = arith.constant 0 : i32
    %c0_i32_1 = arith.constant 0 : i32
    return %c0_i32, %c0_i32_0 : i32, i32
  }
  func.func @transform_9(%arg0: i32) -> (i32, i32) {
    %c0_i32 = arith.constant 0 : i32
    %c0_i32_0 = arith.constant 0 : i32
    %c0_i32_1 = arith.constant 0 : i32
    return %c0_i32, %c0_i32_0 : i32, i32
  }
  func.func @transform_10(%arg0: i32) -> (i32, i32, i32) {
    %c0_i32 = arith.constant 0 : i32
    %c0_i32_0 = arith.constant 0 : i32
    %c0_i32_1 = arith.constant 0 : i32
    return %arg0, %c0_i32, %c0_i32_0 : i32, i32, i32
  }
  func.func @transform_11(%arg0: i32) -> (i32, i32, i32) {
    %c0_i32 = arith.constant 0 : i32
    %c0_i32_0 = arith.constant 0 : i32
    %c0_i32_1 = arith.constant 0 : i32
    return %arg0, %c0_i32, %c0_i32_0 : i32, i32, i32
  }
}

</mosaic_0001>

<llo_original>
// kernel: tpu_custom_call.1
$region0: #{tpu_custom_call.1}
  #allocation0 [shape = 'u32[]', space=smem, size = 0x4, offset = 0x4, fixed_abs, tag = 'smem constant byte address 0x4 - core index']
  #allocation1 [shape = 'u32[144,128]{1,0:T(1,128)}', space=vmem, size = 0x12000, scoped, tag = 'internal scratch']
  %s0 = inlined_call_operand.hbm [shape: f32[8,256], index: 0, kind: input, shape index: {}]
  %s1 = inlined_call_operand.hbm [shape: f32[8,256], index: 1, kind: output, shape index: {}]
  %s2 = sld [smem:[#allocation0]]
  $region18: #{tpu_custom_call.1} parent=0
    _
  %s4 = ssub.s32 1, %s2
  %s5 = scalar_select 0, %s4, %s2
  $region1: #{tpu_custom_call.1} parent=0
    #allocation2 [shape = 'u8[8192]{0}', space=vmem, size = 0x2000, scoped, tag = 'input window, operand 0, single buffered']
    #allocation3 [shape = 's32[1]{0}', space=sflag, size = 0x4, scoped, tag = 'scoped memory for tpu_custom_call.1']
    #allocation4 [shape = 's32[1]{0}', space=sflag, size = 0x4, scoped, tag = 'scoped memory for tpu_custom_call.1']
    #allocation5 [shape = 'u8[8192]{0}', space=vmem, size = 0x2000, scoped, tag = 'output window, operand 0, single buffered']
    %6 = vsyncpa [#allocation3], 0
    %7 = vsyncpa [#allocation4], 0
    // Predicated region
    $region2: #{tpu_custom_call.1} parent=1 // pred_check
      _
    $region3: #{tpu_custom_call.1} parent=1 // pred_check_branch
      %9 = sbr.rel (0) target = $region5
    $region4: #{tpu_custom_call.1} parent=1 // pred_region
      %s11 = ssub.s32 256, 256
      %12 = vsyncadd [#allocation3], %s11
      %s14 = sshll.u32 [#allocation2], 4
      %s15 = int_to_ptr.vmem [resolvable:$true] %s14
      %17 = dma.hbm_to_vmem [thread:$0]  %s0, 256, %s15, [#allocation3]
    $region5: #{tpu_custom_call.1} parent=1 // pred_fallthru
      _
    // Predicated region
    $region6: #{tpu_custom_call.1} parent=1 // pred_check
      _
    $region7: #{tpu_custom_call.1} parent=1 // pred_check_branch
      %19 = sbr.rel (0) target = $region9
    $region8: #{tpu_custom_call.1} parent=1 // pred_region
      %20 = dma.done [#allocation3], 256
    $region9: #{tpu_custom_call.1} parent=1 // pred_fallthru
      _
    %v21 = vld [vmem:[#allocation2] sm:$0xff]
    %v22 = vld [vmem:[#allocation2 + $0x8] sm:$0xff]
    %23 = vrot.lane.b32.xlu0 %v21, 5
    %v24 = vpop.permute.xlu0 %23
    %25 = vrot.lane.b32.xlu0 %v22, 5
    %v26 = vpop.permute.xlu0 %25
    %v27 = vlaneseq
    %v28 = vand.u32 %v27, 127
    %vm29 = vcmp.lt.s32.totalorder %v28, 5
    %v30 = vsel %vm29, %v24, %v26
    %v31 = vsel %vm29, %v26, %v24
    %32 = vst [vmem:[#allocation5] sm:$0xff] %v31
    %33 = vst [vmem:[#allocation5 + $0x8] sm:$0xff] %v30
    // Predicated region
    $region10: #{tpu_custom_call.1} parent=1 // pred_check
      _
    $region11: #{tpu_custom_call.1} parent=1 // pred_check_branch
      %35 = sbr.rel (0) target = $region13
    $region12: #{tpu_custom_call.1} parent=1 // pred_region
      %s37 = ssub.s32 256, 256
      %38 = vsyncadd [#allocation4], %s37
      %s40 = sshll.u32 [#allocation5], 4
      %s41 = int_to_ptr.vmem [resolvable:$true] %s40
      %43 = dma.vmem_to_hbm [thread:$0]  %s41, 256, %s1, [#allocation4]
    $region13: #{tpu_custom_call.1} parent=1 // pred_fallthru
      _
    // Predicated region
    $region14: #{tpu_custom_call.1} parent=1 // pred_check
      _
    $region15: #{tpu_custom_call.1} parent=1 // pred_check_branch
      %45 = sbr.rel (0) target = $region17
    $region16: #{tpu_custom_call.1} parent=1 // pred_region
      %46 = dma.done [#allocation4], 256
    $region17: #{tpu_custom_call.1} parent=1 // pred_fallthru
      _
    %47 = vsyncpa [#allocation3], 1
    %48 = vsyncpa [#allocation4], 1

// kernel: unetc_forward_pallas.1
$region0: #{unetc_forward_pallas.1}
  #allocation0 [shape = 'u32[]', space=smem, size = 0x4, offset = 0x4, fixed_abs, tag = 'smem constant byte address 0x4 - core index']
  #allocation1 [shape = 'u32[144,128]{1,0:T(1,128)}', space=vmem, size = 0x12000, scoped, tag = 'internal scratch']
  %s0 = inlined_call_operand.vmem [shape: f32[2,8,256], index: 0, kind: input, shape index: {}]
  %s1 = inlined_call_operand.vmem [shape: f32[168,512], index: 1, kind: input, shape index: {}]
  %s2 = inlined_call_operand.vmem [shape: f32[168,1], index: 2, kind: input, shape index: {}]
  %s3 = inlined_call_operand.vmem [shape: f32[9,256], index: 3, kind: input, shape index: {}]
  %s4 = inlined_call_operand.vmem [shape: f32[9,64], index: 4, kind: input, shape index: {}]
  %s5 = inlined_call_operand.vmem [shape: f32[9,16], index: 5, kind: input, shape index: {}]
  %s6 = inlined_call_operand.vmem [shape: f32[256,64], index: 6, kind: input, shape index: {}]
  %s7 = inlined_call_operand.vmem [shape: f32[64,16], index: 7, kind: input, shape index: {}]
  %s8 = inlined_call_operand.vmem [shape: f32[16,64], index: 8, kind: input, shape index: {}]
  %s9 = inlined_call_operand.vmem [shape: f32[64,256], index: 9, kind: input, shape index: {}]
  %s10 = inlined_call_operand.vmem [shape: f32[2,1,256], index: 10, kind: output, shape index: {0}]
  %s11 = inlined_call_operand.vmem [shape: f32[2,32,16], index: 11, kind: output, shape index: {1}]
  %12 = xla_tuple %s10, %s11
  %s13 = sld [smem:[#allocation0]]
  $region81: #{unetc_forward_pallas.1} parent=0
    _
  %s15 = ssub.s32 1, %s13
  %s16 = scalar_select 0, %s15, %s13
  loop: start=0, step=1, limit=4
  $region2: #{unetc_forward_pallas.1} parent=0 // loop_pre_header
    _
  $region3: #{unetc_forward_pallas.1} parent=0 // loop_header
    %s18 = sphi 0, %s22
    %p19 = scmp.ge.s32.totalorder %s18, 4
    %s28 = sphi 0, %s30
    %s31 = sphi 0, %s28
    %s32 = sphi 0, %s31
    %s48 = sphi 0, %s32
    %s52 = sphi 0, %s52
    %s54 = sphi 0, %s52
    %s55 = sphi 0, %s54
    %s69 = sphi 0, %s55
    %s73 = sphi 0, %s73
    %s75 = sphi 0, %s73
    %s76 = sphi 0, %s75
    %s90 = sphi 0, %s76
    %s94 = sphi 0, %s94
    %s96 = sphi 0, %s94
    %s97 = sphi 0, %s96
    %s111 = sphi 0, %s97
    %s115 = sphi 0, %s115
    %s117 = sphi 0, %s115
    %s118 = sphi 0, %s117
    %s132 = sphi 0, %s118
    %s136 = sphi 0, %s136
    %s138 = sphi 0, %s136
    %s139 = sphi 0, %s138
    %s153 = sphi 0, %s139
    %s157 = sphi 0, %s157
    %s159 = sphi 0, %s157
    %s160 = sphi 0, %s159
    %s174 = sphi 0, %s160
    %s178 = sphi 0, %s178
    %s180 = sphi 0, %s178
    %s181 = sphi 0, %s180
    %s195 = sphi 0, %s181
    %s199 = sphi 0, %s199
    %s201 = sphi 0, %s199
    %s202 = sphi 0, %s201
    %s216 = sphi 0, %s202
    %s220 = sphi 0, %s220
    %s222 = sphi 0, %s220
    %s223 = sphi 0, %s222
    %s237 = sphi 0, %s223
    %s243 = sphi 0, %s245
    %s246 = sphi 0, %s243
    %s247 = sphi 0, %s246
    %s263 = sphi 0, %s247
    %s269 = sphi 0, %s271
    %s272 = sphi 0, %s269
    %s273 = sphi 0, %s272
    %s289 = sphi 0, %s273
  $region4: #{unetc_forward_pallas.1} parent=0 // loop_header_branch
    %21 = sbr.rel (%p19) target = $region8
  $region5: #{unetc_forward_pallas.1} parent=0 // loop_body
    %s23 = ssub.s32 %s18, 1
    %s24 = ssub.s32 %s18, 2
    %s25 = sadd.s32 %s18, 1
    %s26 = ssub.s32 %s18, %s25
    %p27 = scmp.eq.s32.totalorder %s26, 0
    %s29 = sadd.s32 %s28, 1
    %s30 = scalar_select %p27, %s28, %s29
    %p33 = pneg %p27
    %p34 = scmp.eq.s32.totalorder %s18, 1
    %p35 = por %p33, %p34
    %p36 = scmp.ne.s32.totalorder %s28, %s31
    %p37 = scmp.eq.s32.totalorder %s18, 0
    %p38 = por %p36, %p37
    %p39 = scmp.ne.s32.totalorder %s28, %s31
    %p40 = scmp.eq.s32.totalorder %s23, 1
    %p41 = por %p39, %p40
    %p42 = scmp.ne.s32.totalorder %s31, %s32
    %p43 = scmp.eq.s32.totalorder %s23, 0
    %p44 = por %p42, %p43
    %p45 = scmp.ne.s32.totalorder %s31, %s32
    %p46 = scmp.eq.s32.totalorder %s24, 1
    %p47 = por %p45, %p46
    %p49 = scmp.ne.s32.totalorder %s32, %s48
    %p50 = scmp.eq.s32.totalorder %s24, 0
    %p51 = por %p49, %p50
    %s53 = sadd.s32 %s52, 1
    %p56 = scmp.eq.s32.totalorder %s18, 1
    %p57 = scmp.ne.s32.totalorder %s52, %s54
    %p58 = scmp.eq.s32.totalorder %s18, 0
    %p59 = por %p57, %p58
    %p60 = scmp.ne.s32.totalorder %s52, %s54
    %p61 = scmp.eq.s32.totalorder %s23, 1
    %p62 = por %p60, %p61
    %p63 = scmp.ne.s32.totalorder %s54, %s55
    %p64 = scmp.eq.s32.totalorder %s23, 0
    %p65 = por %p63, %p64
    %p66 = scmp.ne.s32.totalorder %s54, %s55
    %p67 = scmp.eq.s32.totalorder %s24, 1
    %p68 = por %p66, %p67
    %p70 = scmp.ne.s32.totalorder %s55, %s69
    %p71 = scmp.eq.s32.totalorder %s24, 0
    %p72 = por %p70, %p71
    %s74 = sadd.s32 %s73, 1
    %p77 = scmp.eq.s32.totalorder %s18, 1
    %p78 = scmp.ne.s32.totalorder %s73, %s75
    %p79 = scmp.eq.s32.totalorder %s18, 0
    %p80 = por %p78, %p79
    %p81 = scmp.ne.s32.totalorder %s73, %s75
    %p82 = scmp.eq.s32.totalorder %s23, 1
    %p83 = por %p81, %p82
    %p84 = scmp.ne.s32.totalorder %s75, %s76
    %p85 = scmp.eq.s32.totalorder %s23, 0
    %p86 = por %p84, %p85
    %p87 = scmp.ne.s32.totalorder %s75, %s76
    %p88 = scmp.eq.s32.totalorder %s24, 1
    %p89 = por %p87, %p88
    %p91 = scmp.ne.s32.totalorder %s76, %s90
    %p92 = scmp.eq.s32.totalorder %s24, 0
    %p93 = por %p91, %p92
    %s95 = sadd.s32 %s94, 1
    %p98 = scmp.eq.s32.totalorder %s18, 1
    %p99 = scmp.ne.s32.totalorder %s94, %s96
    %p100 = scmp.eq.s32.totalorder %s18, 0
    %p101 = por %p99, %p100
    %p102 = scmp.ne.s32.totalorder %s94, %s96
    %p103 = scmp.eq.s32.totalorder %s23, 1
    %p104 = por %p102, %p103
    %p105 = scmp.ne.s32.totalorder %s96, %s97
    %p106 = scmp.eq.s32.totalorder %s23, 0
    %p107 = por %p105, %p106
    %p108 = scmp.ne.s32.totalorder %s96, %s97
    %p109 = scmp.eq.s32.totalorder %s24, 1
    %p110 = por %p108, %p109
    %p112 = scmp.ne.s32.totalorder %s97, %s111
    %p113 = scmp.eq.s32.totalorder %s24, 0
    %p114 = por %p112, %p113
    %s116 = sadd.s32 %s115, 1
    %p119 = scmp.eq.s32.totalorder %s18, 1
    %p120 = scmp.ne.s32.totalorder %s115, %s117
    %p121 = scmp.eq.s32.totalorder %s18, 0
    %p122 = por %p120, %p121
    %p123 = scmp.ne.s32.totalorder %s115, %s117
    %p124 = scmp.eq.s32.totalorder %s23, 1
    %p125 = por %p123, %p124
    %p126 = scmp.ne.s32.totalorder %s117, %s118
    %p127 = scmp.eq.s32.totalorder %s23, 0
    %p128 = por %p126, %p127
    %p129 = scmp.ne.s32.totalorder %s117, %s118
    %p130 = scmp.eq.s32.totalorder %s24, 1
    %p131 = por %p129, %p130
    %p133 = scmp.ne.s32.totalorder %s118, %s132
    %p134 = scmp.eq.s32.totalorder %s24, 0
    %p135 = por %p133, %p134
    %s137 = sadd.s32 %s136, 1
    %p140 = scmp.eq.s32.totalorder %s18, 1
    %p141 = scmp.ne.s32.totalorder %s136, %s138
    %p142 = scmp.eq.s32.totalorder %s18, 0
    %p143 = por %p141, %p142
    %p144 = scmp.ne.s32.totalorder %s136, %s138
    %p145 = scmp.eq.s32.totalorder %s23, 1
    %p146 = por %p144, %p145
    %p147 = scmp.ne.s32.totalorder %s138, %s139
    %p148 = scmp.eq.s32.totalorder %s23, 0
    %p149 = por %p147, %p148
    %p150 = scmp.ne.s32.totalorder %s138, %s139
    %p151 = scmp.eq.s32.totalorder %s24, 1
    %p152 = por %p150, %p151
    %p154 = scmp.ne.s32.totalorder %s139, %s153
    %p155 = scmp.eq.s32.totalorder %s24, 0
    %p156 = por %p154, %p155
    %s158 = sadd.s32 %s157, 1
    %p161 = scmp.eq.s32.totalorder %s18, 1
    %p162 = scmp.ne.s32.totalorder %s157, %s159
    %p163 = scmp.eq.s32.totalorder %s18, 0
    %p164 = por %p162, %p163
    %p165 = scmp.ne.s32.totalorder %s157, %s159
    %p166 = scmp.eq.s32.totalorder %s23, 1
    %p167 = por %p165, %p166
    %p168 = scmp.ne.s32.totalorder %s159, %s160
    %p169 = scmp.eq.s32.totalorder %s23, 0
    %p170 = por %p168, %p169
    %p171 = scmp.ne.s32.totalorder %s159, %s160
    %p172 = scmp.eq.s32.totalorder %s24, 1
    %p173 = por %p171, %p172
    %p175 = scmp.ne.s32.totalorder %s160, %s174
    %p176 = scmp.eq.s32.totalorder %s24, 0
    %p177 = por %p175, %p176
    %s179 = sadd.s32 %s178, 1
    %p182 = scmp.eq.s32.totalorder %s18, 1
    %p183 = scmp.ne.s32.totalorder %s178, %s180
    %p184 = scmp.eq.s32.totalorder %s18, 0
    %p185 = por %p183, %p184
    %p186 = scmp.ne.s32.totalorder %s178, %s180
    %p187 = scmp.eq.s32.totalorder %s23, 1
    %p188 = por %p186, %p187
    %p189 = scmp.ne.s32.totalorder %s180, %s181
    %p190 = scmp.eq.s32.totalorder %s23, 0
    %p191 = por %p189, %p190
    %p192 = scmp.ne.s32.totalorder %s180, %s181
    %p193 = scmp.eq.s32.totalorder %s24, 1
    %p194 = por %p192, %p193
    %p196 = scmp.ne.s32.totalorder %s181, %s195
    %p197 = scmp.eq.s32.totalorder %s24, 0
    %p198 = por %p196, %p197
    %s200 = sadd.s32 %s199, 1
    %p203 = scmp.eq.s32.totalorder %s18, 1
    %p204 = scmp.ne.s32.totalorder %s199, %s201
    %p205 = scmp.eq.s32.totalorder %s18, 0
    %p206 = por %p204, %p205
    %p207 = scmp.ne.s32.totalorder %s199, %s201
    %p208 = scmp.eq.s32.totalorder %s23, 1
    %p209 = por %p207, %p208
    %p210 = scmp.ne.s32.totalorder %s201, %s202
    %p211 = scmp.eq.s32.totalorder %s23, 0
    %p212 = por %p210, %p211
    %p213 = scmp.ne.s32.totalorder %s201, %s202
    %p214 = scmp.eq.s32.totalorder %s24, 1
    %p215 = por %p213, %p214
    %p217 = scmp.ne.s32.totalorder %s202, %s216
    %p218 = scmp.eq.s32.totalorder %s24, 0
    %p219 = por %p217, %p218
    %s221 = sadd.s32 %s220, 1
    %p224 = scmp.eq.s32.totalorder %s18, 1
    %p225 = scmp.ne.s32.totalorder %s220, %s222
    %p226 = scmp.eq.s32.totalorder %s18, 0
    %p227 = por %p225, %p226
    %p228 = scmp.ne.s32.totalorder %s220, %s222
    %p229 = scmp.eq.s32.totalorder %s23, 1
    %p230 = por %p228, %p229
    %p231 = scmp.ne.s32.totalorder %s222, %s223
    %p232 = scmp.eq.s32.totalorder %s23, 0
    %p233 = por %p231, %p232
    %p234 = scmp.ne.s32.totalorder %s222, %s223
    %p235 = scmp.eq.s32.totalorder %s24, 1
    %p236 = por %p234, %p235
    %p238 = scmp.ne.s32.totalorder %s223, %s237
    %p239 = scmp.eq.s32.totalorder %s24, 0
    %p240 = por %p238, %p239
    %s241 = ssub.s32 %s18, %s25
    %p242 = scmp.eq.s32.totalorder %s241, 0
    %s244 = sadd.s32 %s243, 1
    %s245 = scalar_select %p242, %s243, %s244
    %p248 = pneg %p242
    %p249 = scmp.eq.s32.totalorder %s18, 1
    %p250 = por %p248, %p249
    %p251 = scmp.ne.s32.totalorder %s243, %s246
    %p252 = scmp.eq.s32.totalorder %s18, 0
    %p253 = por %p251, %p252
    %p254 = scmp.ne.s32.totalorder %s243, %s246
    %p255 = scmp.eq.s32.totalorder %s23, 1
    %p256 = por %p254, %p255
    %p257 = scmp.ne.s32.totalorder %s246, %s247
    %p258 = scmp.eq.s32.totalorder %s23, 0
    %p259 = por %p257, %p258
    %p260 = scmp.ne.s32.totalorder %s246, %s247
    %p261 = scmp.eq.s32.totalorder %s24, 1
    %p262 = por %p260, %p261
    %p264 = scmp.ne.s32.totalorder %s247, %s263
    %p265 = scmp.eq.s32.totalorder %s24, 0
    %p266 = por %p264, %p265
    %s267 = ssub.s32 %s18, %s25
    %p268 = scmp.eq.s32.totalorder %s267, 0
    %s270 = sadd.s32 %s269, 1
    %s271 = scalar_select %p268, %s269, %s270
    %p274 = pneg %p268
    %p275 = scmp.eq.s32.totalorder %s18, 1
    %p276 = por %p274, %p275
    %p277 = scmp.ne.s32.totalorder %s269, %s272
    %p278 = scmp.eq.s32.totalorder %s18, 0
    %p279 = por %p277, %p278
    %p280 = scmp.ne.s32.totalorder %s269, %s272
    %p281 = scmp.eq.s32.totalorder %s23, 1
    %p282 = por %p280, %p281
    %p283 = scmp.ne.s32.totalorder %s272, %s273
    %p284 = scmp.eq.s32.totalorder %s23, 0
    %p285 = por %p283, %p284
    %p286 = scmp.ne.s32.totalorder %s272, %s273
    %p287 = scmp.eq.s32.totalorder %s24, 1
    %p288 = por %p286, %p287
    %p290 = scmp.ne.s32.totalorder %s273, %s289
    %p291 = scmp.eq.s32.totalorder %s24, 0
    %p292 = por %p290, %p291
    %p293 = scmp.le.s32.totalorder 1, %s18
    %p294 = scmp.lt.s32.totalorder %s18, 3
    %p295 = pnand %p293, %p294
    %p296 = pneg %p295
    // Predicated region
    $region9: #{unetc_forward_pallas.1} parent=5 // pred_check
      _
    $region10: #{unetc_forward_pallas.1} parent=5 // pred_check_branch
      %298 = sbr.rel (%p295) target = $region12
    $region11: #{unetc_forward_pallas.1} parent=5 // pred_region
      %s299 = ssub.s32 %s18, 1
      // Predicated region
      $region13: #{unetc_forward_pallas.1} parent=11 // pred_check
        %p300 = pneg %p65
      $region14: #{unetc_forward_pallas.1} parent=11 // pred_check_branch
        %302 = sbr.rel (%p300) target = $region16
      $region15: #{unetc_forward_pallas.1} parent=11 // pred_region
        _
      $region16: #{unetc_forward_pallas.1} parent=11 // pred_fallthru
        _
      // Predicated region
      $region17: #{unetc_forward_pallas.1} parent=11 // pred_check
        %p303 = pneg %p86
      $region18: #{unetc_forward_pallas.1} parent=11 // pred_check_branch
        %305 = sbr.rel (%p303) target = $region20
      $region19: #{unetc_forward_pallas.1} parent=11 // pred_region
        _
      $region20: #{unetc_forward_pallas.1} parent=11 // pred_fallthru
        _
      // Predicated region
      $region21: #{unetc_forward_pallas.1} parent=11 // pred_check
        %p306 = pneg %p107
      $region22: #{unetc_forward_pallas.1} parent=11 // pred_check_branch
        %308 = sbr.rel (%p306) target = $region24
      $region23: #{unetc_forward_pallas.1} parent=11 // pred_region
        _
      $region24: #{unetc_forward_pallas.1} parent=11 // pred_fallthru
        _
      // Predicated region
      $region25: #{unetc_forward_pallas.1} parent=11 // pred_check
        %p309 = pneg %p128
      $region26: #{unetc_forward_pallas.1} parent=11 // pred_check_branch
        %311 = sbr.rel (%p309) target = $region28
      $region27: #{unetc_forward_pallas.1} parent=11 // pred_region
        _
      $region28: #{unetc_forward_pallas.1} parent=11 // pred_fallthru
        _
      // Predicated region
      $region29: #{unetc_forward_pallas.1} parent=11 // pred_check
        %p312 = pneg %p149
      $region30: #{unetc_forward_pallas.1} parent=11 // pred_check_branch
        %314 = sbr.rel (%p312) target = $region32
      $region31: #{unetc_forward_pallas.1} parent=11 // pred_region
        _
      $region32: #{unetc_forward_pallas.1} parent=11 // pred_fallthru
        _
      // Predicated region
      $region33: #{unetc_forward_pallas.1} parent=11 // pred_check
        %p315 = pneg %p170
      $region34: #{unetc_forward_pallas.1} parent=11 // pred_check_branch
        %317 = sbr.rel (%p315) target = $region36
      $region35: #{unetc_forward_pallas.1} parent=11 // pred_region
        _
      $region36: #{unetc_forward_pallas.1} parent=11 // pred_fallthru
        _
      // Predicated region
      $region37: #{unetc_forward_pallas.1} parent=11 // pred_check
        %p318 = pneg %p191
      $region38: #{unetc_forward_pallas.1} parent=11 // pred_check_branch
        %320 = sbr.rel (%p318) target = $region40
      $region39: #{unetc_forward_pallas.1} parent=11 // pred_region
        _
      $region40: #{unetc_forward_pallas.1} parent=11 // pred_fallthru
        _
      // Predicated region
      $region41: #{unetc_forward_pallas.1} parent=11 // pred_check
        %p321 = pneg %p212
      $region42: #{unetc_forward_pallas.1} parent=11 // pred_check_branch
        %323 = sbr.rel (%p321) target = $region44
      $region43: #{unetc_forward_pallas.1} parent=11 // pred_region
        _
      $region44: #{unetc_forward_pallas.1} parent=11 // pred_fallthru
        _
      // Predicated region
      $region45: #{unetc_forward_pallas.1} parent=11 // pred_check
        %p324 = pneg %p233
      $region46: #{unetc_forward_pallas.1} parent=11 // pred_check_branch
        %326 = sbr.rel (%p324) target = $region48
      $region47: #{unetc_forward_pallas.1} parent=11 // pred_region
        _
      $region48: #{unetc_forward_pallas.1} parent=11 // pred_fallthru
        _
    $region12: #{unetc_forward_pallas.1} parent=5 // pred_fallthru
      _
    %p327 = scmp.lt.s32.totalorder %s18, 2
    // Predicated region
    $region49: #{unetc_forward_pallas.1} parent=5 // pred_check
      %p328 = pneg %p327
    $region50: #{unetc_forward_pallas.1} parent=5 // pred_check_branch
      %330 = sbr.rel (%p328) target = $region52
    $region51: #{unetc_forward_pallas.1} parent=5 // pred_region
      // Predicated region
      $region53: #{unetc_forward_pallas.1} parent=51 // pred_check
        %p331 = pneg %p38
      $region54: #{unetc_forward_pallas.1} parent=51 // pred_check_branch
        %333 = sbr.rel (%p331) target = $region56
      $region55: #{unetc_forward_pallas.1} parent=51 // pred_region
        %p334 = scmp.lt.s32.totalorder %s18, 1
        %s335 = scalar_select %p334, %s18, 1
        %s336 = smul.addr %s335, 2
        %s337 = smul.addr %s336, 8
        %s338 = scalar_lea.vmem %s0, %s337
      $region56: #{unetc_forward_pallas.1} parent=51 // pred_fallthru
        _
    $region52: #{unetc_forward_pallas.1} parent=5 // pred_fallthru
      _
    %p339 = scmp.le.s32.totalorder 1, %s18
    %p340 = scmp.lt.s32.totalorder %s18, 3
    %p341 = pnand %p339, %p340
    %p342 = pneg %p341
    // Predicated region
    $region57: #{unetc_forward_pallas.1} parent=5 // pred_check
      _
    $region58: #{unetc_forward_pallas.1} parent=5 // pred_check_branch
      %344 = sbr.rel (%p341) target = $region60
    $region59: #{unetc_forward_pallas.1} parent=5 // pred_region
      %s345 = ssub.s32 %s18, 1
      %p346 = scmp.lt.s32.totalorder %s23, 1
      %s347 = scalar_select %p346, %s23, 1
      %s348 = smul.addr %s347, 2
      %s349 = smul.addr %s348, 8
      %s350 = scalar_lea.vmem %s0, %s349
      %p351 = pneg %p44
      %p352 = pneg %p41
      %p353 = pneg %p65
      %p354 = pneg %p62
      %p355 = pneg %p86
      %p356 = pneg %p83
      %p357 = pneg %p107
      %p358 = pneg %p104
      %p359 = pneg %p128
      %p360 = pneg %p125
      %p361 = pneg %p149
      %p362 = pneg %p146
      %p363 = pneg %p170
      %p364 = pneg %p167
      %p365 = pneg %p191
      %p366 = pneg %p188
      %p367 = pneg %p212
      %p368 = pneg %p209
      %p369 = pneg %p233
      %p370 = pneg %p230
      %p371 = pneg %p259
      %p372 = pneg %p256
      %p373 = scmp.lt.s32.totalorder %s23, 1
      %s374 = scalar_select %p373, %s23, 1
      %s375 = smul.addr %s374, 2
      %s376 = scalar_lea.vmem %s10, %s375
      %p377 = pneg %p285
      %p378 = pneg %p282
      %p379 = scmp.lt.s32.totalorder %s23, 1
      %s380 = scalar_select %p379, %s23, 1
      %s381 = smul.addr %s380, 4
      %s382 = smul.addr %s381, 8
      %s383 = scalar_lea.vmem %s11, %s382
      %p384 = scmp.lt.s32.totalorder %s23, 1
      %s385 = scalar_select %p384, %s23, 1
      %s386 = smul.addr %s385, 2
      %s387 = smul.addr %s386, 8
      %s388 = scalar_lea.vmem %s0, %s387
      %p389 = scmp.lt.s32.totalorder %s23, 1
      %s390 = scalar_select %p389, %s23, 1
      %s391 = smul.addr %s390, 2
      %s392 = scalar_lea.vmem %s10, %s391
      %p393 = scmp.lt.s32.totalorder %s23, 1
      %s394 = scalar_select %p393, %s23, 1
      %s395 = smul.addr %s394, 4
      %s396 = smul.addr %s395, 8
      %s397 = scalar_lea.vmem %s11, %s396
      %v398 = vld [vmem:[%s388] sm:$0xff]
      %v399 = vld [vmem:[%s388 + $0x8] sm:$0xff]
      %v400 = vld [vmem:[%s3] sm:$0xff]
      %v401 = vld [vmem:[%s3 + $0x8] sm:$0xff]
      %v402 = vld [vmem:[%s3 + $0x10] sm:$0x1]
      %v403 = vld [vmem:[%s3 + $0x18] sm:$0x1]
      %v404 = vld [vmem:[%s4] sm:$0xff]
      %v405 = vld [vmem:[%s4 + $0x8] sm:$0x1]
      %v406 = vld [vmem:[%s5] sm:$0xff]
      %v407 = vld [vmem:[%s5 + $0x8] sm:$0x1]
      %v408 = vld [vmem:[%s1] sm:$0xff]
      %v409 = vld [vmem:[%s2] sm:$0xff]
      %411 = vrot.lane.b32.xlu0 %v399, 17
      %v412 = vpop.permute.xlu0 %411
      %415 = vrot.lane.b32.xlu0 %v398, 17
      %v416 = vpop.permute.xlu0 %415
      %vm417 = vcmask 138240
      %v418 = vsel %vm417, %v416, %v412
      %v421 = vsel %vm417, %v412, %v416
      %v422 = vlaneseq
      %v423 = vshrl.u32 %v422, 7
      %v424 = vsub.s32 0, %v423
      %v425 = vrot.slane %v400, %v424
      %v426 = vlaneseq
      %v427 = vshrl.u32 %v426, 7
      %v428 = vsub.s32 0, %v427
      %v429 = vrot.slane %v401, %v428
      %v430 = vmul.f32 %v421, %v425
      %v431 = vmul.f32 %v418, %v429
      %432 = vrot.lane.b32.xlu0 %v399, 16
      %v433 = vpop.permute.xlu0 %432
      %435 = vrot.lane.b32.xlu0 %v398, 16
      %v436 = vpop.permute.xlu0 %435
      %vm437 = vcmask 130048
      %v438 = vsel %vm437, %v436, %v433
      %v441 = vsel %vm437, %v433, %v436
      %v442 = vlaneseq
      %v443 = vshrl.u32 %v442, 7
      %v444 = vsub.s32 1, %v443
      %v445 = vrot.slane %v400, %v444
      %v446 = vlaneseq
      %v447 = vshrl.u32 %v446, 7
      %v448 = vsub.s32 1, %v447
      %v449 = vrot.slane %v401, %v448
      %v450 = vmul.f32 %v441, %v445
      %v451 = vmul.f32 %v438, %v449
      %452 = vrot.lane.b32.xlu0 %v399, 15
      %v453 = vpop.permute.xlu0 %452
      %455 = vrot.lane.b32.xlu0 %v398, 15
      %v456 = vpop.permute.xlu0 %455
      %vm457 = vcmask 121856
      %v458 = vsel %vm457, %v456, %v453
      %v461 = vsel %vm457, %v453, %v456
      %v462 = vlaneseq
      %v463 = vshrl.u32 %v462, 7
      %v464 = vsub.s32 2, %v463
      %v465 = vrot.slane %v400, %v464
      %v466 = vlaneseq
      %v467 = vshrl.u32 %v466, 7
      %v468 = vsub.s32 2, %v467
      %v469 = vrot.slane %v401, %v468
      %v470 = vmul.f32 %v461, %v465
      %v471 = vmul.f32 %v458, %v469
      %472 = vrot.lane.b32.xlu0 %v399, 1
      %v473 = vpop.permute.xlu0 %472
      %475 = vrot.lane.b32.xlu0 %v398, 1
      %v476 = vpop.permute.xlu0 %475
      %vm477 = vcmask 7168
      %v478 = vsel %vm477, %v476, %v473
      %v481 = vsel %vm477, %v473, %v476
      %v482 = vlaneseq
      %v483 = vshrl.u32 %v482, 7
      %v484 = vsub.s32 3, %v483
      %v485 = vrot.slane %v400, %v484
      %v486 = vlaneseq
      %v487 = vshrl.u32 %v486, 7
      %v488 = vsub.s32 3, %v487
      %v489 = vrot.slane %v401, %v488
      %v490 = vmul.f32 %v481, %v485
      %v491 = vmul.f32 %v478, %v489
      %492 = vrot.lane.b32.xlu0 %v398, 127
      %v493 = vpop.permute.xlu0 %492
      %494 = vrot.lane.b32.xlu0 %v399, 127
      %v495 = vpop.permute.xlu0 %494
      %vm496 = vcmask 1039360
      %v497 = vsel %vm496, %v493, %v495
      %v501 = vsel %vm496, %v495, %v493
      %v502 = vlaneseq
      %v503 = vshrl.u32 %v502, 7
      %v504 = vsub.s32 5, %v503
      %v505 = vrot.slane %v400, %v504
      %v506 = vlaneseq
      %v507 = vshrl.u32 %v506, 7
      %v508 = vsub.s32 5, %v507
      %v509 = vrot.slane %v401, %v508
      %v510 = vmul.f32 %v497, %v505
      %v511 = vmul.f32 %v501, %v509
      %512 = vrot.lane.b32.xlu0 %v398, 113
      %v513 = vpop.permute.xlu0 %512
      %514 = vrot.lane.b32.xlu0 %v399, 113
      %v515 = vpop.permute.xlu0 %514
      %vm516 = vcmask 924672
      %v517 = vsel %vm516, %v513, %v515
      %v521 = vsel %vm516, %v515, %v513
      %v522 = vlaneseq
      %v523 = vshrl.u32 %v522, 7
      %v524 = vsub.s32 6, %v523
      %v525 = vrot.slane %v400, %v524
      %v526 = vlaneseq
      %v527 = vshrl.u32 %v526, 7
      %v528 = vsub.s32 6, %v527
      %v529 = vrot.slane %v401, %v528
      %v530 = vmul.f32 %v517, %v525
      %v531 = vmul.f32 %v521, %v529
      %532 = vrot.lane.b32.xlu0 %v398, 112
      %v533 = vpop.permute.xlu0 %532
      %534 = vrot.lane.b32.xlu0 %v399, 112
      %v535 = vpop.permute.xlu0 %534
      %vm536 = vcmask 916480
      %v537 = vsel %vm536, %v533, %v535
      %v541 = vsel %vm536, %v535, %v533
      %v542 = vlaneseq
      %v543 = vshrl.u32 %v542, 7
      %v544 = vsub.s32 7, %v543
      %v545 = vrot.slane %v400, %v544
      %v546 = vlaneseq
      %v547 = vshrl.u32 %v546, 7
      %v548 = vsub.s32 7, %v547
      %v549 = vrot.slane %v401, %v548
      %v550 = vmul.f32 %v537, %v545
      %v551 = vmul.f32 %v541, %v549
      %552 = vrot.lane.b32.xlu0 %v398, 111
      %v553 = vpop.permute.xlu0 %552
      %554 = vrot.lane.b32.xlu0 %v399, 111
      %v555 = vpop.permute.xlu0 %554
      %vm556 = vcmask 908288
      %v557 = vsel %vm556, %v553, %v555
      %v561 = vsel %vm556, %v555, %v553
      %v562 = vlaneseq
      %v563 = vshrl.u32 %v562, 7
      %v564 = vsub.s32 0, %v563
      %v565 = vrot.slane %v402, %v564
      %v566 = vlaneseq
      %v567 = vshrl.u32 %v566, 7
      %v568 = vsub.s32 0, %v567
      %v569 = vrot.slane %v403, %v568
      %v570 = vmul.f32 %v557, %v565
      %v571 = vmul.f32 %v561, %v569
      %573 = vset.pattern.permute.xlu0 0
      %574 = vperm.xlu0 %573, %v409
      %v575 = vpop.permute.xlu0 %574
      %vm577 = vcmask 588800
      %v579 = vsel %vm577, %v408, 0
      %581 = vmatprep.subr.mxu0 %v431
      %582 = vmatpush1.msra.mxu0 %v430
      %583 = vmatprep.subr.mxu0 %v451
      %584 = vmatpush1.msra.mxu0 %v450
      %585 = vmatprep.subr.mxu0 %v471
      %586 = vmatpush1.msra.mxu0 %v470
      %587 = vmatprep.subr.mxu0 %v491
      %588 = vmatpush1.msra.mxu0 %v490
      %589 = vmatprep.subr.mxu0 %v399
      %590 = vmatpush1.msra.mxu0 %v398
      %591 = vmatprep.subr.mxu0 %v511
      %592 = vmatpush1.msra.mxu0 %v510
      %593 = vmatprep.subr.mxu0 %v531
      %594 = vmatpush1.msra.mxu0 %v530
      %595 = vmatprep.subr.mxu0 %v551
      %596 = vmatpush1.msra.mxu0 %v550
      %597 = vmatprep.subr.mxu0 %v571
      %598 = vmatpush1.msra.mxu0 %v570
      %599 = vmatprep.subr.mxu0 0.0
      %600 = vmatpush1.msra.mxu0 0.0
      %601 = vmatprep.subr.mxu0 0.0
      %602 = vmatpush1.msra.mxu0 0.0
      %603 = vmatprep.subr.mxu0 0.0
      %604 = vmatpush1.msra.mxu0 0.0
      %605 = vmatprep.subr.mxu0 0.0
      %606 = vmatpush1.msra.mxu0 0.0
      %607 = vmatprep.subr.mxu0 0.0
      %608 = vmatpush1.msra.mxu0 0.0
      %609 = vmatprep.subr.mxu0 0.0
      %610 = vmatpush1.msra.mxu0 0.0
      %611 = vmatprep.subr.mxu0 0.0
      %612 = vmatpush1.msra.mxu0 0.0
      %613 = vmatprep.subr.mxu0 0.0
      %614 = vmatpush1.msra.mxu0 0.0
      %615 = vmatprep.subr.mxu0 0.0
      %616 = vmatpush1.msra.mxu0 0.0
      %617 = vmatprep.subr.mxu0 0.0
      %618 = vmatpush1.msra.mxu0 0.0
      %619 = vmatprep.subr.mxu0 0.0
      %620 = vmatpush1.msra.mxu0 0.0
      %621 = vmatprep.subr.mxu0 0.0
      %622 = vmatpush1.msra.mxu0 0.0
      %623 = vmatprep.subr.mxu0 0.0
      %624 = vmatpush1.msra.mxu0 0.0
      %625 = vmatprep.subr.mxu0 0.0
      %626 = vmatpush1.msra.mxu0 0.0
      %627 = vmatprep.subr.mxu0 0.0
      %628 = vmatpush1.msra.mxu0 0.0
      %629 = vmatprep.subr.mxu0 0.0
      %630 = vmatpush1.msra.mxu0 0.0
      %631 = vmatprep.subr.mxu0 0.0
      %632 = vmatpush1.msra.mxu0 0.0
      %633 = vmatprep.subr.mxu0 0.0
      %634 = vmatpush1.msra.mxu0 0.0
      %635 = vmatprep.subr.mxu0 0.0
      %636 = vmatpush1.msra.mxu0 0.0
      %637 = vmatprep.subr.mxu0 0.0
      %638 = vmatpush1.msra.mxu0 0.0
      %639 = vmatprep.subr.mxu0 0.0
      %640 = vmatpush1.msra.mxu0 0.0
      %641 = vmatprep.subr.mxu0 0.0
      %642 = vmatpush1.msra.mxu0 0.0
      %643 = vmatprep.subr.mxu0 0.0
      %644 = vmatpush1.msra.mxu0 0.0
      %645 = vmatprep.mubr.f32.mxu0 0.0
      %646 = vmatmul.mubr.f32.gmra.mrb[0].mxu0 %v579
      %v647 = vpop.f32.mrb[0].mxu0
      %v648 = vadd.f32 %v575, %v647
      %v649 = vpop.f32.mrb[0].mxu0
      %v650 = vadd.f32 %v575, %v649
      %651 = vdwg.mxu0
      %v652 = vmax.f32 %v648, 0.0
      %v653 = vmax.f32 %v650, 0.0
      %v654 = vld [vmem:[%s1 + $0x20] sm:$0xff]
      %v655 = vld [vmem:[%s2 + $0x8] sm:$0xff]
      %657 = vrot.lane.b32.xlu0 %v653, 17
      %v658 = vpop.permute.xlu0 %657
      %661 = vrot.lane.b32.xlu0 %v652, 17
      %v662 = vpop.permute.xlu0 %661
      %v663 = vsel %vm417, %v662, %v658
      %v666 = vsel %vm417, %v658, %v662
      %v667 = vmul.f32 %v666, %v425
      %v668 = vmul.f32 %v663, %v429
      %669 = vrot.lane.b32.xlu0 %v653, 16
      %v670 = vpop.permute.xlu0 %669
      %672 = vrot.lane.b32.xlu0 %v652, 16
      %v673 = vpop.permute.xlu0 %672
      %v674 = vsel %vm437, %v673, %v670
      %v677 = vsel %vm437, %v670, %v673
      %v678 = vmul.f32 %v677, %v445
      %v679 = vmul.f32 %v674, %v449
      %680 = vrot.lane.b32.xlu0 %v653, 15
      %v681 = vpop.permute.xlu0 %680
      %683 = vrot.lane.b32.xlu0 %v652, 15
      %v684 = vpop.permute.xlu0 %683
      %v685 = vsel %vm457, %v684, %v681
      %v688 = vsel %vm457, %v681, %v684
      %v689 = vmul.f32 %v688, %v465
      %v690 = vmul.f32 %v685, %v469
      %691 = vrot.lane.b32.xlu0 %v653, 1
      %v692 = vpop.permute.xlu0 %691
      %694 = vrot.lane.b32.xlu0 %v652, 1
      %v695 = vpop.permute.xlu0 %694
      %v696 = vsel %vm477, %v695, %v692
      %v699 = vsel %vm477, %v692, %v695
      %v700 = vmul.f32 %v699, %v485
      %v701 = vmul.f32 %v696, %v489
      %702 = vrot.lane.b32.xlu0 %v652, 127
      %v703 = vpop.permute.xlu0 %702
      %704 = vrot.lane.b32.xlu0 %v653, 127
      %v705 = vpop.permute.xlu0 %704
      %v706 = vsel %vm496, %v703, %v705
      %v710 = vsel %vm496, %v705, %v703
      %v711 = vmul.f32 %v706, %v505
      %v712 = vmul.f32 %v710, %v509
      %713 = vrot.lane.b32.xlu0 %v652, 113
      %v714 = vpop.permute.xlu0 %713
      %715 = vrot.lane.b32.xlu0 %v653, 113
      %v716 = vpop.permute.xlu0 %715
      %v717 = vsel %vm516, %v714, %v716
      %v721 = vsel %vm516, %v716, %v714
      %v722 = vmul.f32 %v717, %v525
      %v723 = vmul.f32 %v721, %v529
      %724 = vrot.lane.b32.xlu0 %v652, 112
      %v725 = vpop.permute.xlu0 %724
      %726 = vrot.lane.b32.xlu0 %v653, 112
      %v727 = vpop.permute.xlu0 %726
      %v728 = vsel %vm536, %v725, %v727
      %v732 = vsel %vm536, %v727, %v725
      %v733 = vmul.f32 %v728, %v545
      %v734 = vmul.f32 %v732, %v549
      %735 = vrot.lane.b32.xlu0 %v652, 111
      %v736 = vpop.permute.xlu0 %735
      %737 = vrot.lane.b32.xlu0 %v653, 111
      %v738 = vpop.permute.xlu0 %737
      %v739 = vsel %vm556, %v736, %v738
      %v743 = vsel %vm556, %v738, %v736
      %v744 = vmul.f32 %v739, %v565
      %v745 = vmul.f32 %v743, %v569
      %747 = vset.pattern.permute.xlu0 0
      %748 = vperm.xlu0 %747, %v655
      %v749 = vpop.permute.xlu0 %748
      %v752 = vsel %vm577, %v654, 0
      %754 = vmatprep.subr.mxu0 %v668
      %755 = vmatpush1.msra.mxu0 %v667
      %756 = vmatprep.subr.mxu0 %v679
      %757 = vmatpush1.msra.mxu0 %v678
      %758 = vmatprep.subr.mxu0 %v690
      %759 = vmatpush1.msra.mxu0 %v689
      %760 = vmatprep.subr.mxu0 %v701
      %761 = vmatpush1.msra.mxu0 %v700
      %762 = vmatprep.subr.mxu0 %v653
      %763 = vmatpush1.msra.mxu0 %v652
      %764 = vmatprep.subr.mxu0 %v712
      %765 = vmatpush1.msra.mxu0 %v711
      %766 = vmatprep.subr.mxu0 %v723
      %767 = vmatpush1.msra.mxu0 %v722
      %768 = vmatprep.subr.mxu0 %v734
      %769 = vmatpush1.msra.mxu0 %v733
      %770 = vmatprep.subr.mxu0 %v745
      %771 = vmatpush1.msra.mxu0 %v744
      %772 = vmatprep.subr.mxu0 0.0
      %773 = vmatpush1.msra.mxu0 0.0
      %774 = vmatprep.subr.mxu0 0.0
      %775 = vmatpush1.msra.mxu0 0.0
      %776 = vmatprep.subr.mxu0 0.0
      %777 = vmatpush1.msra.mxu0 0.0
      %778 = vmatprep.subr.mxu0 0.0
      %779 = vmatpush1.msra.mxu0 0.0
      %780 = vmatprep.subr.mxu0 0.0
      %781 = vmatpush1.msra.mxu0 0.0
      %782 = vmatprep.subr.mxu0 0.0
      %783 = vmatpush1.msra.mxu0 0.0
      %784 = vmatprep.subr.mxu0 0.0
      %785 = vmatpush1.msra.mxu0 0.0
      %786 = vmatprep.subr.mxu0 0.0
      %787 = vmatpush1.msra.mxu0 0.0
      %788 = vmatprep.subr.mxu0 0.0
      %789 = vmatpush1.msra.mxu0 0.0
      %790 = vmatprep.subr.mxu0 0.0
      %791 = vmatpush1.msra.mxu0 0.0
      %792 = vmatprep.subr.mxu0 0.0
      %793 = vmatpush1.msra.mxu0 0.0
      %794 = vmatprep.subr.mxu0 0.0
      %795 = vmatpush1.msra.mxu0 0.0
      %796 = vmatprep.subr.mxu0 0.0
      %797 = vmatpush1.msra.mxu0 0.0
      %798 = vmatprep.subr.mxu0 0.0
      %799 = vmatpush1.msra.mxu0 0.0
      %800 = vmatprep.subr.mxu0 0.0
      %801 = vmatpush1.msra.mxu0 0.0
      %802 = vmatprep.subr.mxu0 0.0
      %803 = vmatpush1.msra.mxu0 0.0
      %804 = vmatprep.subr.mxu0 0.0
      %805 = vmatpush1.msra.mxu0 0.0
      %806 = vmatprep.subr.mxu0 0.0
      %807 = vmatpush1.msra.mxu0 0.0
      %808 = vmatprep.subr.mxu0 0.0
      %809 = vmatpush1.msra.mxu0 0.0
      %810 = vmatprep.subr.mxu0 0.0
      %811 = vmatpush1.msra.mxu0 0.0
      %812 = vmatprep.subr.mxu0 0.0
      %813 = vmatpush1.msra.mxu0 0.0
      %814 = vmatprep.subr.mxu0 0.0
      %815 = vmatpush1.msra.mxu0 0.0
      %816 = vmatprep.subr.mxu0 0.0
      %817 = vmatpush1.msra.mxu0 0.0
      %818 = vmatprep.mubr.f32.mxu0 0.0
      %819 = vmatmul.mubr.f32.gmra.mrb[0].mxu0 %v752
      %v820 = vpop.f32.mrb[0].mxu0
      %v821 = vadd.f32 %v749, %v820
      %v822 = vpop.f32.mrb[0].mxu0
      %v823 = vadd.f32 %v749, %v822
      %824 = vdwg.mxu0
      %v825 = vmax.f32 %v821, 0.0
      %v826 = vmax.f32 %v823, 0.0
      %v827 = vld [vmem:[%s6] sm:$0xff]
      %v828 = vld [vmem:[%s6 + $0x8] sm:$0xff]
      %v829 = vld [vmem:[%s6 + $0x10] sm:$0xff]
      %v830 = vld [vmem:[%s6 + $0x18] sm:$0xff]
      %v831 = vld [vmem:[%s6 + $0x20] sm:$0xff]
      %v832 = vld [vmem:[%s6 + $0x28] sm:$0xff]
      %v833 = vld [vmem:[%s6 + $0x30] sm:$0xff]
      %v834 = vld [vmem:[%s6 + $0x38] sm:$0xff]
      %v835 = vld [vmem:[%s6 + $0x40] sm:$0xff]
      %v836 = vld [vmem:[%s6 + $0x48] sm:$0xff]
      %v837 = vld [vmem:[%s6 + $0x50] sm:$0xff]
      %v838 = vld [vmem:[%s6 + $0x58] sm:$0xff]
      %v839 = vld [vmem:[%s6 + $0x60] sm:$0xff]
      %v840 = vld [vmem:[%s6 + $0x68] sm:$0xff]
      %v841 = vld [vmem:[%s6 + $0x70] sm:$0xff]
      %v842 = vld [vmem:[%s6 + $0x78] sm:$0xff]
      %v843 = vld [vmem:[%s6 + $0x80] sm:$0xff]
      %v844 = vld [vmem:[%s6 + $0x88] sm:$0xff]
      %v845 = vld [vmem:[%s6 + $0x90] sm:$0xff]
      %v846 = vld [vmem:[%s6 + $0x98] sm:$0xff]
      %v847 = vld [vmem:[%s6 + $0xa0] sm:$0xff]
      %v848 = vld [vmem:[%s6 + $0xa8] sm:$0xff]
      %v849 = vld [vmem:[%s6 + $0xb0] sm:$0xff]
      %v850 = vld [vmem:[%s6 + $0xb8] sm:$0xff]
      %v851 = vld [vmem:[%s6 + $0xc0] sm:$0xff]
      %v852 = vld [vmem:[%s6 + $0xc8] sm:$0xff]
      %v853 = vld [vmem:[%s6 + $0xd0] sm:$0xff]
      %v854 = vld [vmem:[%s6 + $0xd8] sm:$0xff]
      %v855 = vld [vmem:[%s6 + $0xe0] sm:$0xff]
      %v856 = vld [vmem:[%s6 + $0xe8] sm:$0xff]
      %v857 = vld [vmem:[%s6 + $0xf0] sm:$0xff]
      %v858 = vld [vmem:[%s6 + $0xf8] sm:$0xff]
      %861 = vrot.lane.b32.xlu0 %v825, 127
      %v862 = vpop.permute.xlu0 %861
      %863 = vrot.lane.b32.xlu0 %v826, 127
      %v864 = vpop.permute.xlu0 %863
      %v865 = vsel %vm496, %v862, %v864
      %v869 = vsel %vm496, %v864, %v862
      %v870 = vmax.f32 %v825, %v865
      %v871 = vmax.f32 %v826, %v869
      %872 = vrot.lane.b32.xlu0 %v825, 112
      %v873 = vpop.permute.xlu0 %872
      %874 = vrot.lane.b32.xlu0 %v826, 112
      %v875 = vpop.permute.xlu0 %874
      %v876 = vsel %vm536, %v873, %v875
      %v880 = vsel %vm536, %v875, %v873
      %881 = vrot.lane.b32.xlu0 %v825, 111
      %v882 = vpop.permute.xlu0 %881
      %883 = vrot.lane.b32.xlu0 %v826, 111
      %v884 = vpop.permute.xlu0 %883
      %v885 = vsel %vm556, %v882, %v884
      %v889 = vsel %vm556, %v884, %v882
      %v890 = vmax.f32 %v876, %v885
      %v891 = vmax.f32 %v880, %v889
      %v892 = vmax.f32 %v870, %v890
      %v893 = vmax.f32 %v871, %v891
      %894 = vmatprep.subr.mxu0 0.0
      %895 = vmatpush1.msra.mxu0 %v827
      %896 = vmatprep.subr.mxu0 0.0
      %897 = vmatpush1.msra.mxu0 %v828
      %898 = vmatprep.subr.mxu0 0.0
      %899 = vmatpush1.msra.mxu0 %v829
      %900 = vmatprep.subr.mxu0 0.0
      %901 = vmatpush1.msra.mxu0 %v830
      %902 = vmatprep.subr.mxu0 0.0
      %903 = vmatpush1.msra.mxu0 %v831
      %904 = vmatprep.subr.mxu0 0.0
      %905 = vmatpush1.msra.mxu0 %v832
      %906 = vmatprep.subr.mxu0 0.0
      %907 = vmatpush1.msra.mxu0 %v833
      %908 = vmatprep.subr.mxu0 0.0
      %909 = vmatpush1.msra.mxu0 %v834
      %910 = vmatprep.subr.mxu0 0.0
      %911 = vmatpush1.msra.mxu0 %v835
      %912 = vmatprep.subr.mxu0 0.0
      %913 = vmatpush1.msra.mxu0 %v836
      %914 = vmatprep.subr.mxu0 0.0
      %915 = vmatpush1.msra.mxu0 %v837
      %916 = vmatprep.subr.mxu0 0.0
      %917 = vmatpush1.msra.mxu0 %v838
      %918 = vmatprep.subr.mxu0 0.0
      %919 = vmatpush1.msra.mxu0 %v839
      %920 = vmatprep.subr.mxu0 0.0
      %921 = vmatpush1.msra.mxu0 %v840
      %922 = vmatprep.subr.mxu0 0.0
      %923 = vmatpush1.msra.mxu0 %v841
      %924 = vmatprep.subr.mxu0 0.0
      %925 = vmatpush1.msra.mxu0 %v842
      %926 = vmatprep.subr.mxu0 0.0
      %927 = vmatpush1.msra.mxu0 %v843
      %928 = vmatprep.subr.mxu0 0.0
      %929 = vmatpush1.msra.mxu0 %v844
      %930 = vmatprep.subr.mxu0 0.0
      %931 = vmatpush1.msra.mxu0 %v845
      %932 = vmatprep.subr.mxu0 0.0
      %933 = vmatpush1.msra.mxu0 %v846
      %934 = vmatprep.subr.mxu0 0.0
      %935 = vmatpush1.msra.mxu0 %v847
      %936 = vmatprep.subr.mxu0 0.0
      %937 = vmatpush1.msra.mxu0 %v848
      %938 = vmatprep.subr.mxu0 0.0
      %939 = vmatpush1.msra.mxu0 %v849
      %940 = vmatprep.subr.mxu0 0.0
      %941 = vmatpush1.msra.mxu0 %v850
      %942 = vmatprep.subr.mxu0 0.0
      %943 = vmatpush1.msra.mxu0 %v851
      %944 = vmatprep.subr.mxu0 0.0
      %945 = vmatpush1.msra.mxu0 %v852
      %946 = vmatprep.subr.mxu0 0.0
      %947 = vmatpush1.msra.mxu0 %v853
      %948 = vmatprep.subr.mxu0 0.0
      %949 = vmatpush1.msra.mxu0 %v854
      %950 = vmatprep.subr.mxu0 0.0
      %951 = vmatpush1.msra.mxu0 %v855
      %952 = vmatprep.subr.mxu0 0.0
      %953 = vmatpush1.msra.mxu0 %v856
      %954 = vmatprep.subr.mxu0 0.0
      %955 = vmatpush1.msra.mxu0 %v857
      %956 = vmatprep.subr.mxu0 0.0
      %957 = vmatpush1.msra.mxu0 %v858
      %958 = vmatprep.mubr.f32.mxu0 %v893
      %959 = vmatmul.mubr.f32.gmra.mrb[0].mxu0 %v892
      %v960 = vpop.f32.mrb[0].mxu0
      %v961 = vadd.f32 0.0, %v960
      %v962 = vpop.f32.mrb[0].mxu0
      %963 = vdwg.mxu0
      %v964 = vld [vmem:[%s1 + $0x40] sm:$0xff]
      %v965 = vld [vmem:[%s1 + $0x60] sm:$0xff]
      %v966 = vld [vmem:[%s2 + $0x10] sm:$0xff]
      %v967 = vld [vmem:[%s2 + $0x18] sm:$0xff]
      %969 = vrot.lane.b32.xlu0 %v961, 73
      %v970 = vpop.permute.xlu0 %969
      %972 = vrot.lane.b32.xlu0 %v961, 9
      %v973 = vpop.permute.xlu0 %972
      %vm975 = vcmask 72704
      %v976 = vsel %vm975, %v970, %v973
      %v977 = vlaneseq
      %v978 = vshrl.u32 %v977, 7
      %v979 = vsub.s32 0, %v978
      %v980 = vrot.slane %v404, %v979
      %v981 = vmul.f32 %v976, %v980
      %982 = vrot.lane.b32.xlu0 %v961, 72
      %v983 = vpop.permute.xlu0 %982
      %985 = vrot.lane.b32.xlu0 %v961, 8
      %v986 = vpop.permute.xlu0 %985
      %vm988 = vcmask 64512
      %v989 = vsel %vm988, %v983, %v986
      %v990 = vlaneseq
      %v991 = vshrl.u32 %v990, 7
      %v992 = vsub.s32 1, %v991
      %v993 = vrot.slane %v404, %v992
      %v994 = vmul.f32 %v989, %v993
      %995 = vrot.lane.b32.xlu0 %v961, 71
      %v996 = vpop.permute.xlu0 %995
      %998 = vrot.lane.b32.xlu0 %v961, 7
      %v999 = vpop.permute.xlu0 %998
      %vm1001 = vcmask 56320
      %v1002 = vsel %vm1001, %v996, %v999
      %v1003 = vlaneseq
      %v1004 = vshrl.u32 %v1003, 7
      %v1005 = vsub.s32 2, %v1004
      %v1006 = vrot.slane %v404, %v1005
      %v1007 = vmul.f32 %v1002, %v1006
      %1008 = vrot.lane.b32.xlu0 %v961, 65
      %v1009 = vpop.permute.xlu0 %1008
      %1011 = vrot.lane.b32.xlu0 %v961, 1
      %v1012 = vpop.permute.xlu0 %1011
      %v1014 = vsel %vm477, %v1009, %v1012
      %v1015 = vlaneseq
      %v1016 = vshrl.u32 %v1015, 7
      %v1017 = vsub.s32 3, %v1016
      %v1018 = vrot.slane %v404, %v1017
      %v1019 = vmul.f32 %v1014, %v1018
      %1020 = vrot.lane.b32.xlu0 %v961, 127
      %v1021 = vpop.permute.xlu0 %1020
      %1023 = vrot.lane.b32.xlu0 %v961, 63
      %v1024 = vpop.permute.xlu0 %1023
      %vm1026 = vcmask 515072
      %v1027 = vsel %vm1026, %v1021, %v1024
      %v1028 = vlaneseq
      %v1029 = vshrl.u32 %v1028, 7
      %v1030 = vsub.s32 5, %v1029
      %v1031 = vrot.slane %v404, %v1030
      %v1032 = vmul.f32 %v1027, %v1031
      %1033 = vrot.lane.b32.xlu0 %v961, 121
      %v1034 = vpop.permute.xlu0 %1033
      %1036 = vrot.lane.b32.xlu0 %v961, 57
      %v1037 = vpop.permute.xlu0 %1036
      %vm1039 = vcmask 465920
      %v1040 = vsel %vm1039, %v1034, %v1037
      %v1041 = vlaneseq
      %v1042 = vshrl.u32 %v1041, 7
      %v1043 = vsub.s32 6, %v1042
      %v1044 = vrot.slane %v404, %v1043
      %v1045 = vmul.f32 %v1040, %v1044
      %1046 = vrot.lane.b32.xlu0 %v961, 120
      %v1047 = vpop.permute.xlu0 %1046
      %1049 = vrot.lane.b32.xlu0 %v961, 56
      %v1050 = vpop.permute.xlu0 %1049
      %vm1052 = vcmask 457728
      %v1053 = vsel %vm1052, %v1047, %v1050
      %v1054 = vlaneseq
      %v1055 = vshrl.u32 %v1054, 7
      %v1056 = vsub.s32 7, %v1055
      %v1057 = vrot.slane %v404, %v1056
      %v1058 = vmul.f32 %v1053, %v1057
      %1059 = vrot.lane.b32.xlu0 %v961, 119
      %v1060 = vpop.permute.xlu0 %1059
      %1062 = vrot.lane.b32.xlu0 %v961, 55
      %v1063 = vpop.permute.xlu0 %1062
      %vm1065 = vcmask 449536
      %v1066 = vsel %vm1065, %v1060, %v1063
      %v1067 = vlaneseq
      %v1068 = vshrl.u32 %v1067, 7
      %v1069 = vsub.s32 0, %v1068
      %v1070 = vrot.slane %v405, %v1069
      %v1071 = vmul.f32 %v1066, %v1070
      %1073 = vset.pattern.permute.xlu0 0
      %1074 = vperm.xlu0 %1073, %v966
      %v1075 = vpop.permute.xlu0 %1074
      %1078 = vset.pattern.permute.xlu0 0
      %1079 = vperm.xlu0 %1078, %v967
      %v1080 = vpop.permute.xlu0 %1079
      %v1083 = vsel %vm577, %v964, 0
      %v1086 = vsel %vm577, %v965, 0
      %1088 = vmatprep.subr.mxu0 0.0
      %1089 = vmatpush1.msra.mxu0 %v981
      %1090 = vmatprep.subr.mxu0 0.0
      %1091 = vmatpush1.msra.mxu0 %v994
      %1092 = vmatprep.subr.mxu0 0.0
      %1093 = vmatpush1.msra.mxu0 %v1007
      %1094 = vmatprep.subr.mxu0 0.0
      %1095 = vmatpush1.msra.mxu0 %v1019
      %1096 = vmatprep.subr.mxu0 0.0
      %1097 = vmatpush1.msra.mxu0 %v961
      %1098 = vmatprep.subr.mxu0 0.0
      %1099 = vmatpush1.msra.mxu0 %v1032
      %1100 = vmatprep.subr.mxu0 0.0
      %1101 = vmatpush1.msra.mxu0 %v1045
      %1102 = vmatprep.subr.mxu0 0.0
      %1103 = vmatpush1.msra.mxu0 %v1058
      %1104 = vmatprep.subr.mxu0 0.0
      %1105 = vmatpush1.msra.mxu0 %v1071
      %1106 = vmatprep.subr.mxu0 0.0
      %1107 = vmatpush1.msra.mxu0 0.0
      %1108 = vmatprep.subr.mxu0 0.0
      %1109 = vmatpush1.msra.mxu0 0.0
      %1110 = vmatprep.subr.mxu0 0.0
      %1111 = vmatpush1.msra.mxu0 0.0
      %1112 = vmatprep.subr.mxu0 0.0
      %1113 = vmatpush1.msra.mxu0 0.0
      %1114 = vmatprep.subr.mxu0 0.0
      %1115 = vmatpush1.msra.mxu0 0.0
      %1116 = vmatprep.subr.mxu0 0.0
      %1117 = vmatpush1.msra.mxu0 0.0
      %1118 = vmatprep.subr.mxu0 0.0
      %1119 = vmatpush1.msra.mxu0 0.0
      %1120 = vmatprep.subr.mxu0 0.0
      %1121 = vmatpush1.msra.mxu0 0.0
      %1122 = vmatprep.subr.mxu0 0.0
      %1123 = vmatpush1.msra.mxu0 0.0
      %1124 = vmatprep.subr.mxu0 0.0
      %1125 = vmatpush1.msra.mxu0 0.0
      %1126 = vmatprep.subr.mxu0 0.0
      %1127 = vmatpush1.msra.mxu0 0.0
      %1128 = vmatprep.subr.mxu0 0.0
      %1129 = vmatpush1.msra.mxu0 0.0
      %1130 = vmatprep.subr.mxu0 0.0
      %1131 = vmatpush1.msra.mxu0 0.0
      %1132 = vmatprep.subr.mxu0 0.0
      %1133 = vmatpush1.msra.mxu0 0.0
      %1134 = vmatprep.subr.mxu0 0.0
      %1135 = vmatpush1.msra.mxu0 0.0
      %1136 = vmatprep.subr.mxu0 0.0
      %1137 = vmatpush1.msra.mxu0 0.0
      %1138 = vmatprep.subr.mxu0 0.0
      %1139 = vmatpush1.msra.mxu0 0.0
      %1140 = vmatprep.subr.mxu0 0.0
      %1141 = vmatpush1.msra.mxu0 0.0
      %1142 = vmatprep.subr.mxu0 0.0
      %1143 = vmatpush1.msra.mxu0 0.0
      %1144 = vmatprep.subr.mxu0 0.0
      %1145 = vmatpush1.msra.mxu0 0.0
      %1146 = vmatprep.subr.mxu0 0.0
      %1147 = vmatpush1.msra.mxu0 0.0
      %1148 = vmatprep.subr.mxu0 0.0
      %1149 = vmatpush1.msra.mxu0 0.0
      %1150 = vmatprep.subr.mxu0 0.0
      %1151 = vmatpush1.msra.mxu0 0.0
      %1152 = vmatprep.mubr.f32.mxu0 0.0
      %1153 = vmatmul.mubr.f32.gmra.mrb[0].mxu0 %v1083
      %v1154 = vpop.f32.mrb[0].mxu0
      %v1155 = vadd.f32 %v1075, %v1154
      %v1156 = vpop.f32.mrb[0].mxu0
      %1157 = vmatprep.mubr.f32.mxu0 0.0
      %1158 = vmatmul.mubr.f32.gmra.mrb[0].mxu0 %v1086
      %v1159 = vpop.f32.mrb[0].mxu0
      %v1160 = vadd.f32 %v1080, %v1159
      %v1161 = vpop.f32.mrb[0].mxu0
      %1162 = vdwg.mxu0
      %v1163 = vmax.f32 %v1155, 0.0
      %v1164 = vmax.f32 %v1160, 0.0
      %v1165 = vld [vmem:[%s1 + $0x80] sm:$0xff]
      %v1166 = vld [vmem:[%s1 + $0x88] sm:$0xff]
      %v1167 = vld [vmem:[%s1 + $0xa0] sm:$0xff]
      %v1168 = vld [vmem:[%s1 + $0xa8] sm:$0xff]
      %v1169 = vld [vmem:[%s2 + $0x20] sm:$0xff]
      %v1170 = vld [vmem:[%s2 + $0x28] sm:$0xff]
      %1173 = vrot.lane.b32.xlu0 %v1163, 73
      %v1174 = vpop.permute.xlu0 %1173
      %1175 = vrot.lane.b32.xlu0 %v1164, 73
      %v1176 = vpop.permute.xlu0 %1175
      %1179 = vrot.lane.b32.xlu0 %v1163, 9
      %v1180 = vpop.permute.xlu0 %1179
      %1181 = vrot.lane.b32.xlu0 %v1164, 9
      %v1182 = vpop.permute.xlu0 %1181
      %v1185 = vsel %vm975, %v1174, %v1180
      %v1186 = vsel %vm975, %v1176, %v1182
      %v1187 = vmul.f32 %v1185, %v980
      %v1188 = vmul.f32 %v1186, %v980
      %1189 = vrot.lane.b32.xlu0 %v1163, 72
      %v1190 = vpop.permute.xlu0 %1189
      %1191 = vrot.lane.b32.xlu0 %v1164, 72
      %v1192 = vpop.permute.xlu0 %1191
      %1195 = vrot.lane.b32.xlu0 %v1163, 8
      %v1196 = vpop.permute.xlu0 %1195
      %1197 = vrot.lane.b32.xlu0 %v1164, 8
      %v1198 = vpop.permute.xlu0 %1197
      %v1201 = vsel %vm988, %v1190, %v1196
      %v1202 = vsel %vm988, %v1192, %v1198
      %v1203 = vmul.f32 %v1201, %v993
      %v1204 = vmul.f32 %v1202, %v993
      %1205 = vrot.lane.b32.xlu0 %v1163, 71
      %v1206 = vpop.permute.xlu0 %1205
      %1207 = vrot.lane.b32.xlu0 %v1164, 71
      %v1208 = vpop.permute.xlu0 %1207
      %1211 = vrot.lane.b32.xlu0 %v1163, 7
      %v1212 = vpop.permute.xlu0 %1211
      %1213 = vrot.lane.b32.xlu0 %v1164, 7
      %v1214 = vpop.permute.xlu0 %1213
      %v1217 = vsel %vm1001, %v1206, %v1212
      %v1218 = vsel %vm1001, %v1208, %v1214
      %v1219 = vmul.f32 %v1217, %v1006
      %v1220 = vmul.f32 %v1218, %v1006
      %1221 = vrot.lane.b32.xlu0 %v1163, 65
      %v1222 = vpop.permute.xlu0 %1221
      %1223 = vrot.lane.b32.xlu0 %v1164, 65
      %v1224 = vpop.permute.xlu0 %1223
      %1227 = vrot.lane.b32.xlu0 %v1163, 1
      %v1228 = vpop.permute.xlu0 %1227
      %1229 = vrot.lane.b32.xlu0 %v1164, 1
      %v1230 = vpop.permute.xlu0 %1229
      %v1233 = vsel %vm477, %v1222, %v1228
      %v1234 = vsel %vm477, %v1224, %v1230
      %v1235 = vmul.f32 %v1233, %v1018
      %v1236 = vmul.f32 %v1234, %v1018
      %1237 = vrot.lane.b32.xlu0 %v1163, 127
      %v1238 = vpop.permute.xlu0 %1237
      %1239 = vrot.lane.b32.xlu0 %v1164, 127
      %v1240 = vpop.permute.xlu0 %1239
      %1243 = vrot.lane.b32.xlu0 %v1163, 63
      %v1244 = vpop.permute.xlu0 %1243
      %1245 = vrot.lane.b32.xlu0 %v1164, 63
      %v1246 = vpop.permute.xlu0 %1245
      %v1249 = vsel %vm1026, %v1238, %v1244
      %v1250 = vsel %vm1026, %v1240, %v1246
      %v1251 = vmul.f32 %v1249, %v1031
      %v1252 = vmul.f32 %v1250, %v1031
      %1253 = vrot.lane.b32.xlu0 %v1163, 121
      %v1254 = vpop.permute.xlu0 %1253
      %1255 = vrot.lane.b32.xlu0 %v1164, 121
      %v1256 = vpop.permute.xlu0 %1255
      %1259 = vrot.lane.b32.xlu0 %v1163, 57
      %v1260 = vpop.permute.xlu0 %1259
      %1261 = vrot.lane.b32.xlu0 %v1164, 57
      %v1262 = vpop.permute.xlu0 %1261
      %v1265 = vsel %vm1039, %v1254, %v1260
      %v1266 = vsel %vm1039, %v1256, %v1262
      %v1267 = vmul.f32 %v1265, %v1044
      %v1268 = vmul.f32 %v1266, %v1044
      %1269 = vrot.lane.b32.xlu0 %v1163, 120
      %v1270 = vpop.permute.xlu0 %1269
      %1271 = vrot.lane.b32.xlu0 %v1164, 120
      %v1272 = vpop.permute.xlu0 %1271
      %1275 = vrot.lane.b32.xlu0 %v1163, 56
      %v1276 = vpop.permute.xlu0 %1275
      %1277 = vrot.lane.b32.xlu0 %v1164, 56
      %v1278 = vpop.permute.xlu0 %1277
      %v1281 = vsel %vm1052, %v1270, %v1276
      %v1282 = vsel %vm1052, %v1272, %v1278
      %v1283 = vmul.f32 %v1281, %v1057
      %v1284 = vmul.f32 %v1282, %v1057
      %1285 = vrot.lane.b32.xlu0 %v1163, 119
      %v1286 = vpop.permute.xlu0 %1285
      %1287 = vrot.lane.b32.xlu0 %v1164, 119
      %v1288 = vpop.permute.xlu0 %1287
      %1291 = vrot.lane.b32.xlu0 %v1163, 55
      %v1292 = vpop.permute.xlu0 %1291
      %1293 = vrot.lane.b32.xlu0 %v1164, 55
      %v1294 = vpop.permute.xlu0 %1293
      %v1297 = vsel %vm1065, %v1286, %v1292
      %v1298 = vsel %vm1065, %v1288, %v1294
      %v1299 = vmul.f32 %v1297, %v1070
      %v1300 = vmul.f32 %v1298, %v1070
      %1302 = vset.pattern.permute.xlu0 0
      %1303 = vperm.xlu0 %1302, %v1169
      %v1304 = vpop.permute.xlu0 %1303
      %1307 = vset.pattern.permute.xlu0 0
      %1308 = vperm.xlu0 %1307, %v1170
      %v1309 = vpop.permute.xlu0 %1308
      %v1312 = vsel %vm437, %v1166, 0
      %v1315 = vsel %vm437, %v1168, 0
      %1317 = vmatprep.subr.mxu0 0.0
      %1318 = vmatpush1.msra.mxu0 %v1187
      %1319 = vmatprep.subr.mxu0 0.0
      %1320 = vmatpush1.msra.mxu0 %v1188
      %1321 = vmatprep.subr.mxu0 0.0
      %1322 = vmatpush1.msra.mxu0 %v1203
      %1323 = vmatprep.subr.mxu0 0.0
      %1324 = vmatpush1.msra.mxu0 %v1204
      %1325 = vmatprep.subr.mxu0 0.0
      %1326 = vmatpush1.msra.mxu0 %v1219
      %1327 = vmatprep.subr.mxu0 0.0
      %1328 = vmatpush1.msra.mxu0 %v1220
      %1329 = vmatprep.subr.mxu0 0.0
      %1330 = vmatpush1.msra.mxu0 %v1235
      %1331 = vmatprep.subr.mxu0 0.0
      %1332 = vmatpush1.msra.mxu0 %v1236
      %1333 = vmatprep.subr.mxu0 0.0
      %1334 = vmatpush1.msra.mxu0 %v1163
      %1335 = vmatprep.subr.mxu0 0.0
      %1336 = vmatpush1.msra.mxu0 %v1164
      %1337 = vmatprep.subr.mxu0 0.0
      %1338 = vmatpush1.msra.mxu0 %v1251
      %1339 = vmatprep.subr.mxu0 0.0
      %1340 = vmatpush1.msra.mxu0 %v1252
      %1341 = vmatprep.subr.mxu0 0.0
      %1342 = vmatpush1.msra.mxu0 %v1267
      %1343 = vmatprep.subr.mxu0 0.0
      %1344 = vmatpush1.msra.mxu0 %v1268
      %1345 = vmatprep.subr.mxu0 0.0
      %1346 = vmatpush1.msra.mxu0 %v1283
      %1347 = vmatprep.subr.mxu0 0.0
      %1348 = vmatpush1.msra.mxu0 %v1284
      %1349 = vmatprep.subr.mxu0 0.0
      %1350 = vmatpush1.msra.mxu0 %v1299
      %1351 = vmatprep.subr.mxu0 0.0
      %1352 = vmatpush1.msra.mxu0 %v1300
      %1353 = vmatprep.subr.mxu0 0.0
      %1354 = vmatpush1.msra.mxu0 0.0
      %1355 = vmatprep.subr.mxu0 0.0
      %1356 = vmatpush1.msra.mxu0 0.0
      %1357 = vmatprep.subr.mxu0 0.0
      %1358 = vmatpush1.msra.mxu0 0.0
      %1359 = vmatprep.subr.mxu0 0.0
      %1360 = vmatpush1.msra.mxu0 0.0
      %1361 = vmatprep.subr.mxu0 0.0
      %1362 = vmatpush1.msra.mxu0 0.0
      %1363 = vmatprep.subr.mxu0 0.0
      %1364 = vmatpush1.msra.mxu0 0.0
      %1365 = vmatprep.subr.mxu0 0.0
      %1366 = vmatpush1.msra.mxu0 0.0
      %1367 = vmatprep.subr.mxu0 0.0
      %1368 = vmatpush1.msra.mxu0 0.0
      %1369 = vmatprep.subr.mxu0 0.0
      %1370 = vmatpush1.msra.mxu0 0.0
      %1371 = vmatprep.subr.mxu0 0.0
      %1372 = vmatpush1.msra.mxu0 0.0
      %1373 = vmatprep.subr.mxu0 0.0
      %1374 = vmatpush1.msra.mxu0 0.0
      %1375 = vmatprep.subr.mxu0 0.0
      %1376 = vmatpush1.msra.mxu0 0.0
      %1377 = vmatprep.subr.mxu0 0.0
      %1378 = vmatpush1.msra.mxu0 0.0
      %1379 = vmatprep.subr.mxu0 0.0
      %1380 = vmatpush1.msra.mxu0 0.0
      %1381 = vmatprep.mubr.f32.mxu0 %v1312
      %1382 = vmatmul.mubr.f32.gmra.mrb[0].mxu0 %v1165
      %v1383 = vpop.f32.mrb[0].mxu0
      %v1384 = vadd.f32 %v1304, %v1383
      %v1385 = vpop.f32.mrb[0].mxu0
      %1386 = vmatprep.mubr.f32.mxu0 %v1315
      %1387 = vmatmul.mubr.f32.gmra.mrb[0].mxu0 %v1167
      %v1388 = vpop.f32.mrb[0].mxu0
      %v1389 = vadd.f32 %v1309, %v1388
      %v1390 = vpop.f32.mrb[0].mxu0
      %1391 = vdwg.mxu0
      %v1392 = vmax.f32 %v1384, 0.0
      %v1393 = vmax.f32 %v1389, 0.0
      %v1394 = vld [vmem:[%s7] sm:$0xff]
      %v1395 = vld [vmem:[%s7 + $0x8] sm:$0xff]
      %v1396 = vld [vmem:[%s7 + $0x10] sm:$0xff]
      %v1397 = vld [vmem:[%s7 + $0x18] sm:$0xff]
      %v1398 = vld [vmem:[%s7 + $0x20] sm:$0xff]
      %v1399 = vld [vmem:[%s7 + $0x28] sm:$0xff]
      %v1400 = vld [vmem:[%s7 + $0x30] sm:$0xff]
      %v1401 = vld [vmem:[%s7 + $0x38] sm:$0xff]
      %1404 = vrot.lane.b32.xlu0 %v1392, 127
      %v1405 = vpop.permute.xlu0 %1404
      %1406 = vrot.lane.b32.xlu0 %v1393, 127
      %v1407 = vpop.permute.xlu0 %1406
      %1410 = vrot.lane.b32.xlu0 %v1392, 63
      %v1411 = vpop.permute.xlu0 %1410
      %1412 = vrot.lane.b32.xlu0 %v1393, 63
      %v1413 = vpop.permute.xlu0 %1412
      %v1416 = vsel %vm1026, %v1405, %v1411
      %v1417 = vsel %vm1026, %v1407, %v1413
      %v1418 = vmax.f32 %v1392, %v1416
      %v1419 = vmax.f32 %v1393, %v1417
      %1420 = vrot.lane.b32.xlu0 %v1392, 120
      %v1421 = vpop.permute.xlu0 %1420
      %1422 = vrot.lane.b32.xlu0 %v1393, 120
      %v1423 = vpop.permute.xlu0 %1422
      %1426 = vrot.lane.b32.xlu0 %v1392, 56
      %v1427 = vpop.permute.xlu0 %1426
      %1428 = vrot.lane.b32.xlu0 %v1393, 56
      %v1429 = vpop.permute.xlu0 %1428
      %v1432 = vsel %vm1052, %v1421, %v1427
      %v1433 = vsel %vm1052, %v1423, %v1429
      %1434 = vrot.lane.b32.xlu0 %v1392, 119
      %v1435 = vpop.permute.xlu0 %1434
      %1436 = vrot.lane.b32.xlu0 %v1393, 119
      %v1437 = vpop.permute.xlu0 %1436
      %1440 = vrot.lane.b32.xlu0 %v1392, 55
      %v1441 = vpop.permute.xlu0 %1440
      %1442 = vrot.lane.b32.xlu0 %v1393, 55
      %v1443 = vpop.permute.xlu0 %1442
      %v1446 = vsel %vm1065, %v1435, %v1441
      %v1447 = vsel %vm1065, %v1437, %v1443
      %v1448 = vmax.f32 %v1432, %v1446
      %v1449 = vmax.f32 %v1433, %v1447
      %v1450 = vmax.f32 %v1418, %v1448
      %v1451 = vmax.f32 %v1419, %v1449
      %vm1452 = vcmask 523264
      %v1454 = vsel %vm1452, %v1450, 0
      %v1457 = vsel %vm1452, %v1451, 0
      %1459 = vmatprep.subr.mxu0 0.0
      %1460 = vmatpush1.msra.mxu0 %v1394
      %1461 = vmatprep.subr.mxu0 0.0
      %1462 = vmatpush1.msra.mxu0 %v1395
      %1463 = vmatprep.subr.mxu0 0.0
      %1464 = vmatpush1.msra.mxu0 %v1396
      %1465 = vmatprep.subr.mxu0 0.0
      %1466 = vmatpush1.msra.mxu0 %v1397
      %1467 = vmatprep.subr.mxu0 0.0
      %1468 = vmatpush1.msra.mxu0 %v1398
      %1469 = vmatprep.subr.mxu0 0.0
      %1470 = vmatpush1.msra.mxu0 %v1399
      %1471 = vmatprep.subr.mxu0 0.0
      %1472 = vmatpush1.msra.mxu0 %v1400
      %1473 = vmatprep.subr.mxu0 0.0
      %1474 = vmatpush1.msra.mxu0 %v1401
      %1475 = vmatprep.subr.mxu0 0.0
      %1476 = vmatpush1.msra.mxu0 0.0
      %1477 = vmatprep.subr.mxu0 0.0
      %1478 = vmatpush1.msra.mxu0 0.0
      %1479 = vmatprep.subr.mxu0 0.0
      %1480 = vmatpush1.msra.mxu0 0.0
      %1481 = vmatprep.subr.mxu0 0.0
      %1482 = vmatpush1.msra.mxu0 0.0
      %1483 = vmatprep.subr.mxu0 0.0
      %1484 = vmatpush1.msra.mxu0 0.0
      %1485 = vmatprep.subr.mxu0 0.0
      %1486 = vmatpush1.msra.mxu0 0.0
      %1487 = vmatprep.subr.mxu0 0.0
      %1488 = vmatpush1.msra.mxu0 0.0
      %1489 = vmatprep.subr.mxu0 0.0
      %1490 = vmatpush1.msra.mxu0 0.0
      %1491 = vmatprep.subr.mxu0 0.0
      %1492 = vmatpush1.msra.mxu0 0.0
      %1493 = vmatprep.subr.mxu0 0.0
      %1494 = vmatpush1.msra.mxu0 0.0
      %1495 = vmatprep.subr.mxu0 0.0
      %1496 = vmatpush1.msra.mxu0 0.0
      %1497 = vmatprep.subr.mxu0 0.0
      %1498 = vmatpush1.msra.mxu0 0.0
      %1499 = vmatprep.subr.mxu0 0.0
      %1500 = vmatpush1.msra.mxu0 0.0
      %1501 = vmatprep.subr.mxu0 0.0
      %1502 = vmatpush1.msra.mxu0 0.0
      %1503 = vmatprep.subr.mxu0 0.0
      %1504 = vmatpush1.msra.mxu0 0.0
      %1505 = vmatprep.subr.mxu0 0.0
      %1506 = vmatpush1.msra.mxu0 0.0
      %1507 = vmatprep.subr.mxu0 0.0
      %1508 = vmatpush1.msra.mxu0 0.0
      %1509 = vmatprep.subr.mxu0 0.0
      %1510 = vmatpush1.msra.mxu0 0.0
      %1511 = vmatprep.subr.mxu0 0.0
      %1512 = vmatpush1.msra.mxu0 0.0
      %1513 = vmatprep.subr.mxu0 0.0
      %1514 = vmatpush1.msra.mxu0 0.0
      %1515 = vmatprep.subr.mxu0 0.0
      %1516 = vmatpush1.msra.mxu0 0.0
      %1517 = vmatprep.subr.mxu0 0.0
      %1518 = vmatpush1.msra.mxu0 0.0
      %1519 = vmatprep.subr.mxu0 0.0
      %1520 = vmatpush1.msra.mxu0 0.0
      %1521 = vmatprep.subr.mxu0 0.0
      %1522 = vmatpush1.msra.mxu0 0.0
      %1523 = vmatprep.mubr.f32.mxu0 0.0
      %1524 = vmatmul.mubr.f32.gmra.mrb[0].mxu0 %v1454
      %v1525 = vpop.f32.mrb[0].mxu0
      %v1526 = vadd.f32 0.0, %v1525
      %v1527 = vpop.f32.mrb[0].mxu0
      %1528 = vmatprep.mubr.f32.mxu0 0.0
      %1529 = vmatmul.mubr.f32.gmra.mrb[0].mxu0 %v1457
      %v1530 = vpop.f32.mrb[0].mxu0
      %v1531 = vadd.f32 0.0, %v1530
      %v1532 = vpop.f32.mrb[0].mxu0
      %1533 = vdwg.mxu0
      %v1534 = vld [vmem:[%s1 + $0xc0] sm:$0xff]
      %v1535 = vld [vmem:[%s1 + $0xc8] sm:$0xff]
      %v1536 = vld [vmem:[%s1 + $0xe0] sm:$0xff]
      %v1537 = vld [vmem:[%s1 + $0xe8] sm:$0xff]
      %v1538 = vld [vmem:[%s1 + $0x100] sm:$0xff]
      %v1539 = vld [vmem:[%s1 + $0x108] sm:$0xff]
      %v1540 = vld [vmem:[%s1 + $0x120] sm:$0xff]
      %v1541 = vld [vmem:[%s1 + $0x128] sm:$0xff]
      %v1542 = vld [vmem:[%s2 + $0x30] sm:$0xff]
      %v1543 = vld [vmem:[%s2 + $0x38] sm:$0xff]
      %v1544 = vld [vmem:[%s2 + $0x40] sm:$0xff]
      %v1545 = vld [vmem:[%s2 + $0x48] sm:$0xff]
      %1548 = vrot.lane.b32.xlu0 %v1526, 117
      %v1549 = vpop.permute.xlu0 %1548
      %1550 = vrot.lane.b32.xlu0 %v1531, 117
      %v1551 = vpop.permute.xlu0 %1550
      %1554 = vrot.lane.b32.xlu0 %v1526, 5
      %v1555 = vpop.permute.xlu0 %1554
      %1556 = vrot.lane.b32.xlu0 %v1531, 5
      %v1557 = vpop.permute.xlu0 %1556
      %vm1560 = vcmask 39936
      %v1561 = vsel %vm1560, %v1549, %v1555
      %v1562 = vsel %vm1560, %v1551, %v1557
      %v1563 = vlaneseq
      %v1564 = vshrl.u32 %v1563, 7
      %v1565 = vsub.s32 0, %v1564
      %v1566 = vrot.slane %v406, %v1565
      %v1567 = vmul.f32 %v1561, %v1566
      %v1568 = vmul.f32 %v1562, %v1566
      %1569 = vrot.lane.b32.xlu0 %v1526, 116
      %v1570 = vpop.permute.xlu0 %1569
      %1571 = vrot.lane.b32.xlu0 %v1531, 116
      %v1572 = vpop.permute.xlu0 %1571
      %1575 = vrot.lane.b32.xlu0 %v1526, 4
      %v1576 = vpop.permute.xlu0 %1575
      %1577 = vrot.lane.b32.xlu0 %v1531, 4
      %v1578 = vpop.permute.xlu0 %1577
      %vm1581 = vcmask 31744
      %v1582 = vsel %vm1581, %v1570, %v1576
      %v1583 = vsel %vm1581, %v1572, %v1578
      %v1584 = vlaneseq
      %v1585 = vshrl.u32 %v1584, 7
      %v1586 = vsub.s32 1, %v1585
      %v1587 = vrot.slane %v406, %v1586
      %v1588 = vmul.f32 %v1582, %v1587
      %v1589 = vmul.f32 %v1583, %v1587
      %1590 = vrot.lane.b32.xlu0 %v1526, 115
      %v1591 = vpop.permute.xlu0 %1590
      %1592 = vrot.lane.b32.xlu0 %v1531, 115
      %v1593 = vpop.permute.xlu0 %1592
      %1596 = vrot.lane.b32.xlu0 %v1526, 3
      %v1597 = vpop.permute.xlu0 %1596
      %1598 = vrot.lane.b32.xlu0 %v1531, 3
      %v1599 = vpop.permute.xlu0 %1598
      %vm1602 = vcmask 23552
      %v1603 = vsel %vm1602, %v1591, %v1597
      %v1604 = vsel %vm1602, %v1593, %v1599
      %v1605 = vlaneseq
      %v1606 = vshrl.u32 %v1605, 7
      %v1607 = vsub.s32 2, %v1606
      %v1608 = vrot.slane %v406, %v1607
      %v1609 = vmul.f32 %v1603, %v1608
      %v1610 = vmul.f32 %v1604, %v1608
      %1611 = vrot.lane.b32.xlu0 %v1526, 113
      %v1612 = vpop.permute.xlu0 %1611
      %1613 = vrot.lane.b32.xlu0 %v1531, 113
      %v1614 = vpop.permute.xlu0 %1613
      %1617 = vrot.lane.b32.xlu0 %v1526, 1
      %v1618 = vpop.permute.xlu0 %1617
      %1619 = vrot.lane.b32.xlu0 %v1531, 1
      %v1620 = vpop.permute.xlu0 %1619
      %v1623 = vsel %vm477, %v1612, %v1618
      %v1624 = vsel %vm477, %v1614, %v1620
      %v1625 = vlaneseq
      %v1626 = vshrl.u32 %v1625, 7
      %v1627 = vsub.s32 3, %v1626
      %v1628 = vrot.slane %v406, %v1627
      %v1629 = vmul.f32 %v1623, %v1628
      %v1630 = vmul.f32 %v1624, %v1628
      %1631 = vrot.lane.b32.xlu0 %v1526, 127
      %v1632 = vpop.permute.xlu0 %1631
      %1633 = vrot.lane.b32.xlu0 %v1531, 127
      %v1634 = vpop.permute.xlu0 %1633
      %1637 = vrot.lane.b32.xlu0 %v1526, 15
      %v1638 = vpop.permute.xlu0 %1637
      %1639 = vrot.lane.b32.xlu0 %v1531, 15
      %v1640 = vpop.permute.xlu0 %1639
      %v1643 = vsel %vm457, %v1632, %v1638
      %v1644 = vsel %vm457, %v1634, %v1640
      %v1645 = vlaneseq
      %v1646 = vshrl.u32 %v1645, 7
      %v1647 = vsub.s32 5, %v1646
      %v1648 = vrot.slane %v406, %v1647
      %v1649 = vmul.f32 %v1643, %v1648
      %v1650 = vmul.f32 %v1644, %v1648
      %1651 = vrot.lane.b32.xlu0 %v1526, 125
      %v1652 = vpop.permute.xlu0 %1651
      %1653 = vrot.lane.b32.xlu0 %v1531, 125
      %v1654 = vpop.permute.xlu0 %1653
      %1657 = vrot.lane.b32.xlu0 %v1526, 13
      %v1658 = vpop.permute.xlu0 %1657
      %1659 = vrot.lane.b32.xlu0 %v1531, 13
      %v1660 = vpop.permute.xlu0 %1659
      %vm1663 = vcmask 105472
      %v1664 = vsel %vm1663, %v1652, %v1658
      %v1665 = vsel %vm1663, %v1654, %v1660
      %v1666 = vlaneseq
      %v1667 = vshrl.u32 %v1666, 7
      %v1668 = vsub.s32 6, %v1667
      %v1669 = vrot.slane %v406, %v1668
      %v1670 = vmul.f32 %v1664, %v1669
      %v1671 = vmul.f32 %v1665, %v1669
      %1672 = vrot.lane.b32.xlu0 %v1526, 124
      %v1673 = vpop.permute.xlu0 %1672
      %1674 = vrot.lane.b32.xlu0 %v1531, 124
      %v1675 = vpop.permute.xlu0 %1674
      %1678 = vrot.lane.b32.xlu0 %v1526, 12
      %v1679 = vpop.permute.xlu0 %1678
      %1680 = vrot.lane.b32.xlu0 %v1531, 12
      %v1681 = vpop.permute.xlu0 %1680
      %vm1684 = vcmask 97280
      %v1685 = vsel %vm1684, %v1673, %v1679
      %v1686 = vsel %vm1684, %v1675, %v1681
      %v1687 = vlaneseq
      %v1688 = vshrl.u32 %v1687, 7
      %v1689 = vsub.s32 7, %v1688
      %v1690 = vrot.slane %v406, %v1689
      %v1691 = vmul.f32 %v1685, %v1690
      %v1692 = vmul.f32 %v1686, %v1690
      %1693 = vrot.lane.b32.xlu0 %v1526, 123
      %v1694 = vpop.permute.xlu0 %1693
      %1695 = vrot.lane.b32.xlu0 %v1531, 123
      %v1696 = vpop.permute.xlu0 %1695
      %1699 = vrot.lane.b32.xlu0 %v1526, 11
      %v1700 = vpop.permute.xlu0 %1699
      %1701 = vrot.lane.b32.xlu0 %v1531, 11
      %v1702 = vpop.permute.xlu0 %1701
      %vm1705 = vcmask 89088
      %v1706 = vsel %vm1705, %v1694, %v1700
      %v1707 = vsel %vm1705, %v1696, %v1702
      %v1708 = vlaneseq
      %v1709 = vshrl.u32 %v1708, 7
      %v1710 = vsub.s32 0, %v1709
      %v1711 = vrot.slane %v407, %v1710
      %v1712 = vmul.f32 %v1706, %v1711
      %v1713 = vmul.f32 %v1707, %v1711
      %1715 = vset.pattern.permute.xlu0 0
      %1716 = vperm.xlu0 %1715, %v1542
      %v1717 = vpop.permute.xlu0 %1716
      %1720 = vset.pattern.permute.xlu0 0
      %1721 = vperm.xlu0 %1720, %v1543
      %v1722 = vpop.permute.xlu0 %1721
      %1725 = vset.pattern.permute.xlu0 0
      %1726 = vperm.xlu0 %1725, %v1544
      %v1727 = vpop.permute.xlu0 %1726
      %1730 = vset.pattern.permute.xlu0 0
      %1731 = vperm.xlu0 %1730, %v1545
      %v1732 = vpop.permute.xlu0 %1731
      %v1735 = vsel %vm437, %v1535, 0
      %v1738 = vsel %vm437, %v1537, 0
      %v1741 = vsel %vm437, %v1539, 0
      %v1744 = vsel %vm437, %v1541, 0
      %1746 = vmatprep.subr.mxu0 0.0
      %1747 = vmatpush1.msra.mxu0 %v1567
      %1748 = vmatprep.subr.mxu0 0.0
      %1749 = vmatpush1.msra.mxu0 %v1568
      %1750 = vmatprep.subr.mxu0 0.0
      %1751 = vmatpush1.msra.mxu0 %v1588
      %1752 = vmatprep.subr.mxu0 0.0
      %1753 = vmatpush1.msra.mxu0 %v1589
      %1754 = vmatprep.subr.mxu0 0.0
      %1755 = vmatpush1.msra.mxu0 %v1609
      %1756 = vmatprep.subr.mxu0 0.0
      %1757 = vmatpush1.msra.mxu0 %v1610
      %1758 = vmatprep.subr.mxu0 0.0
      %1759 = vmatpush1.msra.mxu0 %v1629
      %1760 = vmatprep.subr.mxu0 0.0
      %1761 = vmatpush1.msra.mxu0 %v1630
      %1762 = vmatprep.subr.mxu0 0.0
      %1763 = vmatpush1.msra.mxu0 %v1526
      %1764 = vmatprep.subr.mxu0 0.0
      %1765 = vmatpush1.msra.mxu0 %v1531
      %1766 = vmatprep.subr.mxu0 0.0
      %1767 = vmatpush1.msra.mxu0 %v1649
      %1768 = vmatprep.subr.mxu0 0.0
      %1769 = vmatpush1.msra.mxu0 %v1650
      %1770 = vmatprep.subr.mxu0 0.0
      %1771 = vmatpush1.msra.mxu0 %v1670
      %1772 = vmatprep.subr.mxu0 0.0
      %1773 = vmatpush1.msra.mxu0 %v1671
      %1774 = vmatprep.subr.mxu0 0.0
      %1775 = vmatpush1.msra.mxu0 %v1691
      %1776 = vmatprep.subr.mxu0 0.0
      %1777 = vmatpush1.msra.mxu0 %v1692
      %1778 = vmatprep.subr.mxu0 0.0
      %1779 = vmatpush1.msra.mxu0 %v1712
      %1780 = vmatprep.subr.mxu0 0.0
      %1781 = vmatpush1.msra.mxu0 %v1713
      %1782 = vmatprep.subr.mxu0 0.0
      %1783 = vmatpush1.msra.mxu0 0.0
      %1784 = vmatprep.subr.mxu0 0.0
      %1785 = vmatpush1.msra.mxu0 0.0
      %1786 = vmatprep.subr.mxu0 0.0
      %1787 = vmatpush1.msra.mxu0 0.0
      %1788 = vmatprep.subr.mxu0 0.0
      %1789 = vmatpush1.msra.mxu0 0.0
      %1790 = vmatprep.subr.mxu0 0.0
      %1791 = vmatpush1.msra.mxu0 0.0
      %1792 = vmatprep.subr.mxu0 0.0
      %1793 = vmatpush1.msra.mxu0 0.0
      %1794 = vmatprep.subr.mxu0 0.0
      %1795 = vmatpush1.msra.mxu0 0.0
      %1796 = vmatprep.subr.mxu0 0.0
      %1797 = vmatpush1.msra.mxu0 0.0
      %1798 = vmatprep.subr.mxu0 0.0
      %1799 = vmatpush1.msra.mxu0 0.0
      %1800 = vmatprep.subr.mxu0 0.0
      %1801 = vmatpush1.msra.mxu0 0.0
      %1802 = vmatprep.subr.mxu0 0.0
      %1803 = vmatpush1.msra.mxu0 0.0
      %1804 = vmatprep.subr.mxu0 0.0
      %1805 = vmatpush1.msra.mxu0 0.0
      %1806 = vmatprep.subr.mxu0 0.0
      %1807 = vmatpush1.msra.mxu0 0.0
      %1808 = vmatprep.subr.mxu0 0.0
      %1809 = vmatpush1.msra.mxu0 0.0
      %1810 = vmatprep.mubr.f32.mxu0 %v1735
      %1811 = vmatmul.mubr.f32.gmra.mrb[0].mxu0 %v1534
      %v1812 = vpop.f32.mrb[0].mxu0
      %v1813 = vadd.f32 %v1717, %v1812
      %v1814 = vpop.f32.mrb[0].mxu0
      %1815 = vmatprep.mubr.f32.mxu0 %v1738
      %1816 = vmatmul.mubr.f32.gmra.mrb[0].mxu0 %v1536
      %v1817 = vpop.f32.mrb[0].mxu0
      %v1818 = vadd.f32 %v1722, %v1817
      %v1819 = vpop.f32.mrb[0].mxu0
      %1820 = vmatprep.mubr.f32.mxu0 %v1741
      %1821 = vmatmul.mubr.f32.gmra.mrb[0].mxu0 %v1538
      %v1822 = vpop.f32.mrb[0].mxu0
      %v1823 = vadd.f32 %v1727, %v1822
      %v1824 = vpop.f32.mrb[0].mxu0
      %1825 = vmatprep.mubr.f32.mxu0 %v1744
      %1826 = vmatmul.mubr.f32.gmra.mrb[0].mxu0 %v1540
      %v1827 = vpop.f32.mrb[0].mxu0
      %v1828 = vadd.f32 %v1732, %v1827
      %v1829 = vpop.f32.mrb[0].mxu0
      %1830 = vdwg.mxu0
      %v1831 = vmax.f32 %v1813, 0.0
      %v1832 = vmax.f32 %v1818, 0.0
      %v1833 = vmax.f32 %v1823, 0.0
      %v1834 = vmax.f32 %v1828, 0.0
      %v1835 = vld [vmem:[%s1 + $0x140] sm:$0xff]
      %v1836 = vld [vmem:[%s1 + $0x148] sm:$0xff]
      %v1837 = vld [vmem:[%s1 + $0x150] sm:$0xff]
      %v1838 = vld [vmem:[%s1 + $0x160] sm:$0xff]
      %v1839 = vld [vmem:[%s1 + $0x168] sm:$0xff]
      %v1840 = vld [vmem:[%s1 + $0x170] sm:$0xff]
      %v1841 = vld [vmem:[%s1 + $0x180] sm:$0xff]
      %v1842 = vld [vmem:[%s1 + $0x188] sm:$0xff]
      %v1843 = vld [vmem:[%s1 + $0x190] sm:$0xff]
      %v1844 = vld [vmem:[%s1 + $0x1a0] sm:$0xff]
      %v1845 = vld [vmem:[%s1 + $0x1a8] sm:$0xff]
      %v1846 = vld [vmem:[%s1 + $0x1b0] sm:$0xff]
      %v1847 = vld [vmem:[%s2 + $0x50] sm:$0xff]
      %v1848 = vld [vmem:[%s2 + $0x58] sm:$0xff]
      %v1849 = vld [vmem:[%s2 + $0x60] sm:$0xff]
      %v1850 = vld [vmem:[%s2 + $0x68] sm:$0xff]
      %1855 = vrot.lane.b32.xlu0 %v1831, 117
      %v1856 = vpop.permute.xlu0 %1855
      %1857 = vrot.lane.b32.xlu0 %v1832, 117
      %v1858 = vpop.permute.xlu0 %1857
      %1859 = vrot.lane.b32.xlu0 %v1833, 117
      %v1860 = vpop.permute.xlu0 %1859
      %1861 = vrot.lane.b32.xlu0 %v1834, 117
      %v1862 = vpop.permute.xlu0 %1861
      %1867 = vrot.lane.b32.xlu0 %v1831, 5
      %v1868 = vpop.permute.xlu0 %1867
      %1869 = vrot.lane.b32.xlu0 %v1832, 5
      %v1870 = vpop.permute.xlu0 %1869
      %1871 = vrot.lane.b32.xlu0 %v1833, 5
      %v1872 = vpop.permute.xlu0 %1871
      %1873 = vrot.lane.b32.xlu0 %v1834, 5
      %v1874 = vpop.permute.xlu0 %1873
      %v1879 = vsel %vm1560, %v1856, %v1868
      %v1880 = vsel %vm1560, %v1858, %v1870
      %v1881 = vsel %vm1560, %v1860, %v1872
      %v1882 = vsel %vm1560, %v1862, %v1874
      %v1883 = vmul.f32 %v1879, %v1566
      %v1884 = vmul.f32 %v1880, %v1566
      %v1885 = vmul.f32 %v1881, %v1566
      %v1886 = vmul.f32 %v1882, %v1566
      %1887 = vrot.lane.b32.xlu0 %v1831, 116
      %v1888 = vpop.permute.xlu0 %1887
      %1889 = vrot.lane.b32.xlu0 %v1832, 116
      %v1890 = vpop.permute.xlu0 %1889
      %1891 = vrot.lane.b32.xlu0 %v1833, 116
      %v1892 = vpop.permute.xlu0 %1891
      %1893 = vrot.lane.b32.xlu0 %v1834, 116
      %v1894 = vpop.permute.xlu0 %1893
      %1899 = vrot.lane.b32.xlu0 %v1831, 4
      %v1900 = vpop.permute.xlu0 %1899
      %1901 = vrot.lane.b32.xlu0 %v1832, 4
      %v1902 = vpop.permute.xlu0 %1901
      %1903 = vrot.lane.b32.xlu0 %v1833, 4
      %v1904 = vpop.permute.xlu0 %1903
      %1905 = vrot.lane.b32.xlu0 %v1834, 4
      %v1906 = vpop.permute.xlu0 %1905
      %v1911 = vsel %vm1581, %v1888, %v1900
      %v1912 = vsel %vm1581, %v1890, %v1902
      %v1913 = vsel %vm1581, %v1892, %v1904
      %v1914 = vsel %vm1581, %v1894, %v1906
      %v1915 = vmul.f32 %v1911, %v1587
      %v1916 = vmul.f32 %v1912, %v1587
      %v1917 = vmul.f32 %v1913, %v1587
      %v1918 = vmul.f32 %v1914, %v1587
      %1919 = vrot.lane.b32.xlu0 %v1831, 115
      %v1920 = vpop.permute.xlu0 %1919
      %1921 = vrot.lane.b32.xlu0 %v1832, 115
      %v1922 = vpop.permute.xlu0 %1921
      %1923 = vrot.lane.b32.xlu0 %v1833, 115
      %v1924 = vpop.permute.xlu0 %1923
      %1925 = vrot.lane.b32.xlu0 %v1834, 115
      %v1926 = vpop.permute.xlu0 %1925
      %1931 = vrot.lane.b32.xlu0 %v1831, 3
      %v1932 = vpop.permute.xlu0 %1931
      %1933 = vrot.lane.b32.xlu0 %v1832, 3
      %v1934 = vpop.permute.xlu0 %1933
      %1935 = vrot.lane.b32.xlu0 %v1833, 3
      %v1936 = vpop.permute.xlu0 %1935
      %1937 = vrot.lane.b32.xlu0 %v1834, 3
      %v1938 = vpop.permute.xlu0 %1937
      %v1943 = vsel %vm1602, %v1920, %v1932
      %v1944 = vsel %vm1602, %v1922, %v1934
      %v1945 = vsel %vm1602, %v1924, %v1936
      %v1946 = vsel %vm1602, %v1926, %v1938
      %v1947 = vmul.f32 %v1943, %v1608
      %v1948 = vmul.f32 %v1944, %v1608
      %v1949 = vmul.f32 %v1945, %v1608
      %v1950 = vmul.f32 %v1946, %v1608
      %1951 = vrot.lane.b32.xlu0 %v1831, 113
      %v1952 = vpop.permute.xlu0 %1951
      %1953 = vrot.lane.b32.xlu0 %v1832, 113
      %v1954 = vpop.permute.xlu0 %1953
      %1955 = vrot.lane.b32.xlu0 %v1833, 113
      %v1956 = vpop.permute.xlu0 %1955
      %1957 = vrot.lane.b32.xlu0 %v1834, 113
      %v1958 = vpop.permute.xlu0 %1957
      %1963 = vrot.lane.b32.xlu0 %v1831, 1
      %v1964 = vpop.permute.xlu0 %1963
      %1965 = vrot.lane.b32.xlu0 %v1832, 1
      %v1966 = vpop.permute.xlu0 %1965
      %1967 = vrot.lane.b32.xlu0 %v1833, 1
      %v1968 = vpop.permute.xlu0 %1967
      %1969 = vrot.lane.b32.xlu0 %v1834, 1
      %v1970 = vpop.permute.xlu0 %1969
      %v1975 = vsel %vm477, %v1952, %v1964
      %v1976 = vsel %vm477, %v1954, %v1966
      %v1977 = vsel %vm477, %v1956, %v1968
      %v1978 = vsel %vm477, %v1958, %v1970
      %v1979 = vmul.f32 %v1975, %v1628
      %v1980 = vmul.f32 %v1976, %v1628
      %v1981 = vmul.f32 %v1977, %v1628
      %v1982 = vmul.f32 %v1978, %v1628
      %1983 = vrot.lane.b32.xlu0 %v1831, 127
      %v1984 = vpop.permute.xlu0 %1983
      %1985 = vrot.lane.b32.xlu0 %v1832, 127
      %v1986 = vpop.permute.xlu0 %1985
      %1987 = vrot.lane.b32.xlu0 %v1833, 127
      %v1988 = vpop.permute.xlu0 %1987
      %1989 = vrot.lane.b32.xlu0 %v1834, 127
      %v1990 = vpop.permute.xlu0 %1989
      %1995 = vrot.lane.b32.xlu0 %v1831, 15
      %v1996 = vpop.permute.xlu0 %1995
      %1997 = vrot.lane.b32.xlu0 %v1832, 15
      %v1998 = vpop.permute.xlu0 %1997
      %1999 = vrot.lane.b32.xlu0 %v1833, 15
      %v2000 = vpop.permute.xlu0 %1999
      %2001 = vrot.lane.b32.xlu0 %v1834, 15
      %v2002 = vpop.permute.xlu0 %2001
      %v2007 = vsel %vm457, %v1984, %v1996
      %v2008 = vsel %vm457, %v1986, %v1998
      %v2009 = vsel %vm457, %v1988, %v2000
      %v2010 = vsel %vm457, %v1990, %v2002
      %v2011 = vmul.f32 %v2007, %v1648
      %v2012 = vmul.f32 %v2008, %v1648
      %v2013 = vmul.f32 %v2009, %v1648
      %v2014 = vmul.f32 %v2010, %v1648
      %2015 = vrot.lane.b32.xlu0 %v1831, 125
      %v2016 = vpop.permute.xlu0 %2015
      %2017 = vrot.lane.b32.xlu0 %v1832, 125
      %v2018 = vpop.permute.xlu0 %2017
      %2019 = vrot.lane.b32.xlu0 %v1833, 125
      %v2020 = vpop.permute.xlu0 %2019
      %2021 = vrot.lane.b32.xlu0 %v1834, 125
      %v2022 = vpop.permute.xlu0 %2021
      %2027 = vrot.lane.b32.xlu0 %v1831, 13
      %v2028 = vpop.permute.xlu0 %2027
      %2029 = vrot.lane.b32.xlu0 %v1832, 13
      %v2030 = vpop.permute.xlu0 %2029
      %2031 = vrot.lane.b32.xlu0 %v1833, 13
      %v2032 = vpop.permute.xlu0 %2031
      %2033 = vrot.lane.b32.xlu0 %v1834, 13
      %v2034 = vpop.permute.xlu0 %2033
      %v2039 = vsel %vm1663, %v2016, %v2028
      %v2040 = vsel %vm1663, %v2018, %v2030
      %v2041 = vsel %vm1663, %v2020, %v2032
      %v2042 = vsel %vm1663, %v2022, %v2034
      %v2043 = vmul.f32 %v2039, %v1669
      %v2044 = vmul.f32 %v2040, %v1669
      %v2045 = vmul.f32 %v2041, %v1669
      %v2046 = vmul.f32 %v2042, %v1669
      %2047 = vrot.lane.b32.xlu0 %v1831, 124
      %v2048 = vpop.permute.xlu0 %2047
      %2049 = vrot.lane.b32.xlu0 %v1832, 124
      %v2050 = vpop.permute.xlu0 %2049
      %2051 = vrot.lane.b32.xlu0 %v1833, 124
      %v2052 = vpop.permute.xlu0 %2051
      %2053 = vrot.lane.b32.xlu0 %v1834, 124
      %v2054 = vpop.permute.xlu0 %2053
      %2059 = vrot.lane.b32.xlu0 %v1831, 12
      %v2060 = vpop.permute.xlu0 %2059
      %2061 = vrot.lane.b32.xlu0 %v1832, 12
      %v2062 = vpop.permute.xlu0 %2061
      %2063 = vrot.lane.b32.xlu0 %v1833, 12
      %v2064 = vpop.permute.xlu0 %2063
      %2065 = vrot.lane.b32.xlu0 %v1834, 12
      %v2066 = vpop.permute.xlu0 %2065
      %v2071 = vsel %vm1684, %v2048, %v2060
      %v2072 = vsel %vm1684, %v2050, %v2062
      %v2073 = vsel %vm1684, %v2052, %v2064
      %v2074 = vsel %vm1684, %v2054, %v2066
      %v2075 = vmul.f32 %v2071, %v1690
      %v2076 = vmul.f32 %v2072, %v1690
      %v2077 = vmul.f32 %v2073, %v1690
      %v2078 = vmul.f32 %v2074, %v1690
      %2079 = vrot.lane.b32.xlu0 %v1831, 123
      %v2080 = vpop.permute.xlu0 %2079
      %2081 = vrot.lane.b32.xlu0 %v1832, 123
      %v2082 = vpop.permute.xlu0 %2081
      %2083 = vrot.lane.b32.xlu0 %v1833, 123
      %v2084 = vpop.permute.xlu0 %2083
      %2085 = vrot.lane.b32.xlu0 %v1834, 123
      %v2086 = vpop.permute.xlu0 %2085
      %2091 = vrot.lane.b32.xlu0 %v1831, 11
      %v2092 = vpop.permute.xlu0 %2091
      %2093 = vrot.lane.b32.xlu0 %v1832, 11
      %v2094 = vpop.permute.xlu0 %2093
      %2095 = vrot.lane.b32.xlu0 %v1833, 11
      %v2096 = vpop.permute.xlu0 %2095
      %2097 = vrot.lane.b32.xlu0 %v1834, 11
      %v2098 = vpop.permute.xlu0 %2097
      %v2103 = vsel %vm1705, %v2080, %v2092
      %v2104 = vsel %vm1705, %v2082, %v2094
      %v2105 = vsel %vm1705, %v2084, %v2096
      %v2106 = vsel %vm1705, %v2086, %v2098
      %v2107 = vmul.f32 %v2103, %v1711
      %v2108 = vmul.f32 %v2104, %v1711
      %v2109 = vmul.f32 %v2105, %v1711
      %v2110 = vmul.f32 %v2106, %v1711
      %2112 = vset.pattern.permute.xlu0 0
      %2113 = vperm.xlu0 %2112, %v1847
      %v2114 = vpop.permute.xlu0 %2113
      %2117 = vset.pattern.permute.xlu0 0
      %2118 = vperm.xlu0 %2117, %v1848
      %v2119 = vpop.permute.xlu0 %2118
      %2122 = vset.pattern.permute.xlu0 0
      %2123 = vperm.xlu0 %2122, %v1849
      %v2124 = vpop.permute.xlu0 %2123
      %2127 = vset.pattern.permute.xlu0 0
      %2128 = vperm.xlu0 %2127, %v1850
      %v2129 = vpop.permute.xlu0 %2128
      %vm2131 = vcmask 261120
      %v2133 = vsel %vm2131, %v1837, 0
      %v2136 = vsel %vm2131, %v1840, 0
      %v2139 = vsel %vm2131, %v1843, 0
      %v2142 = vsel %vm2131, %v1846, 0
      %2144 = vmatprep.subr.mxu0 0.0
      %2145 = vmatpush1.msra.mxu0 %v1883
      %2146 = vmatprep.subr.mxu0 0.0
      %2147 = vmatpush1.msra.mxu0 %v1884
      %2148 = vmatprep.subr.mxu0 0.0
      %2149 = vmatpush1.msra.mxu0 %v1885
      %2150 = vmatprep.subr.mxu0 0.0
      %2151 = vmatpush1.msra.mxu0 %v1886
      %2152 = vmatprep.subr.mxu0 0.0
      %2153 = vmatpush1.msra.mxu0 %v1915
      %2154 = vmatprep.subr.mxu0 0.0
      %2155 = vmatpush1.msra.mxu0 %v1916
      %2156 = vmatprep.subr.mxu0 0.0
      %2157 = vmatpush1.msra.mxu0 %v1917
      %2158 = vmatprep.subr.mxu0 0.0
      %2159 = vmatpush1.msra.mxu0 %v1918
      %2160 = vmatprep.subr.mxu0 0.0
      %2161 = vmatpush1.msra.mxu0 %v1947
      %2162 = vmatprep.subr.mxu0 0.0
      %2163 = vmatpush1.msra.mxu0 %v1948
      %2164 = vmatprep.subr.mxu0 0.0
      %2165 = vmatpush1.msra.mxu0 %v1949
      %2166 = vmatprep.subr.mxu0 0.0
      %2167 = vmatpush1.msra.mxu0 %v1950
      %2168 = vmatprep.subr.mxu0 0.0
      %2169 = vmatpush1.msra.mxu0 %v1979
      %2170 = vmatprep.subr.mxu0 0.0
      %2171 = vmatpush1.msra.mxu0 %v1980
      %2172 = vmatprep.subr.mxu0 0.0
      %2173 = vmatpush1.msra.mxu0 %v1981
      %2174 = vmatprep.subr.mxu0 0.0
      %2175 = vmatpush1.msra.mxu0 %v1982
      %2176 = vmatprep.subr.mxu0 0.0
      %2177 = vmatpush1.msra.mxu0 %v1831
      %2178 = vmatprep.subr.mxu0 0.0
      %2179 = vmatpush1.msra.mxu0 %v1832
      %2180 = vmatprep.subr.mxu0 0.0
      %2181 = vmatpush1.msra.mxu0 %v1833
      %2182 = vmatprep.subr.mxu0 0.0
      %2183 = vmatpush1.msra.mxu0 %v1834
      %2184 = vmatprep.subr.mxu0 0.0
      %2185 = vmatpush1.msra.mxu0 %v2011
      %2186 = vmatprep.subr.mxu0 0.0
      %2187 = vmatpush1.msra.mxu0 %v2012
      %2188 = vmatprep.subr.mxu0 0.0
      %2189 = vmatpush1.msra.mxu0 %v2013
      %2190 = vmatprep.subr.mxu0 0.0
      %2191 = vmatpush1.msra.mxu0 %v2014
      %2192 = vmatprep.subr.mxu0 0.0
      %2193 = vmatpush1.msra.mxu0 %v2043
      %2194 = vmatprep.subr.mxu0 0.0
      %2195 = vmatpush1.msra.mxu0 %v2044
      %2196 = vmatprep.subr.mxu0 0.0
      %2197 = vmatpush1.msra.mxu0 %v2045
      %2198 = vmatprep.subr.mxu0 0.0
      %2199 = vmatpush1.msra.mxu0 %v2046
      %2200 = vmatprep.subr.mxu0 0.0
      %2201 = vmatpush1.msra.mxu0 %v2075
      %2202 = vmatprep.subr.mxu0 0.0
      %2203 = vmatpush1.msra.mxu0 %v2076
      %2204 = vmatprep.subr.mxu0 0.0
      %2205 = vmatpush1.msra.mxu0 %v2077
      %2206 = vmatprep.subr.mxu0 0.0
      %2207 = vmatpush1.msra.mxu0 %v2078
      %2208 = vmatprep.mubr.f32.mxu0 %v1836
      %2209 = vmatmul.mubr.f32.gmra.mrb[0].mxu0 %v1835
      %v2210 = vpop.f32.mrb[0].mxu0
      %v2211 = vadd.f32 %v2114, %v2210
      %v2212 = vpop.f32.mrb[0].mxu0
      %2213 = vmatprep.mubr.f32.mxu0 %v1839
      %2214 = vmatmul.mubr.f32.gmra.mrb[0].mxu0 %v1838
      %v2215 = vpop.f32.mrb[0].mxu0
      %v2216 = vadd.f32 %v2119, %v2215
      %v2217 = vpop.f32.mrb[0].mxu0
      %2218 = vmatprep.mubr.f32.mxu0 %v1842
      %2219 = vmatmul.mubr.f32.gmra.mrb[0].mxu0 %v1841
      %v2220 = vpop.f32.mrb[0].mxu0
      %v2221 = vadd.f32 %v2124, %v2220
      %v2222 = vpop.f32.mrb[0].mxu0
      %2223 = vmatprep.mubr.f32.mxu0 %v1845
      %2224 = vmatmul.mubr.f32.gmra.mrb[0].mxu0 %v1844
      %v2225 = vpop.f32.mrb[0].mxu0
      %v2226 = vadd.f32 %v2129, %v2225
      %v2227 = vpop.f32.mrb[0].mxu0
      %2228 = vdwg.mxu0
      %2229 = vmatprep.subr.mxu0 0.0
      %2230 = vmatpush1.msra.mxu0 %v2107
      %2231 = vmatprep.subr.mxu0 0.0
      %2232 = vmatpush1.msra.mxu0 %v2108
      %2233 = vmatprep.subr.mxu0 0.0
      %2234 = vmatpush1.msra.mxu0 %v2109
      %2235 = vmatprep.subr.mxu0 0.0
      %2236 = vmatpush1.msra.mxu0 %v2110
      %2237 = vmatprep.subr.mxu0 0.0
      %2238 = vmatpush1.msra.mxu0 0.0
      %2239 = vmatprep.subr.mxu0 0.0
      %2240 = vmatpush1.msra.mxu0 0.0
      %2241 = vmatprep.subr.mxu0 0.0
      %2242 = vmatpush1.msra.mxu0 0.0
      %2243 = vmatprep.subr.mxu0 0.0
      %2244 = vmatpush1.msra.mxu0 0.0
      %2245 = vmatprep.subr.mxu0 0.0
      %2246 = vmatpush1.msra.mxu0 0.0
      %2247 = vmatprep.subr.mxu0 0.0
      %2248 = vmatpush1.msra.mxu0 0.0
      %2249 = vmatprep.subr.mxu0 0.0
      %2250 = vmatpush1.msra.mxu0 0.0
      %2251 = vmatprep.subr.mxu0 0.0
      %2252 = vmatpush1.msra.mxu0 0.0
      %2253 = vmatprep.subr.mxu0 0.0
      %2254 = vmatpush1.msra.mxu0 0.0
      %2255 = vmatprep.subr.mxu0 0.0
      %2256 = vmatpush1.msra.mxu0 0.0
      %2257 = vmatprep.subr.mxu0 0.0
      %2258 = vmatpush1.msra.mxu0 0.0
      %2259 = vmatprep.subr.mxu0 0.0
      %2260 = vmatpush1.msra.mxu0 0.0
      %2261 = vmatprep.subr.mxu0 0.0
      %2262 = vmatpush1.msra.mxu0 0.0
      %2263 = vmatprep.subr.mxu0 0.0
      %2264 = vmatpush1.msra.mxu0 0.0
      %2265 = vmatprep.subr.mxu0 0.0
      %2266 = vmatpush1.msra.mxu0 0.0
      %2267 = vmatprep.subr.mxu0 0.0
      %2268 = vmatpush1.msra.mxu0 0.0
      %2269 = vmatprep.subr.mxu0 0.0
      %2270 = vmatpush1.msra.mxu0 0.0
      %2271 = vmatprep.subr.mxu0 0.0
      %2272 = vmatpush1.msra.mxu0 0.0
      %2273 = vmatprep.subr.mxu0 0.0
      %2274 = vmatpush1.msra.mxu0 0.0
      %2275 = vmatprep.subr.mxu0 0.0
      %2276 = vmatpush1.msra.mxu0 0.0
      %2277 = vmatprep.subr.mxu0 0.0
      %2278 = vmatpush1.msra.mxu0 0.0
      %2279 = vmatprep.subr.mxu0 0.0
      %2280 = vmatpush1.msra.mxu0 0.0
      %2281 = vmatprep.subr.mxu0 0.0
      %2282 = vmatpush1.msra.mxu0 0.0
      %2283 = vmatprep.subr.mxu0 0.0
      %2284 = vmatpush1.msra.mxu0 0.0
      %2285 = vmatprep.subr.mxu0 0.0
      %2286 = vmatpush1.msra.mxu0 0.0
      %2287 = vmatprep.subr.mxu0 0.0
      %2288 = vmatpush1.msra.mxu0 0.0
      %2289 = vmatprep.subr.mxu0 0.0
      %2290 = vmatpush1.msra.mxu0 0.0
      %2291 = vmatprep.subr.mxu0 0.0
      %2292 = vmatpush1.msra.mxu0 0.0
      %2293 = vmatprep.mubr.f32.mxu0 0.0
      %2294 = vmatmul.mubr.f32.gmra.mrb[0].mxu0 %v2133
      %v2295 = vpop.f32.mrb[0].mxu0
      %v2296 = vadd.f32 %v2211, %v2295
      %v2297 = vpop.f32.mrb[0].mxu0
      %2298 = vmatprep.mubr.f32.mxu0 0.0
      %2299 = vmatmul.mubr.f32.gmra.mrb[0].mxu0 %v2136
      %v2300 = vpop.f32.mrb[0].mxu0
      %v2301 = vadd.f32 %v2216, %v2300
      %v2302 = vpop.f32.mrb[0].mxu0
      %2303 = vmatprep.mubr.f32.mxu0 0.0
      %2304 = vmatmul.mubr.f32.gmra.mrb[0].mxu0 %v2139
      %v2305 = vpop.f32.mrb[0].mxu0
      %v2306 = vadd.f32 %v2221, %v2305
      %v2307 = vpop.f32.mrb[0].mxu0
      %2308 = vmatprep.mubr.f32.mxu0 0.0
      %2309 = vmatmul.mubr.f32.gmra.mrb[0].mxu0 %v2142
      %v2310 = vpop.f32.mrb[0].mxu0
      %v2311 = vadd.f32 %v2226, %v2310
      %v2312 = vpop.f32.mrb[0].mxu0
      %2313 = vdwg.mxu0
      %v2314 = vmax.f32 %v2296, 0.0
      %v2315 = vmax.f32 %v2301, 0.0
      %v2316 = vmax.f32 %v2306, 0.0
      %v2317 = vmax.f32 %v2311, 0.0
      %v2318 = vld [vmem:[%s8] sm:$0xff]
      %v2319 = vld [vmem:[%s8 + $0x8] sm:$0xff]
      %v2321 = vsel %vm437, %v2314, 0
      %v2324 = vsel %vm437, %v2315, 0
      %v2327 = vsel %vm437, %v2316, 0
      %v2330 = vsel %vm437, %v2317, 0
      %2332 = vmatprep.subr.mxu0 0.0
      %2333 = vmatpush1.msra.mxu0 %v2318
      %2334 = vmatprep.subr.mxu0 0.0
      %2335 = vmatpush1.msra.mxu0 %v2319
      %2336 = vmatprep.subr.mxu0 0.0
      %2337 = vmatpush1.msra.mxu0 0.0
      %2338 = vmatprep.subr.mxu0 0.0
      %2339 = vmatpush1.msra.mxu0 0.0
      %2340 = vmatprep.subr.mxu0 0.0
      %2341 = vmatpush1.msra.mxu0 0.0
      %2342 = vmatprep.subr.mxu0 0.0
      %2343 = vmatpush1.msra.mxu0 0.0
      %2344 = vmatprep.subr.mxu0 0.0
      %2345 = vmatpush1.msra.mxu0 0.0
      %2346 = vmatprep.subr.mxu0 0.0
      %2347 = vmatpush1.msra.mxu0 0.0
      %2348 = vmatprep.subr.mxu0 0.0
      %2349 = vmatpush1.msra.mxu0 0.0
      %2350 = vmatprep.subr.mxu0 0.0
      %2351 = vmatpush1.msra.mxu0 0.0
      %2352 = vmatprep.subr.mxu0 0.0
      %2353 = vmatpush1.msra.mxu0 0.0
      %2354 = vmatprep.subr.mxu0 0.0
      %2355 = vmatpush1.msra.mxu0 0.0
      %2356 = vmatprep.subr.mxu0 0.0
      %2357 = vmatpush1.msra.mxu0 0.0
      %2358 = vmatprep.subr.mxu0 0.0
      %2359 = vmatpush1.msra.mxu0 0.0
      %2360 = vmatprep.subr.mxu0 0.0
      %2361 = vmatpush1.msra.mxu0 0.0
      %2362 = vmatprep.subr.mxu0 0.0
      %2363 = vmatpush1.msra.mxu0 0.0
      %2364 = vmatprep.subr.mxu0 0.0
      %2365 = vmatpush1.msra.mxu0 0.0
      %2366 = vmatprep.subr.mxu0 0.0
      %2367 = vmatpush1.msra.mxu0 0.0
      %2368 = vmatprep.subr.mxu0 0.0
      %2369 = vmatpush1.msra.mxu0 0.0
      %2370 = vmatprep.subr.mxu0 0.0
      %2371 = vmatpush1.msra.mxu0 0.0
      %2372 = vmatprep.subr.mxu0 0.0
      %2373 = vmatpush1.msra.mxu0 0.0
      %2374 = vmatprep.subr.mxu0 0.0
      %2375 = vmatpush1.msra.mxu0 0.0
      %2376 = vmatprep.subr.mxu0 0.0
      %2377 = vmatpush1.msra.mxu0 0.0
      %2378 = vmatprep.subr.mxu0 0.0
      %2379 = vmatpush1.msra.mxu0 0.0
      %2380 = vmatprep.subr.mxu0 0.0
      %2381 = vmatpush1.msra.mxu0 0.0
      %2382 = vmatprep.subr.mxu0 0.0
      %2383 = vmatpush1.msra.mxu0 0.0
      %2384 = vmatprep.subr.mxu0 0.0
      %2385 = vmatpush1.msra.mxu0 0.0
      %2386 = vmatprep.subr.mxu0 0.0
      %2387 = vmatpush1.msra.mxu0 0.0
      %2388 = vmatprep.subr.mxu0 0.0
      %2389 = vmatpush1.msra.mxu0 0.0
      %2390 = vmatprep.subr.mxu0 0.0
      %2391 = vmatpush1.msra.mxu0 0.0
      %2392 = vmatprep.subr.mxu0 0.0
      %2393 = vmatpush1.msra.mxu0 0.0
      %2394 = vmatprep.subr.mxu0 0.0
      %2395 = vmatpush1.msra.mxu0 0.0
      %2396 = vmatprep.mubr.f32.mxu0 0.0
      %2397 = vmatmul.mubr.f32.gmra.mrb[0].mxu0 %v2321
      %v2398 = vpop.f32.mrb[0].mxu0
      %v2399 = vadd.f32 0.0, %v2398
      %v2400 = vpop.f32.mrb[0].mxu0
      %2401 = vmatprep.mubr.f32.mxu0 0.0
      %2402 = vmatmul.mubr.f32.gmra.mrb[0].mxu0 %v2324
      %v2403 = vpop.f32.mrb[0].mxu0
      %v2404 = vadd.f32 0.0, %v2403
      %v2405 = vpop.f32.mrb[0].mxu0
      %2406 = vmatprep.mubr.f32.mxu0 0.0
      %2407 = vmatmul.mubr.f32.gmra.mrb[0].mxu0 %v2327
      %v2408 = vpop.f32.mrb[0].mxu0
      %v2409 = vadd.f32 0.0, %v2408
      %v2410 = vpop.f32.mrb[0].mxu0
      %2411 = vmatprep.mubr.f32.mxu0 0.0
      %2412 = vmatmul.mubr.f32.gmra.mrb[0].mxu0 %v2330
      %v2413 = vpop.f32.mrb[0].mxu0
      %v2414 = vadd.f32 0.0, %v2413
      %v2415 = vpop.f32.mrb[0].mxu0
      %2416 = vdwg.mxu0
      %v2417 = vld [vmem:[%s1 + $0x1c0] sm:$0xff]
      %v2418 = vld [vmem:[%s1 + $0x1c8] sm:$0xff]
      %v2419 = vld [vmem:[%s1 + $0x1d0] sm:$0xff]
      %v2420 = vld [vmem:[%s1 + $0x1d8] sm:$0xff]
      %v2421 = vld [vmem:[%s1 + $0x1e0] sm:$0xff]
      %v2422 = vld [vmem:[%s1 + $0x1e8] sm:$0xff]
      %v2423 = vld [vmem:[%s1 + $0x1f0] sm:$0xff]
      %v2424 = vld [vmem:[%s1 + $0x1f8] sm:$0xff]
      %v2425 = vld [vmem:[%s2 + $0x70] sm:$0xff]
      %v2426 = vld [vmem:[%s2 + $0x78] sm:$0xff]
      %2431 = vrot.lane.b32.xlu0 %v2399, 73
      %v2432 = vpop.permute.xlu0 %2431
      %2433 = vrot.lane.b32.xlu0 %v2404, 73
      %v2434 = vpop.permute.xlu0 %2433
      %2435 = vrot.lane.b32.xlu0 %v2409, 73
      %v2436 = vpop.permute.xlu0 %2435
      %2437 = vrot.lane.b32.xlu0 %v2414, 73
      %v2438 = vpop.permute.xlu0 %2437
      %2439 = vrot.lane.b32.xlu0 %v1392, 73
      %v2440 = vpop.permute.xlu0 %2439
      %2441 = vrot.lane.b32.xlu0 %v1393, 73
      %v2442 = vpop.permute.xlu0 %2441
      %2449 = vrot.lane.b32.xlu0 %v2399, 9
      %v2450 = vpop.permute.xlu0 %2449
      %2451 = vrot.lane.b32.xlu0 %v2404, 9
      %v2452 = vpop.permute.xlu0 %2451
      %2453 = vrot.lane.b32.xlu0 %v2409, 9
      %v2454 = vpop.permute.xlu0 %2453
      %2455 = vrot.lane.b32.xlu0 %v2414, 9
      %v2456 = vpop.permute.xlu0 %2455
      %2457 = vrot.lane.b32.xlu0 %v1392, 9
      %v2458 = vpop.permute.xlu0 %2457
      %2459 = vrot.lane.b32.xlu0 %v1393, 9
      %v2460 = vpop.permute.xlu0 %2459
      %v2467 = vsel %vm975, %v2432, %v2450
      %v2468 = vsel %vm975, %v2434, %v2452
      %v2469 = vsel %vm975, %v2436, %v2454
      %v2470 = vsel %vm975, %v2438, %v2456
      %v2471 = vsel %vm975, %v2440, %v2458
      %v2472 = vsel %vm975, %v2442, %v2460
      %v2473 = vmul.f32 %v2467, %v980
      %v2474 = vmul.f32 %v2468, %v980
      %v2475 = vmul.f32 %v2469, %v980
      %v2476 = vmul.f32 %v2470, %v980
      %v2477 = vmul.f32 %v2471, %v980
      %v2478 = vmul.f32 %v2472, %v980
      %2479 = vrot.lane.b32.xlu0 %v2399, 72
      %v2480 = vpop.permute.xlu0 %2479
      %2481 = vrot.lane.b32.xlu0 %v2404, 72
      %v2482 = vpop.permute.xlu0 %2481
      %2483 = vrot.lane.b32.xlu0 %v2409, 72
      %v2484 = vpop.permute.xlu0 %2483
      %2485 = vrot.lane.b32.xlu0 %v2414, 72
      %v2486 = vpop.permute.xlu0 %2485
      %2487 = vrot.lane.b32.xlu0 %v1392, 72
      %v2488 = vpop.permute.xlu0 %2487
      %2489 = vrot.lane.b32.xlu0 %v1393, 72
      %v2490 = vpop.permute.xlu0 %2489
      %2497 = vrot.lane.b32.xlu0 %v2399, 8
      %v2498 = vpop.permute.xlu0 %2497
      %2499 = vrot.lane.b32.xlu0 %v2404, 8
      %v2500 = vpop.permute.xlu0 %2499
      %2501 = vrot.lane.b32.xlu0 %v2409, 8
      %v2502 = vpop.permute.xlu0 %2501
      %2503 = vrot.lane.b32.xlu0 %v2414, 8
      %v2504 = vpop.permute.xlu0 %2503
      %2505 = vrot.lane.b32.xlu0 %v1392, 8
      %v2506 = vpop.permute.xlu0 %2505
      %2507 = vrot.lane.b32.xlu0 %v1393, 8
      %v2508 = vpop.permute.xlu0 %2507
      %v2515 = vsel %vm988, %v2480, %v2498
      %v2516 = vsel %vm988, %v2482, %v2500
      %v2517 = vsel %vm988, %v2484, %v2502
      %v2518 = vsel %vm988, %v2486, %v2504
      %v2519 = vsel %vm988, %v2488, %v2506
      %v2520 = vsel %vm988, %v2490, %v2508
      %v2521 = vmul.f32 %v2515, %v993
      %v2522 = vmul.f32 %v2516, %v993
      %v2523 = vmul.f32 %v2517, %v993
      %v2524 = vmul.f32 %v2518, %v993
      %v2525 = vmul.f32 %v2519, %v993
      %v2526 = vmul.f32 %v2520, %v993
      %2527 = vrot.lane.b32.xlu0 %v2399, 71
      %v2528 = vpop.permute.xlu0 %2527
      %2529 = vrot.lane.b32.xlu0 %v2404, 71
      %v2530 = vpop.permute.xlu0 %2529
      %2531 = vrot.lane.b32.xlu0 %v2409, 71
      %v2532 = vpop.permute.xlu0 %2531
      %2533 = vrot.lane.b32.xlu0 %v2414, 71
      %v2534 = vpop.permute.xlu0 %2533
      %2535 = vrot.lane.b32.xlu0 %v1392, 71
      %v2536 = vpop.permute.xlu0 %2535
      %2537 = vrot.lane.b32.xlu0 %v1393, 71
      %v2538 = vpop.permute.xlu0 %2537
      %2545 = vrot.lane.b32.xlu0 %v2399, 7
      %v2546 = vpop.permute.xlu0 %2545
      %2547 = vrot.lane.b32.xlu0 %v2404, 7
      %v2548 = vpop.permute.xlu0 %2547
      %2549 = vrot.lane.b32.xlu0 %v2409, 7
      %v2550 = vpop.permute.xlu0 %2549
      %2551 = vrot.lane.b32.xlu0 %v2414, 7
      %v2552 = vpop.permute.xlu0 %2551
      %2553 = vrot.lane.b32.xlu0 %v1392, 7
      %v2554 = vpop.permute.xlu0 %2553
      %2555 = vrot.lane.b32.xlu0 %v1393, 7
      %v2556 = vpop.permute.xlu0 %2555
      %v2563 = vsel %vm1001, %v2528, %v2546
      %v2564 = vsel %vm1001, %v2530, %v2548
      %v2565 = vsel %vm1001, %v2532, %v2550
      %v2566 = vsel %vm1001, %v2534, %v2552
      %v2567 = vsel %vm1001, %v2536, %v2554
      %v2568 = vsel %vm1001, %v2538, %v2556
      %v2569 = vmul.f32 %v2563, %v1006
      %v2570 = vmul.f32 %v2564, %v1006
      %v2571 = vmul.f32 %v2565, %v1006
      %v2572 = vmul.f32 %v2566, %v1006
      %v2573 = vmul.f32 %v2567, %v1006
      %v2574 = vmul.f32 %v2568, %v1006
      %2575 = vrot.lane.b32.xlu0 %v2399, 65
      %v2576 = vpop.permute.xlu0 %2575
      %2577 = vrot.lane.b32.xlu0 %v2404, 65
      %v2578 = vpop.permute.xlu0 %2577
      %2579 = vrot.lane.b32.xlu0 %v2409, 65
      %v2580 = vpop.permute.xlu0 %2579
      %2581 = vrot.lane.b32.xlu0 %v2414, 65
      %v2582 = vpop.permute.xlu0 %2581
      %2583 = vrot.lane.b32.xlu0 %v1392, 65
      %v2584 = vpop.permute.xlu0 %2583
      %2585 = vrot.lane.b32.xlu0 %v1393, 65
      %v2586 = vpop.permute.xlu0 %2585
      %2593 = vrot.lane.b32.xlu0 %v2399, 1
      %v2594 = vpop.permute.xlu0 %2593
      %2595 = vrot.lane.b32.xlu0 %v2404, 1
      %v2596 = vpop.permute.xlu0 %2595
      %2597 = vrot.lane.b32.xlu0 %v2409, 1
      %v2598 = vpop.permute.xlu0 %2597
      %2599 = vrot.lane.b32.xlu0 %v2414, 1
      %v2600 = vpop.permute.xlu0 %2599
      %2601 = vrot.lane.b32.xlu0 %v1392, 1
      %v2602 = vpop.permute.xlu0 %2601
      %2603 = vrot.lane.b32.xlu0 %v1393, 1
      %v2604 = vpop.permute.xlu0 %2603
      %v2611 = vsel %vm477, %v2576, %v2594
      %v2612 = vsel %vm477, %v2578, %v2596
      %v2613 = vsel %vm477, %v2580, %v2598
      %v2614 = vsel %vm477, %v2582, %v2600
      %v2615 = vsel %vm477, %v2584, %v2602
      %v2616 = vsel %vm477, %v2586, %v2604
      %v2617 = vmul.f32 %v2611, %v1018
      %v2618 = vmul.f32 %v2612, %v1018
      %v2619 = vmul.f32 %v2613, %v1018
      %v2620 = vmul.f32 %v2614, %v1018
      %v2621 = vmul.f32 %v2615, %v1018
      %v2622 = vmul.f32 %v2616, %v1018
      %2623 = vrot.lane.b32.xlu0 %v2399, 127
      %v2624 = vpop.permute.xlu0 %2623
      %2625 = vrot.lane.b32.xlu0 %v2404, 127
      %v2626 = vpop.permute.xlu0 %2625
      %2627 = vrot.lane.b32.xlu0 %v2409, 127
      %v2628 = vpop.permute.xlu0 %2627
      %2629 = vrot.lane.b32.xlu0 %v2414, 127
      %v2630 = vpop.permute.xlu0 %2629
      %2635 = vrot.lane.b32.xlu0 %v2399, 63
      %v2636 = vpop.permute.xlu0 %2635
      %2637 = vrot.lane.b32.xlu0 %v2404, 63
      %v2638 = vpop.permute.xlu0 %2637
      %2639 = vrot.lane.b32.xlu0 %v2409, 63
      %v2640 = vpop.permute.xlu0 %2639
      %2641 = vrot.lane.b32.xlu0 %v2414, 63
      %v2642 = vpop.permute.xlu0 %2641
      %v2647 = vsel %vm1026, %v2624, %v2636
      %v2648 = vsel %vm1026, %v2626, %v2638
      %v2649 = vsel %vm1026, %v2628, %v2640
      %v2650 = vsel %vm1026, %v2630, %v2642
      %v2651 = vmul.f32 %v2647, %v1031
      %v2652 = vmul.f32 %v2648, %v1031
      %v2653 = vmul.f32 %v2649, %v1031
      %v2654 = vmul.f32 %v2650, %v1031
      %v2655 = vmul.f32 %v1416, %v1031
      %v2656 = vmul.f32 %v1417, %v1031
      %2657 = vrot.lane.b32.xlu0 %v2399, 121
      %v2658 = vpop.permute.xlu0 %2657
      %2659 = vrot.lane.b32.xlu0 %v2404, 121
      %v2660 = vpop.permute.xlu0 %2659
      %2661 = vrot.lane.b32.xlu0 %v2409, 121
      %v2662 = vpop.permute.xlu0 %2661
      %2663 = vrot.lane.b32.xlu0 %v2414, 121
      %v2664 = vpop.permute.xlu0 %2663
      %2665 = vrot.lane.b32.xlu0 %v1392, 121
      %v2666 = vpop.permute.xlu0 %2665
      %2667 = vrot.lane.b32.xlu0 %v1393, 121
      %v2668 = vpop.permute.xlu0 %2667
      %2675 = vrot.lane.b32.xlu0 %v2399, 57
      %v2676 = vpop.permute.xlu0 %2675
      %2677 = vrot.lane.b32.xlu0 %v2404, 57
      %v2678 = vpop.permute.xlu0 %2677
      %2679 = vrot.lane.b32.xlu0 %v2409, 57
      %v2680 = vpop.permute.xlu0 %2679
      %2681 = vrot.lane.b32.xlu0 %v2414, 57
      %v2682 = vpop.permute.xlu0 %2681
      %2683 = vrot.lane.b32.xlu0 %v1392, 57
      %v2684 = vpop.permute.xlu0 %2683
      %2685 = vrot.lane.b32.xlu0 %v1393, 57
      %v2686 = vpop.permute.xlu0 %2685
      %v2693 = vsel %vm1039, %v2658, %v2676
      %v2694 = vsel %vm1039, %v2660, %v2678
      %v2695 = vsel %vm1039, %v2662, %v2680
      %v2696 = vsel %vm1039, %v2664, %v2682
      %v2697 = vsel %vm1039, %v2666, %v2684
      %v2698 = vsel %vm1039, %v2668, %v2686
      %v2699 = vmul.f32 %v2693, %v1044
      %v2700 = vmul.f32 %v2694, %v1044
      %v2701 = vmul.f32 %v2695, %v1044
      %v2702 = vmul.f32 %v2696, %v1044
      %v2703 = vmul.f32 %v2697, %v1044
      %v2704 = vmul.f32 %v2698, %v1044
      %2705 = vrot.lane.b32.xlu0 %v2399, 120
      %v2706 = vpop.permute.xlu0 %2705
      %2707 = vrot.lane.b32.xlu0 %v2404, 120
      %v2708 = vpop.permute.xlu0 %2707
      %2709 = vrot.lane.b32.xlu0 %v2409, 120
      %v2710 = vpop.permute.xlu0 %2709
      %2711 = vrot.lane.b32.xlu0 %v2414, 120
      %v2712 = vpop.permute.xlu0 %2711
      %2717 = vrot.lane.b32.xlu0 %v2399, 56
      %v2718 = vpop.permute.xlu0 %2717
      %2719 = vrot.lane.b32.xlu0 %v2404, 56
      %v2720 = vpop.permute.xlu0 %2719
      %2721 = vrot.lane.b32.xlu0 %v2409, 56
      %v2722 = vpop.permute.xlu0 %2721
      %2723 = vrot.lane.b32.xlu0 %v2414, 56
      %v2724 = vpop.permute.xlu0 %2723
      %v2729 = vsel %vm1052, %v2706, %v2718
      %v2730 = vsel %vm1052, %v2708, %v2720
      %v2731 = vsel %vm1052, %v2710, %v2722
      %v2732 = vsel %vm1052, %v2712, %v2724
      %v2733 = vmul.f32 %v2729, %v1057
      %v2734 = vmul.f32 %v2730, %v1057
      %v2735 = vmul.f32 %v2731, %v1057
      %v2736 = vmul.f32 %v2732, %v1057
      %v2737 = vmul.f32 %v1432, %v1057
      %v2738 = vmul.f32 %v1433, %v1057
      %2739 = vrot.lane.b32.xlu0 %v2399, 119
      %v2740 = vpop.permute.xlu0 %2739
      %2741 = vrot.lane.b32.xlu0 %v2404, 119
      %v2742 = vpop.permute.xlu0 %2741
      %2743 = vrot.lane.b32.xlu0 %v2409, 119
      %v2744 = vpop.permute.xlu0 %2743
      %2745 = vrot.lane.b32.xlu0 %v2414, 119
      %v2746 = vpop.permute.xlu0 %2745
      %2751 = vrot.lane.b32.xlu0 %v2399, 55
      %v2752 = vpop.permute.xlu0 %2751
      %2753 = vrot.lane.b32.xlu0 %v2404, 55
      %v2754 = vpop.permute.xlu0 %2753
      %2755 = vrot.lane.b32.xlu0 %v2409, 55
      %v2756 = vpop.permute.xlu0 %2755
      %2757 = vrot.lane.b32.xlu0 %v2414, 55
      %v2758 = vpop.permute.xlu0 %2757
      %v2763 = vsel %vm1065, %v2740, %v2752
      %v2764 = vsel %vm1065, %v2742, %v2754
      %v2765 = vsel %vm1065, %v2744, %v2756
      %v2766 = vsel %vm1065, %v2746, %v2758
      %v2767 = vmul.f32 %v2763, %v1070
      %v2768 = vmul.f32 %v2764, %v1070
      %v2769 = vmul.f32 %v2765, %v1070
      %v2770 = vmul.f32 %v2766, %v1070
      %v2771 = vmul.f32 %v1446, %v1070
      %v2772 = vmul.f32 %v1447, %v1070
      %2774 = vset.pattern.permute.xlu0 0
      %2775 = vperm.xlu0 %2774, %v2425
      %v2776 = vpop.permute.xlu0 %2775
      %2779 = vset.pattern.permute.xlu0 0
      %2780 = vperm.xlu0 %2779, %v2426
      %v2781 = vpop.permute.xlu0 %2780
      %vm2783 = vcmask 392192
      %v2785 = vsel %vm2783, %v2420, 0
      %v2788 = vsel %vm2783, %v2424, 0
      %2790 = vmatprep.subr.mxu0 0.0
      %2791 = vmatpush1.msra.mxu0 %v2473
      %2792 = vmatprep.subr.mxu0 0.0
      %2793 = vmatpush1.msra.mxu0 %v2474
      %2794 = vmatprep.subr.mxu0 0.0
      %2795 = vmatpush1.msra.mxu0 %v2475
      %2796 = vmatprep.subr.mxu0 0.0
      %2797 = vmatpush1.msra.mxu0 %v2476
      %2798 = vmatprep.subr.mxu0 0.0
      %2799 = vmatpush1.msra.mxu0 %v2477
      %2800 = vmatprep.subr.mxu0 0.0
      %2801 = vmatpush1.msra.mxu0 %v2478
      %2802 = vmatprep.subr.mxu0 0.0
      %2803 = vmatpush1.msra.mxu0 %v2521
      %2804 = vmatprep.subr.mxu0 0.0
      %2805 = vmatpush1.msra.mxu0 %v2522
      %2806 = vmatprep.subr.mxu0 0.0
      %2807 = vmatpush1.msra.mxu0 %v2523
      %2808 = vmatprep.subr.mxu0 0.0
      %2809 = vmatpush1.msra.mxu0 %v2524
      %2810 = vmatprep.subr.mxu0 0.0
      %2811 = vmatpush1.msra.mxu0 %v2525
      %2812 = vmatprep.subr.mxu0 0.0
      %2813 = vmatpush1.msra.mxu0 %v2526
      %2814 = vmatprep.subr.mxu0 0.0
      %2815 = vmatpush1.msra.mxu0 %v2569
      %2816 = vmatprep.subr.mxu0 0.0
      %2817 = vmatpush1.msra.mxu0 %v2570
      %2818 = vmatprep.subr.mxu0 0.0
      %2819 = vmatpush1.msra.mxu0 %v2571
      %2820 = vmatprep.subr.mxu0 0.0
      %2821 = vmatpush1.msra.mxu0 %v2572
      %2822 = vmatprep.subr.mxu0 0.0
      %2823 = vmatpush1.msra.mxu0 %v2573
      %2824 = vmatprep.subr.mxu0 0.0
      %2825 = vmatpush1.msra.mxu0 %v2574
      %2826 = vmatprep.subr.mxu0 0.0
      %2827 = vmatpush1.msra.mxu0 %v2617
      %2828 = vmatprep.subr.mxu0 0.0
      %2829 = vmatpush1.msra.mxu0 %v2618
      %2830 = vmatprep.subr.mxu0 0.0
      %2831 = vmatpush1.msra.mxu0 %v2619
      %2832 = vmatprep.subr.mxu0 0.0
      %2833 = vmatpush1.msra.mxu0 %v2620
      %2834 = vmatprep.subr.mxu0 0.0
      %2835 = vmatpush1.msra.mxu0 %v2621
      %2836 = vmatprep.subr.mxu0 0.0
      %2837 = vmatpush1.msra.mxu0 %v2622
      %2838 = vmatprep.subr.mxu0 0.0
      %2839 = vmatpush1.msra.mxu0 %v2399
      %2840 = vmatprep.subr.mxu0 0.0
      %2841 = vmatpush1.msra.mxu0 %v2404
      %2842 = vmatprep.subr.mxu0 0.0
      %2843 = vmatpush1.msra.mxu0 %v2409
      %2844 = vmatprep.subr.mxu0 0.0
      %2845 = vmatpush1.msra.mxu0 %v2414
      %2846 = vmatprep.subr.mxu0 0.0
      %2847 = vmatpush1.msra.mxu0 %v1392
      %2848 = vmatprep.subr.mxu0 0.0
      %2849 = vmatpush1.msra.mxu0 %v1393
      %2850 = vmatprep.subr.mxu0 0.0
      %2851 = vmatpush1.msra.mxu0 %v2651
      %2852 = vmatprep.subr.mxu0 0.0
      %2853 = vmatpush1.msra.mxu0 %v2652
      %2854 = vmatprep.mubr.f32.mxu0 %v2418
      %2855 = vmatmul.mubr.f32.gmra.mrb[0].mxu0 %v2417
      %v2856 = vpop.f32.mrb[0].mxu0
      %v2857 = vadd.f32 %v2776, %v2856
      %v2858 = vpop.f32.mrb[0].mxu0
      %2859 = vmatprep.mubr.f32.mxu0 %v2422
      %2860 = vmatmul.mubr.f32.gmra.mrb[0].mxu0 %v2421
      %v2861 = vpop.f32.mrb[0].mxu0
      %v2862 = vadd.f32 %v2781, %v2861
      %v2863 = vpop.f32.mrb[0].mxu0
      %2864 = vdwg.mxu0
      %2865 = vmatprep.subr.mxu0 0.0
      %2866 = vmatpush1.msra.mxu0 %v2653
      %2867 = vmatprep.subr.mxu0 0.0
      %2868 = vmatpush1.msra.mxu0 %v2654
      %2869 = vmatprep.subr.mxu0 0.0
      %2870 = vmatpush1.msra.mxu0 %v2655
      %2871 = vmatprep.subr.mxu0 0.0
      %2872 = vmatpush1.msra.mxu0 %v2656
      %2873 = vmatprep.subr.mxu0 0.0
      %2874 = vmatpush1.msra.mxu0 %v2699
      %2875 = vmatprep.subr.mxu0 0.0
      %2876 = vmatpush1.msra.mxu0 %v2700
      %2877 = vmatprep.subr.mxu0 0.0
      %2878 = vmatpush1.msra.mxu0 %v2701
      %2879 = vmatprep.subr.mxu0 0.0
      %2880 = vmatpush1.msra.mxu0 %v2702
      %2881 = vmatprep.subr.mxu0 0.0
      %2882 = vmatpush1.msra.mxu0 %v2703
      %2883 = vmatprep.subr.mxu0 0.0
      %2884 = vmatpush1.msra.mxu0 %v2704
      %2885 = vmatprep.subr.mxu0 0.0
      %2886 = vmatpush1.msra.mxu0 %v2733
      %2887 = vmatprep.subr.mxu0 0.0
      %2888 = vmatpush1.msra.mxu0 %v2734
      %2889 = vmatprep.subr.mxu0 0.0
      %2890 = vmatpush1.msra.mxu0 %v2735
      %2891 = vmatprep.subr.mxu0 0.0
      %2892 = vmatpush1.msra.mxu0 %v2736
      %2893 = vmatprep.subr.mxu0 0.0
      %2894 = vmatpush1.msra.mxu0 %v2737
      %2895 = vmatprep.subr.mxu0 0.0
      %2896 = vmatpush1.msra.mxu0 %v2738
      %2897 = vmatprep.subr.mxu0 0.0
      %2898 = vmatpush1.msra.mxu0 %v2767
      %2899 = vmatprep.subr.mxu0 0.0
      %2900 = vmatpush1.msra.mxu0 %v2768
      %2901 = vmatprep.subr.mxu0 0.0
      %2902 = vmatpush1.msra.mxu0 %v2769
      %2903 = vmatprep.subr.mxu0 0.0
      %2904 = vmatpush1.msra.mxu0 %v2770
      %2905 = vmatprep.subr.mxu0 0.0
      %2906 = vmatpush1.msra.mxu0 %v2771
      %2907 = vmatprep.subr.mxu0 0.0
      %2908 = vmatpush1.msra.mxu0 %v2772
      %2909 = vmatprep.subr.mxu0 0.0
      %2910 = vmatpush1.msra.mxu0 0.0
      %2911 = vmatprep.subr.mxu0 0.0
      %2912 = vmatpush1.msra.mxu0 0.0
      %2913 = vmatprep.subr.mxu0 0.0
      %2914 = vmatpush1.msra.mxu0 0.0
      %2915 = vmatprep.subr.mxu0 0.0
      %2916 = vmatpush1.msra.mxu0 0.0
      %2917 = vmatprep.subr.mxu0 0.0
      %2918 = vmatpush1.msra.mxu0 0.0
      %2919 = vmatprep.subr.mxu0 0.0
      %2920 = vmatpush1.msra.mxu0 0.0
      %2921 = vmatprep.subr.mxu0 0.0
      %2922 = vmatpush1.msra.mxu0 0.0
      %2923 = vmatprep.subr.mxu0 0.0
      %2924 = vmatpush1.msra.mxu0 0.0
      %2925 = vmatprep.subr.mxu0 0.0
      %2926 = vmatpush1.msra.mxu0 0.0
      %2927 = vmatprep.subr.mxu0 0.0
      %2928 = vmatpush1.msra.mxu0 0.0
      %2929 = vmatprep.mubr.f32.mxu0 %v2785
      %2930 = vmatmul.mubr.f32.gmra.mrb[0].mxu0 %v2419
      %v2931 = vpop.f32.mrb[0].mxu0
      %v2932 = vadd.f32 %v2857, %v2931
      %v2933 = vpop.f32.mrb[0].mxu0
      %2934 = vmatprep.mubr.f32.mxu0 %v2788
      %2935 = vmatmul.mubr.f32.gmra.mrb[0].mxu0 %v2423
      %v2936 = vpop.f32.mrb[0].mxu0
      %v2937 = vadd.f32 %v2862, %v2936
      %v2938 = vpop.f32.mrb[0].mxu0
      %2939 = vdwg.mxu0
      %v2940 = vmax.f32 %v2932, 0.0
      %v2941 = vmax.f32 %v2937, 0.0
      %v2942 = vld [vmem:[%s1 + $0x200] sm:$0xff]
      %v2943 = vld [vmem:[%s1 + $0x208] sm:$0xff]
      %v2944 = vld [vmem:[%s1 + $0x220] sm:$0xff]
      %v2945 = vld [vmem:[%s1 + $0x228] sm:$0xff]
      %v2946 = vld [vmem:[%s2 + $0x80] sm:$0xff]
      %v2947 = vld [vmem:[%s2 + $0x88] sm:$0xff]
      %2950 = vrot.lane.b32.xlu0 %v2940, 73
      %v2951 = vpop.permute.xlu0 %2950
      %2952 = vrot.lane.b32.xlu0 %v2941, 73
      %v2953 = vpop.permute.xlu0 %2952
      %2956 = vrot.lane.b32.xlu0 %v2940, 9
      %v2957 = vpop.permute.xlu0 %2956
      %2958 = vrot.lane.b32.xlu0 %v2941, 9
      %v2959 = vpop.permute.xlu0 %2958
      %v2962 = vsel %vm975, %v2951, %v2957
      %v2963 = vsel %vm975, %v2953, %v2959
      %v2964 = vmul.f32 %v2962, %v980
      %v2965 = vmul.f32 %v2963, %v980
      %2966 = vrot.lane.b32.xlu0 %v2940, 72
      %v2967 = vpop.permute.xlu0 %2966
      %2968 = vrot.lane.b32.xlu0 %v2941, 72
      %v2969 = vpop.permute.xlu0 %2968
      %2972 = vrot.lane.b32.xlu0 %v2940, 8
      %v2973 = vpop.permute.xlu0 %2972
      %2974 = vrot.lane.b32.xlu0 %v2941, 8
      %v2975 = vpop.permute.xlu0 %2974
      %v2978 = vsel %vm988, %v2967, %v2973
      %v2979 = vsel %vm988, %v2969, %v2975
      %v2980 = vmul.f32 %v2978, %v993
      %v2981 = vmul.f32 %v2979, %v993
      %2982 = vrot.lane.b32.xlu0 %v2940, 71
      %v2983 = vpop.permute.xlu0 %2982
      %2984 = vrot.lane.b32.xlu0 %v2941, 71
      %v2985 = vpop.permute.xlu0 %2984
      %2988 = vrot.lane.b32.xlu0 %v2940, 7
      %v2989 = vpop.permute.xlu0 %2988
      %2990 = vrot.lane.b32.xlu0 %v2941, 7
      %v2991 = vpop.permute.xlu0 %2990
      %v2994 = vsel %vm1001, %v2983, %v2989
      %v2995 = vsel %vm1001, %v2985, %v2991
      %v2996 = vmul.f32 %v2994, %v1006
      %v2997 = vmul.f32 %v2995, %v1006
      %2998 = vrot.lane.b32.xlu0 %v2940, 65
      %v2999 = vpop.permute.xlu0 %2998
      %3000 = vrot.lane.b32.xlu0 %v2941, 65
      %v3001 = vpop.permute.xlu0 %3000
      %3004 = vrot.lane.b32.xlu0 %v2940, 1
      %v3005 = vpop.permute.xlu0 %3004
      %3006 = vrot.lane.b32.xlu0 %v2941, 1
      %v3007 = vpop.permute.xlu0 %3006
      %v3010 = vsel %vm477, %v2999, %v3005
      %v3011 = vsel %vm477, %v3001, %v3007
      %v3012 = vmul.f32 %v3010, %v1018
      %v3013 = vmul.f32 %v3011, %v1018
      %3014 = vrot.lane.b32.xlu0 %v2940, 127
      %v3015 = vpop.permute.xlu0 %3014
      %3016 = vrot.lane.b32.xlu0 %v2941, 127
      %v3017 = vpop.permute.xlu0 %3016
      %3020 = vrot.lane.b32.xlu0 %v2940, 63
      %v3021 = vpop.permute.xlu0 %3020
      %3022 = vrot.lane.b32.xlu0 %v2941, 63
      %v3023 = vpop.permute.xlu0 %3022
      %v3026 = vsel %vm1026, %v3015, %v3021
      %v3027 = vsel %vm1026, %v3017, %v3023
      %v3028 = vmul.f32 %v3026, %v1031
      %v3029 = vmul.f32 %v3027, %v1031
      %3030 = vrot.lane.b32.xlu0 %v2940, 121
      %v3031 = vpop.permute.xlu0 %3030
      %3032 = vrot.lane.b32.xlu0 %v2941, 121
      %v3033 = vpop.permute.xlu0 %3032
      %3036 = vrot.lane.b32.xlu0 %v2940, 57
      %v3037 = vpop.permute.xlu0 %3036
      %3038 = vrot.lane.b32.xlu0 %v2941, 57
      %v3039 = vpop.permute.xlu0 %3038
      %v3042 = vsel %vm1039, %v3031, %v3037
      %v3043 = vsel %vm1039, %v3033, %v3039
      %v3044 = vmul.f32 %v3042, %v1044
      %v3045 = vmul.f32 %v3043, %v1044
      %3046 = vrot.lane.b32.xlu0 %v2940, 120
      %v3047 = vpop.permute.xlu0 %3046
      %3048 = vrot.lane.b32.xlu0 %v2941, 120
      %v3049 = vpop.permute.xlu0 %3048
      %3052 = vrot.lane.b32.xlu0 %v2940, 56
      %v3053 = vpop.permute.xlu0 %3052
      %3054 = vrot.lane.b32.xlu0 %v2941, 56
      %v3055 = vpop.permute.xlu0 %3054
      %v3058 = vsel %vm1052, %v3047, %v3053
      %v3059 = vsel %vm1052, %v3049, %v3055
      %v3060 = vmul.f32 %v3058, %v1057
      %v3061 = vmul.f32 %v3059, %v1057
      %3062 = vrot.lane.b32.xlu0 %v2940, 119
      %v3063 = vpop.permute.xlu0 %3062
      %3064 = vrot.lane.b32.xlu0 %v2941, 119
      %v3065 = vpop.permute.xlu0 %3064
      %3068 = vrot.lane.b32.xlu0 %v2940, 55
      %v3069 = vpop.permute.xlu0 %3068
      %3070 = vrot.lane.b32.xlu0 %v2941, 55
      %v3071 = vpop.permute.xlu0 %3070
      %v3074 = vsel %vm1065, %v3063, %v3069
      %v3075 = vsel %vm1065, %v3065, %v3071
      %v3076 = vmul.f32 %v3074, %v1070
      %v3077 = vmul.f32 %v3075, %v1070
      %3079 = vset.pattern.permute.xlu0 0
      %3080 = vperm.xlu0 %3079, %v2946
      %v3081 = vpop.permute.xlu0 %3080
      %3084 = vset.pattern.permute.xlu0 0
      %3085 = vperm.xlu0 %3084, %v2947
      %v3086 = vpop.permute.xlu0 %3085
      %v3089 = vsel %vm437, %v2943, 0
      %v3092 = vsel %vm437, %v2945, 0
      %3094 = vmatprep.subr.mxu0 0.0
      %3095 = vmatpush1.msra.mxu0 %v2964
      %3096 = vmatprep.subr.mxu0 0.0
      %3097 = vmatpush1.msra.mxu0 %v2965
      %3098 = vmatprep.subr.mxu0 0.0
      %3099 = vmatpush1.msra.mxu0 %v2980
      %3100 = vmatprep.subr.mxu0 0.0
      %3101 = vmatpush1.msra.mxu0 %v2981
      %3102 = vmatprep.subr.mxu0 0.0
      %3103 = vmatpush1.msra.mxu0 %v2996
      %3104 = vmatprep.subr.mxu0 0.0
      %3105 = vmatpush1.msra.mxu0 %v2997
      %3106 = vmatprep.subr.mxu0 0.0
      %3107 = vmatpush1.msra.mxu0 %v3012
      %3108 = vmatprep.subr.mxu0 0.0
      %3109 = vmatpush1.msra.mxu0 %v3013
      %3110 = vmatprep.subr.mxu0 0.0
      %3111 = vmatpush1.msra.mxu0 %v2940
      %3112 = vmatprep.subr.mxu0 0.0
      %3113 = vmatpush1.msra.mxu0 %v2941
      %3114 = vmatprep.subr.mxu0 0.0
      %3115 = vmatpush1.msra.mxu0 %v3028
      %3116 = vmatprep.subr.mxu0 0.0
      %3117 = vmatpush1.msra.mxu0 %v3029
      %3118 = vmatprep.subr.mxu0 0.0
      %3119 = vmatpush1.msra.mxu0 %v3044
      %3120 = vmatprep.subr.mxu0 0.0
      %3121 = vmatpush1.msra.mxu0 %v3045
      %3122 = vmatprep.subr.mxu0 0.0
      %3123 = vmatpush1.msra.mxu0 %v3060
      %3124 = vmatprep.subr.mxu0 0.0
      %3125 = vmatpush1.msra.mxu0 %v3061
      %3126 = vmatprep.subr.mxu0 0.0
      %3127 = vmatpush1.msra.mxu0 %v3076
      %3128 = vmatprep.subr.mxu0 0.0
      %3129 = vmatpush1.msra.mxu0 %v3077
      %3130 = vmatprep.subr.mxu0 0.0
      %3131 = vmatpush1.msra.mxu0 0.0
      %3132 = vmatprep.subr.mxu0 0.0
      %3133 = vmatpush1.msra.mxu0 0.0
      %3134 = vmatprep.subr.mxu0 0.0
      %3135 = vmatpush1.msra.mxu0 0.0
      %3136 = vmatprep.subr.mxu0 0.0
      %3137 = vmatpush1.msra.mxu0 0.0
      %3138 = vmatprep.subr.mxu0 0.0
      %3139 = vmatpush1.msra.mxu0 0.0
      %3140 = vmatprep.subr.mxu0 0.0
      %3141 = vmatpush1.msra.mxu0 0.0
      %3142 = vmatprep.subr.mxu0 0.0
      %3143 = vmatpush1.msra.mxu0 0.0
      %3144 = vmatprep.subr.mxu0 0.0
      %3145 = vmatpush1.msra.mxu0 0.0
      %3146 = vmatprep.subr.mxu0 0.0
      %3147 = vmatpush1.msra.mxu0 0.0
      %3148 = vmatprep.subr.mxu0 0.0
      %3149 = vmatpush1.msra.mxu0 0.0
      %3150 = vmatprep.subr.mxu0 0.0
      %3151 = vmatpush1.msra.mxu0 0.0
      %3152 = vmatprep.subr.mxu0 0.0
      %3153 = vmatpush1.msra.mxu0 0.0
      %3154 = vmatprep.subr.mxu0 0.0
      %3155 = vmatpush1.msra.mxu0 0.0
      %3156 = vmatprep.subr.mxu0 0.0
      %3157 = vmatpush1.msra.mxu0 0.0
      %3158 = vmatprep.mubr.f32.mxu0 %v3089
      %3159 = vmatmul.mubr.f32.gmra.mrb[0].mxu0 %v2942
      %v3160 = vpop.f32.mrb[0].mxu0
      %v3161 = vadd.f32 %v3081, %v3160
      %v3162 = vpop.f32.mrb[0].mxu0
      %3163 = vmatprep.mubr.f32.mxu0 %v3092
      %3164 = vmatmul.mubr.f32.gmra.mrb[0].mxu0 %v2944
      %v3165 = vpop.f32.mrb[0].mxu0
      %v3166 = vadd.f32 %v3086, %v3165
      %v3167 = vpop.f32.mrb[0].mxu0
      %3168 = vdwg.mxu0
      %v3169 = vmax.f32 %v3161, 0.0
      %v3170 = vmax.f32 %v3166, 0.0
      %v3171 = vld [vmem:[%s9] sm:$0xff]
      %v3172 = vld [vmem:[%s9 + $0x8] sm:$0xff]
      %v3173 = vld [vmem:[%s9 + $0x10] sm:$0xff]
      %v3174 = vld [vmem:[%s9 + $0x18] sm:$0xff]
      %v3175 = vld [vmem:[%s9 + $0x20] sm:$0xff]
      %v3176 = vld [vmem:[%s9 + $0x28] sm:$0xff]
      %v3177 = vld [vmem:[%s9 + $0x30] sm:$0xff]
      %v3178 = vld [vmem:[%s9 + $0x38] sm:$0xff]
      %v3179 = vld [vmem:[%s9 + $0x40] sm:$0xff]
      %v3180 = vld [vmem:[%s9 + $0x48] sm:$0xff]
      %v3181 = vld [vmem:[%s9 + $0x50] sm:$0xff]
      %v3182 = vld [vmem:[%s9 + $0x58] sm:$0xff]
      %v3183 = vld [vmem:[%s9 + $0x60] sm:$0xff]
      %v3184 = vld [vmem:[%s9 + $0x68] sm:$0xff]
      %v3185 = vld [vmem:[%s9 + $0x70] sm:$0xff]
      %v3186 = vld [vmem:[%s9 + $0x78] sm:$0xff]
      %v3188 = vsel %vm1452, %v3169, 0
      %v3191 = vsel %vm1452, %v3170, 0
      %3193 = vmatprep.subr.mxu0 %v3172
      %3194 = vmatpush1.msra.mxu0 %v3171
      %3195 = vmatprep.subr.mxu0 %v3174
      %3196 = vmatpush1.msra.mxu0 %v3173
      %3197 = vmatprep.subr.mxu0 %v3176
      %3198 = vmatpush1.msra.mxu0 %v3175
      %3199 = vmatprep.subr.mxu0 %v3178
      %3200 = vmatpush1.msra.mxu0 %v3177
      %3201 = vmatprep.subr.mxu0 %v3180
      %3202 = vmatpush1.msra.mxu0 %v3179
      %3203 = vmatprep.subr.mxu0 %v3182
      %3204 = vmatpush1.msra.mxu0 %v3181
      %3205 = vmatprep.subr.mxu0 %v3184
      %3206 = vmatpush1.msra.mxu0 %v3183
      %3207 = vmatprep.subr.mxu0 %v3186
      %3208 = vmatpush1.msra.mxu0 %v3185
      %3209 = vmatprep.subr.mxu0 0.0
      %3210 = vmatpush1.msra.mxu0 0.0
      %3211 = vmatprep.subr.mxu0 0.0
      %3212 = vmatpush1.msra.mxu0 0.0
      %3213 = vmatprep.subr.mxu0 0.0
      %3214 = vmatpush1.msra.mxu0 0.0
      %3215 = vmatprep.subr.mxu0 0.0
      %3216 = vmatpush1.msra.mxu0 0.0
      %3217 = vmatprep.subr.mxu0 0.0
      %3218 = vmatpush1.msra.mxu0 0.0
      %3219 = vmatprep.subr.mxu0 0.0
      %3220 = vmatpush1.msra.mxu0 0.0
      %3221 = vmatprep.subr.mxu0 0.0
      %3222 = vmatpush1.msra.mxu0 0.0
      %3223 = vmatprep.subr.mxu0 0.0
      %3224 = vmatpush1.msra.mxu0 0.0
      %3225 = vmatprep.subr.mxu0 0.0
      %3226 = vmatpush1.msra.mxu0 0.0
      %3227 = vmatprep.subr.mxu0 0.0
      %3228 = vmatpush1.msra.mxu0 0.0
      %3229 = vmatprep.subr.mxu0 0.0
      %3230 = vmatpush1.msra.mxu0 0.0
      %3231 = vmatprep.subr.mxu0 0.0
      %3232 = vmatpush1.msra.mxu0 0.0
      %3233 = vmatprep.subr.mxu0 0.0
      %3234 = vmatpush1.msra.mxu0 0.0
      %3235 = vmatprep.subr.mxu0 0.0
      %3236 = vmatpush1.msra.mxu0 0.0
      %3237 = vmatprep.subr.mxu0 0.0
      %3238 = vmatpush1.msra.mxu0 0.0
      %3239 = vmatprep.subr.mxu0 0.0
      %3240 = vmatpush1.msra.mxu0 0.0
      %3241 = vmatprep.subr.mxu0 0.0
      %3242 = vmatpush1.msra.mxu0 0.0
      %3243 = vmatprep.subr.mxu0 0.0
      %3244 = vmatpush1.msra.mxu0 0.0
      %3245 = vmatprep.subr.mxu0 0.0
      %3246 = vmatpush1.msra.mxu0 0.0
      %3247 = vmatprep.subr.mxu0 0.0
      %3248 = vmatpush1.msra.mxu0 0.0
      %3249 = vmatprep.subr.mxu0 0.0
      %3250 = vmatpush1.msra.mxu0 0.0
      %3251 = vmatprep.subr.mxu0 0.0
      %3252 = vmatpush1.msra.mxu0 0.0
      %3253 = vmatprep.subr.mxu0 0.0
      %3254 = vmatpush1.msra.mxu0 0.0
      %3255 = vmatprep.subr.mxu0 0.0
      %3256 = vmatpush1.msra.mxu0 0.0
      %3257 = vmatprep.mubr.f32.mxu0 0.0
      %3258 = vmatmul.mubr.f32.gmra.mrb[0].mxu0 %v3188
      %v3259 = vpop.f32.mrb[0].mxu0
      %v3260 = vadd.f32 0.0, %v3259
      %v3261 = vpop.f32.mrb[0].mxu0
      %v3262 = vadd.f32 0.0, %v3261
      %3263 = vmatprep.mubr.f32.mxu0 0.0
      %3264 = vmatmul.mubr.f32.gmra.mrb[0].mxu0 %v3191
      %v3265 = vpop.f32.mrb[0].mxu0
      %v3266 = vadd.f32 0.0, %v3265
      %v3267 = vpop.f32.mrb[0].mxu0
      %v3268 = vadd.f32 0.0, %v3267
      %3269 = vdwg.mxu0
      %v3270 = vld [vmem:[%s1 + $0x240] sm:$0xff]
      %v3271 = vld [vmem:[%s1 + $0x248] sm:$0xff]
      %v3272 = vld [vmem:[%s2 + $0x90] sm:$0xff]
      %3275 = vrot.lane.b32.xlu0 %v3262, 17
      %v3276 = vpop.permute.xlu0 %3275
      %3277 = vrot.lane.b32.xlu0 %v3268, 17
      %v3278 = vpop.permute.xlu0 %3277
      %3279 = vrot.lane.b32.xlu0 %v826, 17
      %v3280 = vpop.permute.xlu0 %3279
      %3286 = vrot.lane.b32.xlu0 %v3260, 17
      %v3287 = vpop.permute.xlu0 %3286
      %3288 = vrot.lane.b32.xlu0 %v3266, 17
      %v3289 = vpop.permute.xlu0 %3288
      %3290 = vrot.lane.b32.xlu0 %v825, 17
      %v3291 = vpop.permute.xlu0 %3290
      %v3292 = vsel %vm417, %v3287, %v3276
      %v3293 = vsel %vm417, %v3289, %v3278
      %v3294 = vsel %vm417, %v3291, %v3280
      %v3301 = vsel %vm417, %v3276, %v3287
      %v3302 = vsel %vm417, %v3278, %v3289
      %v3303 = vsel %vm417, %v3280, %v3291
      %v3304 = vmul.f32 %v3301, %v425
      %v3305 = vmul.f32 %v3292, %v429
      %v3306 = vmul.f32 %v3302, %v425
      %v3307 = vmul.f32 %v3293, %v429
      %v3308 = vmul.f32 %v3303, %v425
      %v3309 = vmul.f32 %v3294, %v429
      %3310 = vrot.lane.b32.xlu0 %v3262, 16
      %v3311 = vpop.permute.xlu0 %3310
      %3312 = vrot.lane.b32.xlu0 %v3268, 16
      %v3313 = vpop.permute.xlu0 %3312
      %3314 = vrot.lane.b32.xlu0 %v826, 16
      %v3315 = vpop.permute.xlu0 %3314
      %3319 = vrot.lane.b32.xlu0 %v3260, 16
      %v3320 = vpop.permute.xlu0 %3319
      %3321 = vrot.lane.b32.xlu0 %v3266, 16
      %v3322 = vpop.permute.xlu0 %3321
      %3323 = vrot.lane.b32.xlu0 %v825, 16
      %v3324 = vpop.permute.xlu0 %3323
      %v3325 = vsel %vm437, %v3320, %v3311
      %v3326 = vsel %vm437, %v3322, %v3313
      %v3327 = vsel %vm437, %v3324, %v3315
      %v3334 = vsel %vm437, %v3311, %v3320
      %v3335 = vsel %vm437, %v3313, %v3322
      %v3336 = vsel %vm437, %v3315, %v3324
      %v3337 = vmul.f32 %v3334, %v445
      %v3338 = vmul.f32 %v3325, %v449
      %v3339 = vmul.f32 %v3335, %v445
      %v3340 = vmul.f32 %v3326, %v449
      %v3341 = vmul.f32 %v3336, %v445
      %v3342 = vmul.f32 %v3327, %v449
      %3343 = vrot.lane.b32.xlu0 %v3262, 15
      %v3344 = vpop.permute.xlu0 %3343
      %3345 = vrot.lane.b32.xlu0 %v3268, 15
      %v3346 = vpop.permute.xlu0 %3345
      %3347 = vrot.lane.b32.xlu0 %v826, 15
      %v3348 = vpop.permute.xlu0 %3347
      %3352 = vrot.lane.b32.xlu0 %v3260, 15
      %v3353 = vpop.permute.xlu0 %3352
      %3354 = vrot.lane.b32.xlu0 %v3266, 15
      %v3355 = vpop.permute.xlu0 %3354
      %3356 = vrot.lane.b32.xlu0 %v825, 15
      %v3357 = vpop.permute.xlu0 %3356
      %v3358 = vsel %vm457, %v3353, %v3344
      %v3359 = vsel %vm457, %v3355, %v3346
      %v3360 = vsel %vm457, %v3357, %v3348
      %v3367 = vsel %vm457, %v3344, %v3353
      %v3368 = vsel %vm457, %v3346, %v3355
      %v3369 = vsel %vm457, %v3348, %v3357
      %v3370 = vmul.f32 %v3367, %v465
      %v3371 = vmul.f32 %v3358, %v469
      %v3372 = vmul.f32 %v3368, %v465
      %v3373 = vmul.f32 %v3359, %v469
      %v3374 = vmul.f32 %v3369, %v465
      %v3375 = vmul.f32 %v3360, %v469
      %3376 = vrot.lane.b32.xlu0 %v3262, 1
      %v3377 = vpop.permute.xlu0 %3376
      %3378 = vrot.lane.b32.xlu0 %v3268, 1
      %v3379 = vpop.permute.xlu0 %3378
      %3380 = vrot.lane.b32.xlu0 %v826, 1
      %v3381 = vpop.permute.xlu0 %3380
      %3385 = vrot.lane.b32.xlu0 %v3260, 1
      %v3386 = vpop.permute.xlu0 %3385
      %3387 = vrot.lane.b32.xlu0 %v3266, 1
      %v3388 = vpop.permute.xlu0 %3387
      %3389 = vrot.lane.b32.xlu0 %v825, 1
      %v3390 = vpop.permute.xlu0 %3389
      %v3391 = vsel %vm477, %v3386, %v3377
      %v3392 = vsel %vm477, %v3388, %v3379
      %v3393 = vsel %vm477, %v3390, %v3381
      %v3400 = vsel %vm477, %v3377, %v3386
      %v3401 = vsel %vm477, %v3379, %v3388
      %v3402 = vsel %vm477, %v3381, %v3390
      %v3403 = vmul.f32 %v3400, %v485
      %v3404 = vmul.f32 %v3391, %v489
      %v3405 = vmul.f32 %v3401, %v485
      %v3406 = vmul.f32 %v3392, %v489
      %v3407 = vmul.f32 %v3402, %v485
      %v3408 = vmul.f32 %v3393, %v489
      %3409 = vrot.lane.b32.xlu0 %v3260, 127
      %v3410 = vpop.permute.xlu0 %3409
      %3411 = vrot.lane.b32.xlu0 %v3262, 127
      %v3412 = vpop.permute.xlu0 %3411
      %3413 = vrot.lane.b32.xlu0 %v3266, 127
      %v3414 = vpop.permute.xlu0 %3413
      %3415 = vrot.lane.b32.xlu0 %v3268, 127
      %v3416 = vpop.permute.xlu0 %3415
      %v3417 = vsel %vm496, %v3410, %v3412
      %v3418 = vsel %vm496, %v3414, %v3416
      %v3425 = vsel %vm496, %v3412, %v3410
      %v3426 = vsel %vm496, %v3416, %v3414
      %v3427 = vmul.f32 %v3417, %v505
      %v3428 = vmul.f32 %v3425, %v509
      %v3429 = vmul.f32 %v3418, %v505
      %v3430 = vmul.f32 %v3426, %v509
      %v3431 = vmul.f32 %v865, %v505
      %v3432 = vmul.f32 %v869, %v509
      %3433 = vrot.lane.b32.xlu0 %v3260, 113
      %v3434 = vpop.permute.xlu0 %3433
      %3435 = vrot.lane.b32.xlu0 %v3262, 113
      %v3436 = vpop.permute.xlu0 %3435
      %3437 = vrot.lane.b32.xlu0 %v3266, 113
      %v3438 = vpop.permute.xlu0 %3437
      %3439 = vrot.lane.b32.xlu0 %v3268, 113
      %v3440 = vpop.permute.xlu0 %3439
      %3441 = vrot.lane.b32.xlu0 %v825, 113
      %v3442 = vpop.permute.xlu0 %3441
      %3443 = vrot.lane.b32.xlu0 %v826, 113
      %v3444 = vpop.permute.xlu0 %3443
      %v3445 = vsel %vm516, %v3434, %v3436
      %v3446 = vsel %vm516, %v3438, %v3440
      %v3447 = vsel %vm516, %v3442, %v3444
      %v3457 = vsel %vm516, %v3436, %v3434
      %v3458 = vsel %vm516, %v3440, %v3438
      %v3459 = vsel %vm516, %v3444, %v3442
      %v3460 = vmul.f32 %v3445, %v525
      %v3461 = vmul.f32 %v3457, %v529
      %v3462 = vmul.f32 %v3446, %v525
      %v3463 = vmul.f32 %v3458, %v529
      %v3464 = vmul.f32 %v3447, %v525
      %v3465 = vmul.f32 %v3459, %v529
      %3466 = vrot.lane.b32.xlu0 %v3260, 112
      %v3467 = vpop.permute.xlu0 %3466
      %3468 = vrot.lane.b32.xlu0 %v3262, 112
      %v3469 = vpop.permute.xlu0 %3468
      %3470 = vrot.lane.b32.xlu0 %v3266, 112
      %v3471 = vpop.permute.xlu0 %3470
      %3472 = vrot.lane.b32.xlu0 %v3268, 112
      %v3473 = vpop.permute.xlu0 %3472
      %v3474 = vsel %vm536, %v3467, %v3469
      %v3475 = vsel %vm536, %v3471, %v3473
      %v3482 = vsel %vm536, %v3469, %v3467
      %v3483 = vsel %vm536, %v3473, %v3471
      %v3484 = vmul.f32 %v3474, %v545
      %v3485 = vmul.f32 %v3482, %v549
      %v3486 = vmul.f32 %v3475, %v545
      %v3487 = vmul.f32 %v3483, %v549
      %v3488 = vmul.f32 %v876, %v545
      %v3489 = vmul.f32 %v880, %v549
      %3490 = vrot.lane.b32.xlu0 %v3260, 111
      %v3491 = vpop.permute.xlu0 %3490
      %3492 = vrot.lane.b32.xlu0 %v3262, 111
      %v3493 = vpop.permute.xlu0 %3492
      %3494 = vrot.lane.b32.xlu0 %v3266, 111
      %v3495 = vpop.permute.xlu0 %3494
      %3496 = vrot.lane.b32.xlu0 %v3268, 111
      %v3497 = vpop.permute.xlu0 %3496
      %v3498 = vsel %vm556, %v3491, %v3493
      %v3499 = vsel %vm556, %v3495, %v3497
      %v3506 = vsel %vm556, %v3493, %v3491
      %v3507 = vsel %vm556, %v3497, %v3495
      %v3508 = vmul.f32 %v3498, %v565
      %v3509 = vmul.f32 %v3506, %v569
      %v3510 = vmul.f32 %v3499, %v565
      %v3511 = vmul.f32 %v3507, %v569
      %v3512 = vmul.f32 %v885, %v565
      %v3513 = vmul.f32 %v889, %v569
      %3515 = vset.pattern.permute.xlu0 0
      %3516 = vperm.xlu0 %3515, %v3272
      %v3517 = vpop.permute.xlu0 %3516
      %vm3519 = vcmask 719872
      %v3521 = vsel %vm3519, %v3271, 0
      %3523 = vmatprep.subr.mxu0 %v3305
      %3524 = vmatpush1.msra.mxu0 %v3304
      %3525 = vmatprep.subr.mxu0 %v3307
      %3526 = vmatpush1.msra.mxu0 %v3306
      %3527 = vmatprep.subr.mxu0 %v3309
      %3528 = vmatpush1.msra.mxu0 %v3308
      %3529 = vmatprep.subr.mxu0 %v3338
      %3530 = vmatpush1.msra.mxu0 %v3337
      %3531 = vmatprep.subr.mxu0 %v3340
      %3532 = vmatpush1.msra.mxu0 %v3339
      %3533 = vmatprep.subr.mxu0 %v3342
      %3534 = vmatpush1.msra.mxu0 %v3341
      %3535 = vmatprep.subr.mxu0 %v3371
      %3536 = vmatpush1.msra.mxu0 %v3370
      %3537 = vmatprep.subr.mxu0 %v3373
      %3538 = vmatpush1.msra.mxu0 %v3372
      %3539 = vmatprep.subr.mxu0 %v3375
      %3540 = vmatpush1.msra.mxu0 %v3374
      %3541 = vmatprep.subr.mxu0 %v3404
      %3542 = vmatpush1.msra.mxu0 %v3403
      %3543 = vmatprep.subr.mxu0 %v3406
      %3544 = vmatpush1.msra.mxu0 %v3405
      %3545 = vmatprep.subr.mxu0 %v3408
      %3546 = vmatpush1.msra.mxu0 %v3407
      %3547 = vmatprep.subr.mxu0 %v3262
      %3548 = vmatpush1.msra.mxu0 %v3260
      %3549 = vmatprep.subr.mxu0 %v3268
      %3550 = vmatpush1.msra.mxu0 %v3266
      %3551 = vmatprep.subr.mxu0 %v826
      %3552 = vmatpush1.msra.mxu0 %v825
      %3553 = vmatprep.subr.mxu0 %v3428
      %3554 = vmatpush1.msra.mxu0 %v3427
      %3555 = vmatprep.subr.mxu0 %v3430
      %3556 = vmatpush1.msra.mxu0 %v3429
      %3557 = vmatprep.subr.mxu0 %v3432
      %3558 = vmatpush1.msra.mxu0 %v3431
      %3559 = vmatprep.subr.mxu0 %v3461
      %3560 = vmatpush1.msra.mxu0 %v3460
      %3561 = vmatprep.subr.mxu0 %v3463
      %3562 = vmatpush1.msra.mxu0 %v3462
      %3563 = vmatprep.subr.mxu0 %v3465
      %3564 = vmatpush1.msra.mxu0 %v3464
      %3565 = vmatprep.subr.mxu0 %v3485
      %3566 = vmatpush1.msra.mxu0 %v3484
      %3567 = vmatprep.subr.mxu0 %v3487
      %3568 = vmatpush1.msra.mxu0 %v3486
      %3569 = vmatprep.subr.mxu0 %v3489
      %3570 = vmatpush1.msra.mxu0 %v3488
      %3571 = vmatprep.subr.mxu0 %v3509
      %3572 = vmatpush1.msra.mxu0 %v3508
      %3573 = vmatprep.subr.mxu0 %v3511
      %3574 = vmatpush1.msra.mxu0 %v3510
      %3575 = vmatprep.subr.mxu0 %v3513
      %3576 = vmatpush1.msra.mxu0 %v3512
      %3577 = vmatprep.subr.mxu0 0.0
      %3578 = vmatpush1.msra.mxu0 0.0
      %3579 = vmatprep.subr.mxu0 0.0
      %3580 = vmatpush1.msra.mxu0 0.0
      %3581 = vmatprep.subr.mxu0 0.0
      %3582 = vmatpush1.msra.mxu0 0.0
      %3583 = vmatprep.subr.mxu0 0.0
      %3584 = vmatpush1.msra.mxu0 0.0
      %3585 = vmatprep.subr.mxu0 0.0
      %3586 = vmatpush1.msra.mxu0 0.0
      %3587 = vmatprep.mubr.f32.mxu0 %v3521
      %3588 = vmatmul.mubr.f32.gmra.mrb[0].mxu0 %v3270
      %v3589 = vpop.f32.mrb[0].mxu0
      %v3590 = vadd.f32 %v3517, %v3589
      %v3591 = vpop.f32.mrb[0].mxu0
      %v3592 = vadd.f32 %v3517, %v3591
      %3593 = vdwg.mxu0
      %v3594 = vmax.f32 %v3590, 0.0
      %v3595 = vmax.f32 %v3592, 0.0
      %v3596 = vld [vmem:[%s1 + $0x260] sm:$0xff]
      %v3597 = vld [vmem:[%s2 + $0x98] sm:$0xff]
      %3599 = vrot.lane.b32.xlu0 %v3595, 17
      %v3600 = vpop.permute.xlu0 %3599
      %3603 = vrot.lane.b32.xlu0 %v3594, 17
      %v3604 = vpop.permute.xlu0 %3603
      %v3605 = vsel %vm417, %v3604, %v3600
      %v3608 = vsel %vm417, %v3600, %v3604
      %v3609 = vmul.f32 %v3608, %v425
      %v3610 = vmul.f32 %v3605, %v429
      %3611 = vrot.lane.b32.xlu0 %v3595, 16
      %v3612 = vpop.permute.xlu0 %3611
      %3614 = vrot.lane.b32.xlu0 %v3594, 16
      %v3615 = vpop.permute.xlu0 %3614
      %v3616 = vsel %vm437, %v3615, %v3612
      %v3619 = vsel %vm437, %v3612, %v3615
      %v3620 = vmul.f32 %v3619, %v445
      %v3621 = vmul.f32 %v3616, %v449
      %3622 = vrot.lane.b32.xlu0 %v3595, 15
      %v3623 = vpop.permute.xlu0 %3622
      %3625 = vrot.lane.b32.xlu0 %v3594, 15
      %v3626 = vpop.permute.xlu0 %3625
      %v3627 = vsel %vm457, %v3626, %v3623
      %v3630 = vsel %vm457, %v3623, %v3626
      %v3631 = vmul.f32 %v3630, %v465
      %v3632 = vmul.f32 %v3627, %v469
      %3633 = vrot.lane.b32.xlu0 %v3595, 1
      %v3634 = vpop.permute.xlu0 %3633
      %3636 = vrot.lane.b32.xlu0 %v3594, 1
      %v3637 = vpop.permute.xlu0 %3636
      %v3638 = vsel %vm477, %v3637, %v3634
      %v3641 = vsel %vm477, %v3634, %v3637
      %v3642 = vmul.f32 %v3641, %v485
      %v3643 = vmul.f32 %v3638, %v489
      %3644 = vrot.lane.b32.xlu0 %v3594, 127
      %v3645 = vpop.permute.xlu0 %3644
      %3646 = vrot.lane.b32.xlu0 %v3595, 127
      %v3647 = vpop.permute.xlu0 %3646
      %v3648 = vsel %vm496, %v3645, %v3647
      %v3652 = vsel %vm496, %v3647, %v3645
      %v3653 = vmul.f32 %v3648, %v505
      %v3654 = vmul.f32 %v3652, %v509
      %3655 = vrot.lane.b32.xlu0 %v3594, 113
      %v3656 = vpop.permute.xlu0 %3655
      %3657 = vrot.lane.b32.xlu0 %v3595, 113
      %v3658 = vpop.permute.xlu0 %3657
      %v3659 = vsel %vm516, %v3656, %v3658
      %v3663 = vsel %vm516, %v3658, %v3656
      %v3664 = vmul.f32 %v3659, %v525
      %v3665 = vmul.f32 %v3663, %v529
      %3666 = vrot.lane.b32.xlu0 %v3594, 112
      %v3667 = vpop.permute.xlu0 %3666
      %3668 = vrot.lane.b32.xlu0 %v3595, 112
      %v3669 = vpop.permute.xlu0 %3668
      %v3670 = vsel %vm536, %v3667, %v3669
      %v3674 = vsel %vm536, %v3669, %v3667
      %v3675 = vmul.f32 %v3670, %v545
      %v3676 = vmul.f32 %v3674, %v549
      %3677 = vrot.lane.b32.xlu0 %v3594, 111
      %v3678 = vpop.permute.xlu0 %3677
      %3679 = vrot.lane.b32.xlu0 %v3595, 111
      %v3680 = vpop.permute.xlu0 %3679
      %v3681 = vsel %vm556, %v3678, %v3680
      %v3685 = vsel %vm556, %v3680, %v3678
      %v3686 = vmul.f32 %v3681, %v565
      %v3687 = vmul.f32 %v3685, %v569
      %3689 = vset.pattern.permute.xlu0 0
      %3690 = vperm.xlu0 %3689, %v3597
      %v3691 = vpop.permute.xlu0 %3690
      %v3694 = vsel %vm577, %v3596, 0
      %3696 = vmatprep.subr.mxu0 %v3610
      %3697 = vmatpush1.msra.mxu0 %v3609
      %3698 = vmatprep.subr.mxu0 %v3621
      %3699 = vmatpush1.msra.mxu0 %v3620
      %3700 = vmatprep.subr.mxu0 %v3632
      %3701 = vmatpush1.msra.mxu0 %v3631
      %3702 = vmatprep.subr.mxu0 %v3643
      %3703 = vmatpush1.msra.mxu0 %v3642
      %3704 = vmatprep.subr.mxu0 %v3595
      %3705 = vmatpush1.msra.mxu0 %v3594
      %3706 = vmatprep.subr.mxu0 %v3654
      %3707 = vmatpush1.msra.mxu0 %v3653
      %3708 = vmatprep.subr.mxu0 %v3665
      %3709 = vmatpush1.msra.mxu0 %v3664
      %3710 = vmatprep.subr.mxu0 %v3676
      %3711 = vmatpush1.msra.mxu0 %v3675
      %3712 = vmatprep.subr.mxu0 %v3687
      %3713 = vmatpush1.msra.mxu0 %v3686
      %3714 = vmatprep.subr.mxu0 0.0
      %3715 = vmatpush1.msra.mxu0 0.0
      %3716 = vmatprep.subr.mxu0 0.0
      %3717 = vmatpush1.msra.mxu0 0.0
      %3718 = vmatprep.subr.mxu0 0.0
      %3719 = vmatpush1.msra.mxu0 0.0
      %3720 = vmatprep.subr.mxu0 0.0
      %3721 = vmatpush1.msra.mxu0 0.0
      %3722 = vmatprep.subr.mxu0 0.0
      %3723 = vmatpush1.msra.mxu0 0.0
      %3724 = vmatprep.subr.mxu0 0.0
      %3725 = vmatpush1.msra.mxu0 0.0
      %3726 = vmatprep.subr.mxu0 0.0
      %3727 = vmatpush1.msra.mxu0 0.0
      %3728 = vmatprep.subr.mxu0 0.0
      %3729 = vmatpush1.msra.mxu0 0.0
      %3730 = vmatprep.subr.mxu0 0.0
      %3731 = vmatpush1.msra.mxu0 0.0
      %3732 = vmatprep.subr.mxu0 0.0
      %3733 = vmatpush1.msra.mxu0 0.0
      %3734 = vmatprep.subr.mxu0 0.0
      %3735 = vmatpush1.msra.mxu0 0.0
      %3736 = vmatprep.subr.mxu0 0.0
      %3737 = vmatpush1.msra.mxu0 0.0
      %3738 = vmatprep.subr.mxu0 0.0
      %3739 = vmatpush1.msra.mxu0 0.0
      %3740 = vmatprep.subr.mxu0 0.0
      %3741 = vmatpush1.msra.mxu0 0.0
      %3742 = vmatprep.subr.mxu0 0.0
      %3743 = vmatpush1.msra.mxu0 0.0
      %3744 = vmatprep.subr.mxu0 0.0
      %3745 = vmatpush1.msra.mxu0 0.0
      %3746 = vmatprep.subr.mxu0 0.0
      %3747 = vmatpush1.msra.mxu0 0.0
      %3748 = vmatprep.subr.mxu0 0.0
      %3749 = vmatpush1.msra.mxu0 0.0
      %3750 = vmatprep.subr.mxu0 0.0
      %3751 = vmatpush1.msra.mxu0 0.0
      %3752 = vmatprep.subr.mxu0 0.0
      %3753 = vmatpush1.msra.mxu0 0.0
      %3754 = vmatprep.subr.mxu0 0.0
      %3755 = vmatpush1.msra.mxu0 0.0
      %3756 = vmatprep.subr.mxu0 0.0
      %3757 = vmatpush1.msra.mxu0 0.0
      %3758 = vmatprep.subr.mxu0 0.0
      %3759 = vmatpush1.msra.mxu0 0.0
      %3760 = vmatprep.mubr.f32.mxu0 0.0
      %3761 = vmatmul.mubr.f32.gmra.mrb[0].mxu0 %v3694
      %v3762 = vpop.f32.mrb[0].mxu0
      %v3763 = vadd.f32 %v3691, %v3762
      %v3764 = vpop.f32.mrb[0].mxu0
      %v3765 = vadd.f32 %v3691, %v3764
      %3766 = vdwg.mxu0
      %v3767 = vmax.f32 %v3763, 0.0
      %v3768 = vmax.f32 %v3765, 0.0
      %v3769 = vld [vmem:[%s1 + $0x280] ss:$0 sm:$0xff]
      %v3770 = vld [vmem:[%s2 + $0xa0] sm:$0x1]
      %3772 = vset.pattern.permute.xlu0 0
      %3773 = vperm.xlu0 %3772, %v3770
      %v3774 = vpop.permute.xlu0 %3773
      %v3777 = vsel %vm988, %v3769, 0
      %3779 = vmatprep.subr.mxu0 %v3768
      %3780 = vmatpush1.msra.mxu0 %v3767
      %3781 = vmatprep.subr.mxu0 0.0
      %3782 = vmatpush1.msra.mxu0 0.0
      %3783 = vmatprep.subr.mxu0 0.0
      %3784 = vmatpush1.msra.mxu0 0.0
      %3785 = vmatprep.subr.mxu0 0.0
      %3786 = vmatpush1.msra.mxu0 0.0
      %3787 = vmatprep.subr.mxu0 0.0
      %3788 = vmatpush1.msra.mxu0 0.0
      %3789 = vmatprep.subr.mxu0 0.0
      %3790 = vmatpush1.msra.mxu0 0.0
      %3791 = vmatprep.subr.mxu0 0.0
      %3792 = vmatpush1.msra.mxu0 0.0
      %3793 = vmatprep.subr.mxu0 0.0
      %3794 = vmatpush1.msra.mxu0 0.0
      %3795 = vmatprep.subr.mxu0 0.0
      %3796 = vmatpush1.msra.mxu0 0.0
      %3797 = vmatprep.subr.mxu0 0.0
      %3798 = vmatpush1.msra.mxu0 0.0
      %3799 = vmatprep.subr.mxu0 0.0
      %3800 = vmatpush1.msra.mxu0 0.0
      %3801 = vmatprep.subr.mxu0 0.0
      %3802 = vmatpush1.msra.mxu0 0.0
      %3803 = vmatprep.subr.mxu0 0.0
      %3804 = vmatpush1.msra.mxu0 0.0
      %3805 = vmatprep.subr.mxu0 0.0
      %3806 = vmatpush1.msra.mxu0 0.0
      %3807 = vmatprep.subr.mxu0 0.0
      %3808 = vmatpush1.msra.mxu0 0.0
      %3809 = vmatprep.subr.mxu0 0.0
      %3810 = vmatpush1.msra.mxu0 0.0
      %3811 = vmatprep.subr.mxu0 0.0
      %3812 = vmatpush1.msra.mxu0 0.0
      %3813 = vmatprep.subr.mxu0 0.0
      %3814 = vmatpush1.msra.mxu0 0.0
      %3815 = vmatprep.subr.mxu0 0.0
      %3816 = vmatpush1.msra.mxu0 0.0
      %3817 = vmatprep.subr.mxu0 0.0
      %3818 = vmatpush1.msra.mxu0 0.0
      %3819 = vmatprep.subr.mxu0 0.0
      %3820 = vmatpush1.msra.mxu0 0.0
      %3821 = vmatprep.subr.mxu0 0.0
      %3822 = vmatpush1.msra.mxu0 0.0
      %3823 = vmatprep.subr.mxu0 0.0
      %3824 = vmatpush1.msra.mxu0 0.0
      %3825 = vmatprep.subr.mxu0 0.0
      %3826 = vmatpush1.msra.mxu0 0.0
      %3827 = vmatprep.subr.mxu0 0.0
      %3828 = vmatpush1.msra.mxu0 0.0
      %3829 = vmatprep.subr.mxu0 0.0
      %3830 = vmatpush1.msra.mxu0 0.0
      %3831 = vmatprep.subr.mxu0 0.0
      %3832 = vmatpush1.msra.mxu0 0.0
      %3833 = vmatprep.subr.mxu0 0.0
      %3834 = vmatpush1.msra.mxu0 0.0
      %3835 = vmatprep.subr.mxu0 0.0
      %3836 = vmatpush1.msra.mxu0 0.0
      %3837 = vmatprep.subr.mxu0 0.0
      %3838 = vmatpush1.msra.mxu0 0.0
      %3839 = vmatprep.subr.mxu0 0.0
      %3840 = vmatpush1.msra.mxu0 0.0
      %3841 = vmatprep.subr.mxu0 0.0
      %3842 = vmatpush1.msra.mxu0 0.0
      %3843 = vmatprep.mubr.f32.mxu0 0.0
      %3844 = vmatmul.mubr.f32.gmra.mrb[0].mxu0 %v3777
      %v3845 = vpop.f32.mrb[0].mxu0
      %v3846 = vadd.f32 %v3774, %v3845
      %v3847 = vpop.f32.mrb[0].mxu0
      %v3848 = vadd.f32 %v3774, %v3847
      %3849 = vdwg.mxu0
      %v3852 = vcombine.low %v3846, %v3848
      %v3854 = vunpack.c.l.s4 1966171168
      %v3855 = vunpack.c.0.s8 %v3854
      %v3856 = vlaneseq
      %v3857 = vshrl.u32 %v3856, 7
      %v3858 = vsub.s32 %v3855, %v3857
      %v3859 = vrot.slane %v3852, %v3858
      %v3861 = vunpack.c.l.s4 1966171168
      %v3862 = vunpack.c.0.s8 %v3861
      %v3863 = vlaneseq
      %v3864 = vshrl.u32 %v3863, 7
      %v3865 = vsub.s32 %v3862, %v3864
      %v3866 = vrot.slane %v3859, %v3865
      %v3868 = vlaneseq
      %vm3869 = vcmp.ge.s32.totalorder %v3868, 0
      %vm3870 = vcmp.lt.s32.totalorder %v3868, 256
      %vm3871 = vmand %vm3869, %vm3870
      %3872 = vst.msk [vmem:[%s392] sm:$0x3] %vm3871, %v3866
      %3873 = vst.msk [vmem:[%s397] sm:$0xff] %vm437, %v2314
      %3874 = vst.msk [vmem:[%s397 + $0x8] sm:$0xff] %vm437, %v2315
      %3875 = vst.msk [vmem:[%s397 + $0x10] sm:$0xff] %vm437, %v2316
      %3876 = vst.msk [vmem:[%s397 + $0x18] sm:$0xff] %vm437, %v2317
      %p3877 = scmp.lt.s32.totalorder %s23, 1
      %s3878 = scalar_select %p3877, %s23, 1
      %s3879 = smul.addr %s3878, 2
      %s3880 = scalar_lea.vmem %s10, %s3879
      %p3881 = scmp.lt.s32.totalorder %s23, 1
      %s3882 = scalar_select %p3881, %s23, 1
      %s3883 = smul.addr %s3882, 4
      %s3884 = smul.addr %s3883, 8
      %s3885 = scalar_lea.vmem %s11, %s3884
      // Predicated region
      $region61: #{unetc_forward_pallas.1} parent=59 // pred_check
        %p3886 = pneg %p256
      $region62: #{unetc_forward_pallas.1} parent=59 // pred_check_branch
        %3888 = sbr.rel (%p3886) target = $region64
      $region63: #{unetc_forward_pallas.1} parent=59 // pred_region
        _
      $region64: #{unetc_forward_pallas.1} parent=59 // pred_fallthru
        _
      // Predicated region
      $region65: #{unetc_forward_pallas.1} parent=59 // pred_check
        %p3889 = pneg %p282
      $region66: #{unetc_forward_pallas.1} parent=59 // pred_check_branch
        %3891 = sbr.rel (%p3889) target = $region68
      $region67: #{unetc_forward_pallas.1} parent=59 // pred_region
        _
      $region68: #{unetc_forward_pallas.1} parent=59 // pred_fallthru
        _
    $region60: #{unetc_forward_pallas.1} parent=5 // pred_fallthru
      _
    %p3892 = scmp.le.s32.totalorder 2, %s18
    // Predicated region
    $region69: #{unetc_forward_pallas.1} parent=5 // pred_check
      %p3893 = pneg %p3892
    $region70: #{unetc_forward_pallas.1} parent=5 // pred_check_branch
      %3895 = sbr.rel (%p3893) target = $region72
    $region71: #{unetc_forward_pallas.1} parent=5 // pred_region
      %s3896 = ssub.s32 %s18, 2
      // Predicated region
      $region73: #{unetc_forward_pallas.1} parent=71 // pred_check
        %p3897 = pneg %p262
      $region74: #{unetc_forward_pallas.1} parent=71 // pred_check_branch
        %3899 = sbr.rel (%p3897) target = $region76
      $region75: #{unetc_forward_pallas.1} parent=71 // pred_region
        %p3900 = scmp.lt.s32.totalorder %s24, 1
        %s3901 = scalar_select %p3900, %s24, 1
        %s3902 = smul.addr %s3901, 2
        %s3903 = scalar_lea.vmem %s10, %s3902
      $region76: #{unetc_forward_pallas.1} parent=71 // pred_fallthru
        _
      // Predicated region
      $region77: #{unetc_forward_pallas.1} parent=71 // pred_check
        %p3904 = pneg %p288
      $region78: #{unetc_forward_pallas.1} parent=71 // pred_check_branch
        %3906 = sbr.rel (%p3904) target = $region80
      $region79: #{unetc_forward_pallas.1} parent=71 // pred_region
        %p3907 = scmp.lt.s32.totalorder %s24, 1
        %s3908 = scalar_select %p3907, %s24, 1
        %s3909 = smul.addr %s3908, 4
        %s3910 = smul.addr %s3909, 8
        %s3911 = scalar_lea.vmem %s11, %s3910
      $region80: #{unetc_forward_pallas.1} parent=71 // pred_fallthru
        _
    $region72: #{unetc_forward_pallas.1} parent=5 // pred_fallthru
      _
  $region6: #{unetc_forward_pallas.1} parent=0 // loop_footer
    %s22 = sadd.s32 1, %s18
  $region7: #{unetc_forward_pallas.1} parent=0 // loop_footer_branch
    %17 = sbr.rel target = $region3
  $region8: #{unetc_forward_pallas.1} parent=0 // loop_exit
    _

</llo_original>
